<compile_context>
chip_gen: v7x
topology: tpu7x:2x2x1
jax: 0.10.0
libtpu: 0.0.40
codegen_flags: <defaults>
</compile_context>

<pallas_src>
import functools

import numpy as np
import jax
import jax.numpy as jnp
from jax import lax
from jax.experimental import pallas as pl
from jax.experimental.pallas import tpu as pltpu


_DEFAULT_B_TILE = 32   # 16 already fills a 128-deep MXU (v5e); 32-64 suits v6e/v7x.
_N_OUT_PAD = 128       # fc2 output lanes padded to a full vreg lane width.
_KP_KEYS = ("c1w", "c1b", "c2w", "c2b", "c3w", "c3b", "f1w", "f1b", "f2w", "f2b")


# ---------------------------------------------------------------------------
# Fused forward kernel: one grid step == one tile of B images.
# Activation layout: 2-D (h * B, width*channels), rows h-major / image-minor.
# Conv(k=3, stride=1, valid) == sum_kh  x[kh*B:(kh+h_out)*B, :] @ band[kh]
# where band[kh] is the (W_in*C_in, W_out*C_out) banded matrix built at init.
# ---------------------------------------------------------------------------
def _ddql_fused_kernel(x_ref, c1w_ref, c1b_ref, c2w_ref, c2b_ref,
                       c3w_ref, c3b_ref, f1w_ref, f1b_ref, f2w_ref, f2b_ref,
                       o_ref):
    H, B, CW = x_ref.shape                       # (10, B_TILE, C*W), bf16

    def band_conv_relu(x2d, w_ref, b_ref, h_out):
        acc = jnp.dot(x2d[0:h_out * B, :], w_ref[0],
                      preferred_element_type=jnp.float32)
        for kh in range(1, 3):
            acc = acc + jnp.dot(x2d[kh * B:(kh + h_out) * B, :], w_ref[kh],
                                preferred_element_type=jnp.float32)
        # bias + ReLU in f32, downcast to bf16 for the next MXU operand.
        return jnp.maximum(acc + b_ref[...], 0.0).astype(jnp.bfloat16)

    # (10, B, CW) -> (10B, CW): pure collapse of leading dims (B is a multiple
    # of 16, so bf16 sublane tiles stay aligned — no data movement).
    x = x_ref[...].reshape(H * B, CW)

    a = band_conv_relu(x, c1w_ref, c1b_ref, 8)   # (8B, 8*16 = 128)
    a = band_conv_relu(a, c2w_ref, c2b_ref, 6)   # (6B, 6*32 = 192)
    a = band_conv_relu(a, c3w_ref, c3b_ref, 4)   # (4B, 4*64 = 256)

    # fc1: the torch CHW-flatten permutation is folded into f1w; four
    # (B, 256) @ (256, 512) matmuls accumulated in f32.
    h1 = jnp.dot(a[0:B, :], f1w_ref[0], preferred_element_type=jnp.float32)
    for hh in range(1, 4):
        h1 = h1 + jnp.dot(a[hh * B:(hh + 1) * B, :], f1w_ref[hh],
                          preferred_element_type=jnp.float32)
    h1 = jnp.maximum(h1 + f1b_ref[...], 0.0).astype(jnp.bfloat16)   # (B, 512)

    # fc2: (B, 512) @ (512, 128) — lane/sublane-dense output block.
    out = jnp.dot(h1, f2w_ref[...], preferred_element_type=jnp.float32)
    o_ref[...] = (out + f2b_ref[...]).astype(o_ref.dtype)           # (B, 128)


def _resident_spec(arr):
    """Full-array block with a constant index map: DMA'd once, stays in VMEM."""
    ndim = arr.ndim
    return pl.BlockSpec(tuple(arr.shape), lambda i, _nd=ndim: (0,) * _nd)


def _round_up(x, m):
    return (x + m - 1) // m * m


@functools.partial(jax.jit, static_argnames=("n_actions",))
def _fused_forward(kparams, x_nchw, *, n_actions):
    n, c, h, w = x_nchw.shape

    # --- batch tile choice (static under jit) ---------------------------------
    b_tile = min(_DEFAULT_B_TILE, _round_up(n, 16))
    if n > 16 and _round_up(n, b_tile) // b_tile < 2:
        b_tile = 16                       # give the megacore grid >= 2 steps
    n_pad = _round_up(n, b_tile)
    n_tiles = n_pad // b_tile

    # --- input prep: only major-dim permutes; the minor (W) axis never moves --
    # NCHW -> (H, N, C, W) -> (H, N, C*W), bf16, batch zero-padded to n_pad.
    x = jnp.transpose(x_nchw, (2, 0, 1, 3)).reshape(h, n, c * w)
    x = x.astype(jnp.bfloat16)
    if n_pad != n:
        x = jnp.pad(x, ((0, 0), (0, n_pad - n), (0, 0)))

    # --- cost hint for the XLA scheduler ---------------------------------------
    macs_per_img = (8 * 8 * 16 * 9 * c + 6 * 6 * 32 * 9 * 16 + 4 * 4 * 64 * 9 * 32
                    + 1024 * 512 + 512 * _N_OUT_PAD)
    w_bytes = sum(int(np.prod(kparams[k].shape)) * kparams[k].dtype.itemsize
                  for k in _KP_KEYS)
    cost = pl.CostEstimate(
        flops=2 * macs_per_img * n_pad,
        transcendentals=0,
        bytes_accessed=w_bytes + x.size * x.dtype.itemsize + n_pad * _N_OUT_PAD * 4)

    out = pl.pallas_call(
        _ddql_fused_kernel,
        out_shape=jax.ShapeDtypeStruct((n_pad, _N_OUT_PAD), jnp.float32),
        grid=(n_tiles,),
        in_specs=[pl.BlockSpec((h, b_tile, c * w), lambda i: (0, i, 0))]
                 + [_resident_spec(kparams[k]) for k in _KP_KEYS],
        out_specs=pl.BlockSpec((b_tile, _N_OUT_PAD), lambda i: (i, 0)),
        compiler_params=pltpu.CompilerParams(dimension_semantics=("parallel",)),
        cost_estimate=cost,
    )(x, *[kparams[k] for k in _KP_KEYS])

    return out[:n, :n_actions]


# ---------------------------------------------------------------------------
# Parameters (deterministic synthetic init; canonical torch-like layout).
# ---------------------------------------------------------------------------
def init_cnn_params(key, c, output_dim):
    ks = jax.random.split(key, 10)

    def w(k, shape, fan_in):
        return (jax.random.normal(k, shape, jnp.float32)
                / jnp.sqrt(jnp.float32(fan_in)))

    return dict(
        conv1_w=w(ks[0], (3, 3, c, 16), 9 * c),
        conv1_b=w(ks[1], (16,), 9 * c),
        conv2_w=w(ks[2], (3, 3, 16, 32), 9 * 16),
        conv2_b=w(ks[3], (32,), 9 * 16),
        conv3_w=w(ks[4], (3, 3, 32, 64), 9 * 32),
        conv3_b=w(ks[5], (64,), 9 * 32),
        # fc1 weight is (in=1024, out=512); row ordering is the torch flatten
        # order of the NCHW conv3 output, i.e. (c, h, w).
        fc1_w=w(ks[6], (64 * 4 * 4, 512), 1024),
        fc1_b=w(ks[7], (512,), 1024),
        fc2_w=w(ks[8], (512, output_dim), 512),
        fc2_b=w(ks[9], (output_dim,), 512),
    )


# ---------------------------------------------------------------------------
# One-time conversion of canonical params into the fused-kernel layout.
# ---------------------------------------------------------------------------
def _banded_conv_weight(w_hwio, w_in, in_order):
    """(3,3,cin,cout) HWIO -> (3, w_in*cin, w_out*cout) banded along width.

    in_order selects the input-column index ordering:
      "wc": col = wi*cin + ci   (activation layout produced by previous conv)
      "cw": col = ci*w_in + wi  (raw input layout (H, C*W) — avoids the
                                 lane-moving NCHW->NHWC transpose in the wrapper)
    Output columns are always (wo, co): col = wo*cout + co.
    """
    w = np.asarray(w_hwio, np.float32)
    kh, kw, cin, cout = w.shape
    w_out = w_in - kw + 1
    b = np.zeros((kh, w_in * cin, w_out * cout), np.float32)
    for j in range(kw):
        for wo in range(w_out):
            wi = wo + j
            for ci in range(cin):
                row = (wi * cin + ci) if in_order == "wc" else (ci * w_in + wi)
                b[:, row, wo * cout:(wo + 1) * cout] = w[:, j, ci, :]
    return b


def _tiled_bias(bias, w_out):
    b = np.asarray(bias, np.float32)
    return jnp.asarray(np.tile(b, w_out).reshape(1, w_out * b.shape[0]), jnp.float32)


def prepare_kernel_params(p, output_dim):
    mm_dtype = jnp.bfloat16  # MXU operands; accumulation stays f32 in-kernel.

    # fc1 rows are in torch-flatten (c, h, w) order; permute once to (h, w, c)
    # so the kernel's (w, c)-ordered conv3 output is consumed with no transpose.
    f1 = np.asarray(p["fc1_w"], np.float32).reshape(64, 4, 4, 512)
    f1 = np.transpose(f1, (1, 2, 0, 3)).reshape(4, 4 * 64, 512)

    # fc2 padded to 128 output lanes so the store is lane-dense.
    f2 = np.zeros((512, _N_OUT_PAD), np.float32)
    f2[:, :output_dim] = np.asarray(p["fc2_w"], np.float32)
    f2b = np.zeros((1, _N_OUT_PAD), np.float32)
    f2b[0, :output_dim] = np.asarray(p["fc2_b"], np.float32)

    return dict(
        c1w=jnp.asarray(_banded_conv_weight(p["conv1_w"], 10, "cw"), mm_dtype),
        c1b=_tiled_bias(p["conv1_b"], 8),
        c2w=jnp.asarray(_banded_conv_weight(p["conv2_w"], 8, "wc"), mm_dtype),
        c2b=_tiled_bias(p["conv2_b"], 6),
        c3w=jnp.asarray(_banded_conv_weight(p["conv3_w"], 6, "wc"), mm_dtype),
        c3b=_tiled_bias(p["conv3_b"], 4),
        f1w=jnp.asarray(f1, mm_dtype),
        f1b=jnp.asarray(p["fc1_b"], jnp.float32).reshape(1, 512),
        f2w=jnp.asarray(f2, mm_dtype),
        f2b=jnp.asarray(f2b, jnp.float32),
    )


# ---------------------------------------------------------------------------
# Pure-JAX/XLA f32 reference forward (validation only).
# ---------------------------------------------------------------------------
def reference_forward(params, x_nchw):
    x = jnp.transpose(x_nchw.astype(jnp.float32), (0, 2, 3, 1))
    for i in (1, 2, 3):
        x = lax.conv_general_dilated(
            x, params[f"conv{i}_w"].astype(jnp.float32), (1, 1), "VALID",
            dimension_numbers=("NHWC", "HWIO", "NHWC"),
            precision=lax.Precision.HIGHEST) + params[f"conv{i}_b"]
        x = jnp.maximum(x, 0.0)
    n = x.shape[0]
    feat = jnp.transpose(x, (0, 3, 1, 2)).reshape(n, -1)   # torch flatten (NCHW)
    h = jnp.maximum(jnp.dot(feat, params["fc1_w"], precision=lax.Precision.HIGHEST)
                    + params["fc1_b"], 0.0)
    return jnp.dot(h, params["fc2_w"], precision=lax.Precision.HIGHEST) + params["fc2_b"]


# ---------------------------------------------------------------------------
# Module wrapper: online/target CNNs selected by `model`.
# ---------------------------------------------------------------------------
class DDQLAgentNetPallas:
    def __init__(self, input_dim, output_dim, key):
        c, h, w = input_dim
        if h != 10:
            raise ValueError(f"Expecting input height: 10, got: {h}")
        if w != 10:
            raise ValueError(f"Expecting input width: 10, got: {w}")
        self._n_actions = output_dim
        self.online = init_cnn_params(key, c, output_dim)
        # target.load_state_dict(online.state_dict()) -> identical copy, frozen.
        self.target = jax.tree_util.tree_map(lambda a: a, self.online)
        # Kernel-layout weights prepared once (hoisted out of the hot path).
        self._online_k = prepare_kernel_params(self.online, output_dim)
        self._target_k = prepare_kernel_params(self.target, output_dim)

    def __call__(self, x, model):
        if model == "online":
            return _fused_forward(self._online_k, x, n_actions=self._n_actions)
        elif model == "target":
            return _fused_forward(self._target_k, x, n_actions=self._n_actions)
        raise ValueError(f"unknown model: {model}")


if __name__ == "__main__":
    key = jax.random.PRNGKey(0)
    pkey, xkey = jax.random.split(key)

    batch, c, h, w = 2, 4, 10, 10          # module requires 10x10 spatial input
    n_actions = 6

    net = DDQLAgentNetPallas((c, h, w), n_actions, pkey)
    x = jax.random.normal(xkey, (batch, c, h, w), jnp.float32)    # NCHW input

    q_online = net(x, "online")
    q_target = net(x, "target")
    jax.block_until_ready((q_online, q_target))

    assert q_online.shape == (batch, n_actions), q_online.shape
    assert q_target.shape == (batch, n_actions), q_target.shape
    # target == online at init
    assert bool(jnp.allclose(q_online, q_target))
    # fused Pallas kernel matches the f32 XLA reference (bf16 MXU operands,
    # f32 accumulation -> loosened tolerance).
    q_ref = reference_forward(net.online, x)
    err = float(jnp.max(jnp.abs(q_online - q_ref)))
    assert bool(jnp.allclose(q_online, q_ref, rtol=5e-2, atol=5e-2)), err

    print("KERNEL_OK")
</pallas_src>

<mosaic_0001>
module attributes {stable_mosaic.version = 11 : i64} {
  func.func @_ddql_fused_kernel(%arg0: i32, %arg1: memref<10x16x40xbf16, #tpu.memory_space<vmem>>, %arg2: memref<3x40x128xbf16, #tpu.memory_space<vmem>>, %arg3: memref<1x128xf32, #tpu.memory_space<vmem>>, %arg4: memref<3x128x192xbf16, #tpu.memory_space<vmem>>, %arg5: memref<1x192xf32, #tpu.memory_space<vmem>>, %arg6: memref<3x192x256xbf16, #tpu.memory_space<vmem>>, %arg7: memref<1x256xf32, #tpu.memory_space<vmem>>, %arg8: memref<4x256x512xbf16, #tpu.memory_space<vmem>>, %arg9: memref<1x512xf32, #tpu.memory_space<vmem>>, %arg10: memref<512x128xbf16, #tpu.memory_space<vmem>>, %arg11: memref<1x128xf32, #tpu.memory_space<vmem>>, %arg12: memref<16x128xf32, #tpu.memory_space<vmem>>) attributes {dimension_semantics = [#tpu.dimension_semantics<parallel>], iteration_bounds = array<i64: 1>, scalar_prefetch = 0 : i64, scratch_operands = 0 : i64, tpu.core_type = #tpu.core_type<tc>, window_params = [{transform_indices = @transform_0, window_bounds = array<i64: 10, 16, 40>}, {pipeline_mode = #tpu.pipeline_mode<synchronous>, transform_indices = @transform_1, window_bounds = array<i64: 3, 40, 128>}, {pipeline_mode = #tpu.pipeline_mode<synchronous>, transform_indices = @transform_2, window_bounds = array<i64: 1, 128>}, {pipeline_mode = #tpu.pipeline_mode<synchronous>, transform_indices = @transform_3, window_bounds = array<i64: 3, 128, 192>}, {pipeline_mode = #tpu.pipeline_mode<synchronous>, transform_indices = @transform_4, window_bounds = array<i64: 1, 192>}, {pipeline_mode = #tpu.pipeline_mode<synchronous>, transform_indices = @transform_5, window_bounds = array<i64: 3, 192, 256>}, {pipeline_mode = #tpu.pipeline_mode<synchronous>, transform_indices = @transform_6, window_bounds = array<i64: 1, 256>}, {pipeline_mode = #tpu.pipeline_mode<synchronous>, transform_indices = @transform_7, window_bounds = array<i64: 4, 256, 512>}, {pipeline_mode = #tpu.pipeline_mode<synchronous>, transform_indices = @transform_8, window_bounds = array<i64: 1, 512>}, {pipeline_mode = #tpu.pipeline_mode<synchronous>, transform_indices = @transform_9, window_bounds = array<i64: 512, 128>}, {pipeline_mode = #tpu.pipeline_mode<synchronous>, transform_indices = @transform_10, window_bounds = array<i64: 1, 128>}, {transform_indices = @transform_11, window_bounds = array<i64: 16, 128>}]} {
    %c0 = arith.constant 0 : index
    %c0_0 = arith.constant 0 : index
    %c0_1 = arith.constant 0 : index
    %0 = vector.load %arg1[%c0, %c0_0, %c0_1] : memref<10x16x40xbf16, #tpu.memory_space<vmem>>, vector<10x16x40xbf16>
    %1 = vector.shape_cast %0 : vector<10x16x40xbf16> to vector<160x40xbf16>
    %2 = vector.extract_strided_slice %1 {offsets = [0, 0], sizes = [128, 40], strides = [1, 1]} : vector<160x40xbf16> to vector<128x40xbf16>
    %c0_2 = arith.constant 0 : index
    %c0_3 = arith.constant 0 : index
    %c0_4 = arith.constant 0 : index
    %3 = vector.load %arg2[%c0_2, %c0_3, %c0_4] : memref<3x40x128xbf16, #tpu.memory_space<vmem>>, vector<1x40x128xbf16>
    %4 = vector.shape_cast %3 : vector<1x40x128xbf16> to vector<40x128xbf16>
    %cst = arith.constant dense<0.000000e+00> : vector<128x128xf32>
    %5 = tpu.matmul %2, %4, %cst {dimension_numbers = #tpu.dot_dimension_numbers<[1], [0], [0], [1], [0, 0, 1, 1], [], []>} : vector<128x40xbf16>, vector<40x128xbf16>, vector<128x128xf32> -> vector<128x128xf32>
    %6 = vector.extract_strided_slice %1 {offsets = [16, 0], sizes = [128, 40], strides = [1, 1]} : vector<160x40xbf16> to vector<128x40xbf16>
    %c1 = arith.constant 1 : index
    %c0_5 = arith.constant 0 : index
    %c0_6 = arith.constant 0 : index
    %7 = vector.load %arg2[%c1, %c0_5, %c0_6] : memref<3x40x128xbf16, #tpu.memory_space<vmem>>, vector<1x40x128xbf16>
    %8 = vector.shape_cast %7 : vector<1x40x128xbf16> to vector<40x128xbf16>
    %cst_7 = arith.constant dense<0.000000e+00> : vector<128x128xf32>
    %9 = tpu.matmul %6, %8, %cst_7 {dimension_numbers = #tpu.dot_dimension_numbers<[1], [0], [0], [1], [0, 0, 1, 1], [], []>} : vector<128x40xbf16>, vector<40x128xbf16>, vector<128x128xf32> -> vector<128x128xf32>
    %10 = arith.addf %5, %9 : vector<128x128xf32>
    %11 = vector.extract_strided_slice %1 {offsets = [32, 0], sizes = [128, 40], strides = [1, 1]} : vector<160x40xbf16> to vector<128x40xbf16>
    %c2 = arith.constant 2 : index
    %c0_8 = arith.constant 0 : index
    %c0_9 = arith.constant 0 : index
    %12 = vector.load %arg2[%c2, %c0_8, %c0_9] : memref<3x40x128xbf16, #tpu.memory_space<vmem>>, vector<1x40x128xbf16>
    %13 = vector.shape_cast %12 : vector<1x40x128xbf16> to vector<40x128xbf16>
    %cst_10 = arith.constant dense<0.000000e+00> : vector<128x128xf32>
    %14 = tpu.matmul %11, %13, %cst_10 {dimension_numbers = #tpu.dot_dimension_numbers<[1], [0], [0], [1], [0, 0, 1, 1], [], []>} : vector<128x40xbf16>, vector<40x128xbf16>, vector<128x128xf32> -> vector<128x128xf32>
    %15 = arith.addf %10, %14 : vector<128x128xf32>
    %c0_11 = arith.constant 0 : index
    %c0_12 = arith.constant 0 : index
    %16 = vector.load %arg3[%c0_11, %c0_12] : memref<1x128xf32, #tpu.memory_space<vmem>>, vector<1x128xf32>
    %17 = vector.broadcast %16 : vector<1x128xf32> to vector<128x128xf32>
    %18 = arith.addf %15, %17 : vector<128x128xf32>
    %cst_13 = arith.constant 0.000000e+00 : f32
    %19 = vector.broadcast %cst_13 : f32 to vector<128x128xf32>
    %20 = arith.maximumf %18, %19 : vector<128x128xf32>
    %21 = arith.truncf %20 : vector<128x128xf32> to vector<128x128xbf16>
    %22 = vector.extract_strided_slice %21 {offsets = [0, 0], sizes = [96, 128], strides = [1, 1]} : vector<128x128xbf16> to vector<96x128xbf16>
    %c0_14 = arith.constant 0 : index
    %c0_15 = arith.constant 0 : index
    %c0_16 = arith.constant 0 : index
    %23 = vector.load %arg4[%c0_14, %c0_15, %c0_16] : memref<3x128x192xbf16, #tpu.memory_space<vmem>>, vector<1x128x192xbf16>
    %24 = vector.shape_cast %23 : vector<1x128x192xbf16> to vector<128x192xbf16>
    %cst_17 = arith.constant dense<0.000000e+00> : vector<96x192xf32>
    %25 = tpu.matmul %22, %24, %cst_17 {dimension_numbers = #tpu.dot_dimension_numbers<[1], [0], [0], [1], [0, 0, 1, 1], [], []>} : vector<96x128xbf16>, vector<128x192xbf16>, vector<96x192xf32> -> vector<96x192xf32>
    %26 = vector.extract_strided_slice %21 {offsets = [16, 0], sizes = [96, 128], strides = [1, 1]} : vector<128x128xbf16> to vector<96x128xbf16>
    %c1_18 = arith.constant 1 : index
    %c0_19 = arith.constant 0 : index
    %c0_20 = arith.constant 0 : index
    %27 = vector.load %arg4[%c1_18, %c0_19, %c0_20] : memref<3x128x192xbf16, #tpu.memory_space<vmem>>, vector<1x128x192xbf16>
    %28 = vector.shape_cast %27 : vector<1x128x192xbf16> to vector<128x192xbf16>
    %cst_21 = arith.constant dense<0.000000e+00> : vector<96x192xf32>
    %29 = tpu.matmul %26, %28, %cst_21 {dimension_numbers = #tpu.dot_dimension_numbers<[1], [0], [0], [1], [0, 0, 1, 1], [], []>} : vector<96x128xbf16>, vector<128x192xbf16>, vector<96x192xf32> -> vector<96x192xf32>
    %30 = arith.addf %25, %29 : vector<96x192xf32>
    %31 = vector.extract_strided_slice %21 {offsets = [32, 0], sizes = [96, 128], strides = [1, 1]} : vector<128x128xbf16> to vector<96x128xbf16>
    %c2_22 = arith.constant 2 : index
    %c0_23 = arith.constant 0 : index
    %c0_24 = arith.constant 0 : index
    %32 = vector.load %arg4[%c2_22, %c0_23, %c0_24] : memref<3x128x192xbf16, #tpu.memory_space<vmem>>, vector<1x128x192xbf16>
    %33 = vector.shape_cast %32 : vector<1x128x192xbf16> to vector<128x192xbf16>
    %cst_25 = arith.constant dense<0.000000e+00> : vector<96x192xf32>
    %34 = tpu.matmul %31, %33, %cst_25 {dimension_numbers = #tpu.dot_dimension_numbers<[1], [0], [0], [1], [0, 0, 1, 1], [], []>} : vector<96x128xbf16>, vector<128x192xbf16>, vector<96x192xf32> -> vector<96x192xf32>
    %35 = arith.addf %30, %34 : vector<96x192xf32>
    %c0_26 = arith.constant 0 : index
    %c0_27 = arith.constant 0 : index
    %36 = vector.load %arg5[%c0_26, %c0_27] : memref<1x192xf32, #tpu.memory_space<vmem>>, vector<1x192xf32>
    %37 = vector.broadcast %36 : vector<1x192xf32> to vector<96x192xf32>
    %38 = arith.addf %35, %37 : vector<96x192xf32>
    %cst_28 = arith.constant 0.000000e+00 : f32
    %39 = vector.broadcast %cst_28 : f32 to vector<96x192xf32>
    %40 = arith.maximumf %38, %39 : vector<96x192xf32>
    %41 = arith.truncf %40 : vector<96x192xf32> to vector<96x192xbf16>
    %42 = vector.extract_strided_slice %41 {offsets = [0, 0], sizes = [64, 192], strides = [1, 1]} : vector<96x192xbf16> to vector<64x192xbf16>
    %c0_29 = arith.constant 0 : index
    %c0_30 = arith.constant 0 : index
    %c0_31 = arith.constant 0 : index
    %43 = vector.load %arg6[%c0_29, %c0_30, %c0_31] : memref<3x192x256xbf16, #tpu.memory_space<vmem>>, vector<1x192x256xbf16>
    %44 = vector.shape_cast %43 : vector<1x192x256xbf16> to vector<192x256xbf16>
    %cst_32 = arith.constant dense<0.000000e+00> : vector<64x256xf32>
    %45 = tpu.matmul %42, %44, %cst_32 {dimension_numbers = #tpu.dot_dimension_numbers<[1], [0], [0], [1], [0, 0, 1, 1], [], []>} : vector<64x192xbf16>, vector<192x256xbf16>, vector<64x256xf32> -> vector<64x256xf32>
    %46 = vector.extract_strided_slice %41 {offsets = [16, 0], sizes = [64, 192], strides = [1, 1]} : vector<96x192xbf16> to vector<64x192xbf16>
    %c1_33 = arith.constant 1 : index
    %c0_34 = arith.constant 0 : index
    %c0_35 = arith.constant 0 : index
    %47 = vector.load %arg6[%c1_33, %c0_34, %c0_35] : memref<3x192x256xbf16, #tpu.memory_space<vmem>>, vector<1x192x256xbf16>
    %48 = vector.shape_cast %47 : vector<1x192x256xbf16> to vector<192x256xbf16>
    %cst_36 = arith.constant dense<0.000000e+00> : vector<64x256xf32>
    %49 = tpu.matmul %46, %48, %cst_36 {dimension_numbers = #tpu.dot_dimension_numbers<[1], [0], [0], [1], [0, 0, 1, 1], [], []>} : vector<64x192xbf16>, vector<192x256xbf16>, vector<64x256xf32> -> vector<64x256xf32>
    %50 = arith.addf %45, %49 : vector<64x256xf32>
    %51 = vector.extract_strided_slice %41 {offsets = [32, 0], sizes = [64, 192], strides = [1, 1]} : vector<96x192xbf16> to vector<64x192xbf16>
    %c2_37 = arith.constant 2 : index
    %c0_38 = arith.constant 0 : index
    %c0_39 = arith.constant 0 : index
    %52 = vector.load %arg6[%c2_37, %c0_38, %c0_39] : memref<3x192x256xbf16, #tpu.memory_space<vmem>>, vector<1x192x256xbf16>
    %53 = vector.shape_cast %52 : vector<1x192x256xbf16> to vector<192x256xbf16>
    %cst_40 = arith.constant dense<0.000000e+00> : vector<64x256xf32>
    %54 = tpu.matmul %51, %53, %cst_40 {dimension_numbers = #tpu.dot_dimension_numbers<[1], [0], [0], [1], [0, 0, 1, 1], [], []>} : vector<64x192xbf16>, vector<192x256xbf16>, vector<64x256xf32> -> vector<64x256xf32>
    %55 = arith.addf %50, %54 : vector<64x256xf32>
    %c0_41 = arith.constant 0 : index
    %c0_42 = arith.constant 0 : index
    %56 = vector.load %arg7[%c0_41, %c0_42] : memref<1x256xf32, #tpu.memory_space<vmem>>, vector<1x256xf32>
    %57 = vector.broadcast %56 : vector<1x256xf32> to vector<64x256xf32>
    %58 = arith.addf %55, %57 : vector<64x256xf32>
    %cst_43 = arith.constant 0.000000e+00 : f32
    %59 = vector.broadcast %cst_43 : f32 to vector<64x256xf32>
    %60 = arith.maximumf %58, %59 : vector<64x256xf32>
    %61 = arith.truncf %60 : vector<64x256xf32> to vector<64x256xbf16>
    %62 = vector.extract_strided_slice %61 {offsets = [0, 0], sizes = [16, 256], strides = [1, 1]} : vector<64x256xbf16> to vector<16x256xbf16>
    %c0_44 = arith.constant 0 : index
    %c0_45 = arith.constant 0 : index
    %c0_46 = arith.constant 0 : index
    %63 = vector.load %arg8[%c0_44, %c0_45, %c0_46] : memref<4x256x512xbf16, #tpu.memory_space<vmem>>, vector<1x256x512xbf16>
    %64 = vector.shape_cast %63 : vector<1x256x512xbf16> to vector<256x512xbf16>
    %cst_47 = arith.constant dense<0.000000e+00> : vector<16x512xf32>
    %65 = tpu.matmul %62, %64, %cst_47 {dimension_numbers = #tpu.dot_dimension_numbers<[1], [0], [0], [1], [0, 0, 1, 1], [], []>} : vector<16x256xbf16>, vector<256x512xbf16>, vector<16x512xf32> -> vector<16x512xf32>
    %66 = vector.extract_strided_slice %61 {offsets = [16, 0], sizes = [16, 256], strides = [1, 1]} : vector<64x256xbf16> to vector<16x256xbf16>
    %c1_48 = arith.constant 1 : index
    %c0_49 = arith.constant 0 : index
    %c0_50 = arith.constant 0 : index
    %67 = vector.load %arg8[%c1_48, %c0_49, %c0_50] : memref<4x256x512xbf16, #tpu.memory_space<vmem>>, vector<1x256x512xbf16>
    %68 = vector.shape_cast %67 : vector<1x256x512xbf16> to vector<256x512xbf16>
    %cst_51 = arith.constant dense<0.000000e+00> : vector<16x512xf32>
    %69 = tpu.matmul %66, %68, %cst_51 {dimension_numbers = #tpu.dot_dimension_numbers<[1], [0], [0], [1], [0, 0, 1, 1], [], []>} : vector<16x256xbf16>, vector<256x512xbf16>, vector<16x512xf32> -> vector<16x512xf32>
    %70 = arith.addf %65, %69 : vector<16x512xf32>
    %71 = vector.extract_strided_slice %61 {offsets = [32, 0], sizes = [16, 256], strides = [1, 1]} : vector<64x256xbf16> to vector<16x256xbf16>
    %c2_52 = arith.constant 2 : index
    %c0_53 = arith.constant 0 : index
    %c0_54 = arith.constant 0 : index
    %72 = vector.load %arg8[%c2_52, %c0_53, %c0_54] : memref<4x256x512xbf16, #tpu.memory_space<vmem>>, vector<1x256x512xbf16>
    %73 = vector.shape_cast %72 : vector<1x256x512xbf16> to vector<256x512xbf16>
    %cst_55 = arith.constant dense<0.000000e+00> : vector<16x512xf32>
    %74 = tpu.matmul %71, %73, %cst_55 {dimension_numbers = #tpu.dot_dimension_numbers<[1], [0], [0], [1], [0, 0, 1, 1], [], []>} : vector<16x256xbf16>, vector<256x512xbf16>, vector<16x512xf32> -> vector<16x512xf32>
    %75 = arith.addf %70, %74 : vector<16x512xf32>
    %76 = vector.extract_strided_slice %61 {offsets = [48, 0], sizes = [16, 256], strides = [1, 1]} : vector<64x256xbf16> to vector<16x256xbf16>
    %c3 = arith.constant 3 : index
    %c0_56 = arith.constant 0 : index
    %c0_57 = arith.constant 0 : index
    %77 = vector.load %arg8[%c3, %c0_56, %c0_57] : memref<4x256x512xbf16, #tpu.memory_space<vmem>>, vector<1x256x512xbf16>
    %78 = vector.shape_cast %77 : vector<1x256x512xbf16> to vector<256x512xbf16>
    %cst_58 = arith.constant dense<0.000000e+00> : vector<16x512xf32>
    %79 = tpu.matmul %76, %78, %cst_58 {dimension_numbers = #tpu.dot_dimension_numbers<[1], [0], [0], [1], [0, 0, 1, 1], [], []>} : vector<16x256xbf16>, vector<256x512xbf16>, vector<16x512xf32> -> vector<16x512xf32>
    %80 = arith.addf %75, %79 : vector<16x512xf32>
    %c0_59 = arith.constant 0 : index
    %c0_60 = arith.constant 0 : index
    %81 = vector.load %arg9[%c0_59, %c0_60] : memref<1x512xf32, #tpu.memory_space<vmem>>, vector<1x512xf32>
    %82 = vector.broadcast %81 : vector<1x512xf32> to vector<16x512xf32>
    %83 = arith.addf %80, %82 : vector<16x512xf32>
    %cst_61 = arith.constant 0.000000e+00 : f32
    %84 = vector.broadcast %cst_61 : f32 to vector<16x512xf32>
    %85 = arith.maximumf %83, %84 : vector<16x512xf32>
    %86 = arith.truncf %85 : vector<16x512xf32> to vector<16x512xbf16>
    %c0_62 = arith.constant 0 : index
    %c0_63 = arith.constant 0 : index
    %87 = vector.load %arg10[%c0_62, %c0_63] : memref<512x128xbf16, #tpu.memory_space<vmem>>, vector<512x128xbf16>
    %cst_64 = arith.constant dense<0.000000e+00> : vector<16x128xf32>
    %88 = tpu.matmul %86, %87, %cst_64 {dimension_numbers = #tpu.dot_dimension_numbers<[1], [0], [0], [1], [0, 0, 1, 1], [], []>} : vector<16x512xbf16>, vector<512x128xbf16>, vector<16x128xf32> -> vector<16x128xf32>
    %c0_65 = arith.constant 0 : index
    %c0_66 = arith.constant 0 : index
    %89 = vector.load %arg11[%c0_65, %c0_66] : memref<1x128xf32, #tpu.memory_space<vmem>>, vector<1x128xf32>
    %90 = vector.broadcast %89 : vector<1x128xf32> to vector<16x128xf32>
    %91 = arith.addf %88, %90 : vector<16x128xf32>
    %c0_67 = arith.constant 0 : index
    %c0_68 = arith.constant 0 : index
    %92 = vector.load %arg12[%c0_67, %c0_68] : memref<16x128xf32, #tpu.memory_space<vmem>>, vector<16x128xf32>
    tpu.vector_store %arg12[%c0_67, %c0_68], %91 {strides = array<i32>} : memref<16x128xf32, #tpu.memory_space<vmem>>, vector<16x128xf32>,
    return
  }
  func.func @transform_0(%arg0: i32) -> (i32, i32, i32) {
    %c0_i32 = arith.constant 0 : i32
    %c0_i32_0 = arith.constant 0 : i32
    %c0_i32_1 = arith.constant 0 : i32
    return %c0_i32, %arg0, %c0_i32_0 : i32, i32, i32
  }
  func.func @transform_1(%arg0: i32) -> (i32, i32, i32) {
    %c0_i32 = arith.constant 0 : i32
    %c0_i32_0 = arith.constant 0 : i32
    %c0_i32_1 = arith.constant 0 : i32
    %c0_i32_2 = arith.constant 0 : i32
    return %c0_i32, %c0_i32_0, %c0_i32_1 : i32, i32, i32
  }
  func.func @transform_2(%arg0: i32) -> (i32, i32) {
    %c0_i32 = arith.constant 0 : i32
    %c0_i32_0 = arith.constant 0 : i32
    %c0_i32_1 = arith.constant 0 : i32
    return %c0_i32, %c0_i32_0 : i32, i32
  }
  func.func @transform_3(%arg0: i32) -> (i32, i32, i32) {
    %c0_i32 = arith.constant 0 : i32
    %c0_i32_0 = arith.constant 0 : i32
    %c0_i32_1 = arith.constant 0 : i32
    %c0_i32_2 = arith.constant 0 : i32
    return %c0_i32, %c0_i32_0, %c0_i32_1 : i32, i32, i32
  }
  func.func @transform_4(%arg0: i32) -> (i32, i32) {
    %c0_i32 = arith.constant 0 : i32
    %c0_i32_0 = arith.constant 0 : i32
    %c0_i32_1 = arith.constant 0 : i32
    return %c0_i32, %c0_i32_0 : i32, i32
  }
  func.func @transform_5(%arg0: i32) -> (i32, i32, i32) {
    %c0_i32 = arith.constant 0 : i32
    %c0_i32_0 = arith.constant 0 : i32
    %c0_i32_1 = arith.constant 0 : i32
    %c0_i32_2 = arith.constant 0 : i32
    return %c0_i32, %c0_i32_0, %c0_i32_1 : i32, i32, i32
  }
  func.func @transform_6(%arg0: i32) -> (i32, i32) {
    %c0_i32 = arith.constant 0 : i32
    %c0_i32_0 = arith.constant 0 : i32
    %c0_i32_1 = arith.constant 0 : i32
    return %c0_i32, %c0_i32_0 : i32, i32
  }
  func.func @transform_7(%arg0: i32) -> (i32, i32, i32) {
    %c0_i32 = arith.constant 0 : i32
    %c0_i32_0 = arith.constant 0 : i32
    %c0_i32_1 = arith.constant 0 : i32
    %c0_i32_2 = arith.constant 0 : i32
    return %c0_i32, %c0_i32_0, %c0_i32_1 : i32, i32, i32
  }
  func.func @transform_8(%arg0: i32) -> (i32, i32) {
    %c0_i32 = arith.constant 0 : i32
    %c0_i32_0 = arith.constant 0 : i32
    %c0_i32_1 = arith.constant 0 : i32
    return %c0_i32, %c0_i32_0 : i32, i32
  }
  func.func @transform_9(%arg0: i32) -> (i32, i32) {
    %c0_i32 = arith.constant 0 : i32
    %c0_i32_0 = arith.constant 0 : i32
    %c0_i32_1 = arith.constant 0 : i32
    return %c0_i32, %c0_i32_0 : i32, i32
  }
  func.func @transform_10(%arg0: i32) -> (i32, i32) {
    %c0_i32 = arith.constant 0 : i32
    %c0_i32_0 = arith.constant 0 : i32
    %c0_i32_1 = arith.constant 0 : i32
    return %c0_i32, %c0_i32_0 : i32, i32
  }
  func.func @transform_11(%arg0: i32) -> (i32, i32) {
    %c0_i32 = arith.constant 0 : i32
    %c0_i32_0 = arith.constant 0 : i32
    return %arg0, %c0_i32 : i32, i32
  }
}

</mosaic_0001>

<llo_original>
// kernel: _fused_forward.1
$region0: #{_fused_forward.1}
  #allocation0 [shape = 'u32[]', space=smem, size = 0x4, offset = 0x4, fixed_abs, tag = 'smem constant byte address 0x4 - core index']
  #allocation1 [shape = 'u32[144,128]{1,0:T(1,128)}', space=vmem, size = 0x12000, scoped, tag = 'internal scratch']
  %s0 = inlined_call_operand.vmem [shape: bf16[10,16,40], index: 0, kind: input, shape index: {}]
  %s1 = inlined_call_operand.vmem [shape: bf16[3,40,128], index: 1, kind: input, shape index: {}]
  %s2 = inlined_call_operand.vmem [shape: f32[1,128], index: 2, kind: input, shape index: {}]
  %s3 = inlined_call_operand.vmem [shape: bf16[3,128,192], index: 3, kind: input, shape index: {}]
  %s4 = inlined_call_operand.vmem [shape: f32[1,192], index: 4, kind: input, shape index: {}]
  %s5 = inlined_call_operand.vmem [shape: bf16[3,192,256], index: 5, kind: input, shape index: {}]
  %s6 = inlined_call_operand.vmem [shape: f32[1,256], index: 6, kind: input, shape index: {}]
  %s7 = inlined_call_operand.hbm [shape: bf16[4,256,512], index: 7, kind: input, shape index: {}]
  %s8 = inlined_call_operand.vmem [shape: f32[1,512], index: 8, kind: input, shape index: {}]
  %s9 = inlined_call_operand.vmem [shape: bf16[512,128], index: 9, kind: input, shape index: {}]
  %s10 = inlined_call_operand.vmem [shape: f32[1,128], index: 10, kind: input, shape index: {}]
  %s11 = inlined_call_operand.vmem [shape: f32[16,128], index: 11, kind: output, shape index: {}]
  %s12 = sld [smem:[#allocation0]]
  $region58: #{_fused_forward.1} parent=0
    _
  %s14 = ssub.s32 1, %s12
  %s15 = scalar_select 0, %s14, %s12
  $region1: #{_fused_forward.1} parent=0
    #allocation2 [shape = 'u8[1048576]{0}', space=vmem, size = 0x100000, scoped, tag = 'input window, operand 7, single buffered']
    #allocation3 [shape = 's32[1]{0}', space=sflag, size = 0x4, scoped, tag = 'scoped memory for _fused_forward.1']
    %16 = vsyncpa [#allocation3], 0
    // Predicated region
    $region2: #{_fused_forward.1} parent=1 // pred_check
      _
    $region3: #{_fused_forward.1} parent=1 // pred_check_branch
      %18 = sbr.rel (0) target = $region5
    $region4: #{_fused_forward.1} parent=1 // pred_region
      _
    $region5: #{_fused_forward.1} parent=1 // pred_fallthru
      _
    // Predicated region
    $region6: #{_fused_forward.1} parent=1 // pred_check
      _
    $region7: #{_fused_forward.1} parent=1 // pred_check_branch
      %20 = sbr.rel (0) target = $region9
    $region8: #{_fused_forward.1} parent=1 // pred_region
      _
    $region9: #{_fused_forward.1} parent=1 // pred_fallthru
      _
    // Predicated region
    $region10: #{_fused_forward.1} parent=1 // pred_check
      _
    $region11: #{_fused_forward.1} parent=1 // pred_check_branch
      %22 = sbr.rel (0) target = $region13
    $region12: #{_fused_forward.1} parent=1 // pred_region
      _
    $region13: #{_fused_forward.1} parent=1 // pred_fallthru
      _
    // Predicated region
    $region14: #{_fused_forward.1} parent=1 // pred_check
      _
    $region15: #{_fused_forward.1} parent=1 // pred_check_branch
      %24 = sbr.rel (0) target = $region17
    $region16: #{_fused_forward.1} parent=1 // pred_region
      _
    $region17: #{_fused_forward.1} parent=1 // pred_fallthru
      _
    // Predicated region
    $region18: #{_fused_forward.1} parent=1 // pred_check
      _
    $region19: #{_fused_forward.1} parent=1 // pred_check_branch
      %26 = sbr.rel (0) target = $region21
    $region20: #{_fused_forward.1} parent=1 // pred_region
      _
    $region21: #{_fused_forward.1} parent=1 // pred_fallthru
      _
    // Predicated region
    $region22: #{_fused_forward.1} parent=1 // pred_check
      _
    $region23: #{_fused_forward.1} parent=1 // pred_check_branch
      %28 = sbr.rel (0) target = $region25
    $region24: #{_fused_forward.1} parent=1 // pred_region
      _
    $region25: #{_fused_forward.1} parent=1 // pred_fallthru
      _
    // Predicated region
    $region26: #{_fused_forward.1} parent=1 // pred_check
      _
    $region27: #{_fused_forward.1} parent=1 // pred_check_branch
      %30 = sbr.rel (0) target = $region29
    $region28: #{_fused_forward.1} parent=1 // pred_region
      _
    $region29: #{_fused_forward.1} parent=1 // pred_fallthru
      _
    // Predicated region
    $region30: #{_fused_forward.1} parent=1 // pred_check
      _
    $region31: #{_fused_forward.1} parent=1 // pred_check_branch
      %32 = sbr.rel (0) target = $region33
    $region32: #{_fused_forward.1} parent=1 // pred_region
      %s34 = ssub.s32 32768, 32768
      %35 = vsyncadd [#allocation3], %s34
      %s36 = sshll.u32 [#allocation2], 4
      %s37 = int_to_ptr.vmem [resolvable:$true] %s36
      %42 = dma.hbm_to_vmem [thread:$0]  %s7, 32768, %s37, [#allocation3], 256, 256, 16
    $region33: #{_fused_forward.1} parent=1 // pred_fallthru
      _
    // Predicated region
    $region34: #{_fused_forward.1} parent=1 // pred_check
      _
    $region35: #{_fused_forward.1} parent=1 // pred_check_branch
      %44 = sbr.rel (0) target = $region37
    $region36: #{_fused_forward.1} parent=1 // pred_region
      _
    $region37: #{_fused_forward.1} parent=1 // pred_fallthru
      _
    // Predicated region
    $region38: #{_fused_forward.1} parent=1 // pred_check
      _
    $region39: #{_fused_forward.1} parent=1 // pred_check_branch
      %46 = sbr.rel (0) target = $region41
    $region40: #{_fused_forward.1} parent=1 // pred_region
      _
    $region41: #{_fused_forward.1} parent=1 // pred_fallthru
      _
    // Predicated region
    $region42: #{_fused_forward.1} parent=1 // pred_check
      _
    $region43: #{_fused_forward.1} parent=1 // pred_check_branch
      %48 = sbr.rel (0) target = $region45
    $region44: #{_fused_forward.1} parent=1 // pred_region
      _
    $region45: #{_fused_forward.1} parent=1 // pred_fallthru
      _
    // Predicated region
    $region46: #{_fused_forward.1} parent=1 // pred_check
      _
    $region47: #{_fused_forward.1} parent=1 // pred_check_branch
      %50 = sbr.rel (0) target = $region49
    $region48: #{_fused_forward.1} parent=1 // pred_region
      %51 = dma.done [#allocation3], 32768
    $region49: #{_fused_forward.1} parent=1 // pred_fallthru
      _
    %v53 = vld [vmem:[%s0] sm:$0xf]
    %v54 = vld [vmem:[%s0 + $0x4] sm:$0xf]
    %v55 = vld [vmem:[%s0 + $0x8] sm:$0xf]
    %v56 = vld [vmem:[%s0 + $0xc] sm:$0xf]
    %v57 = vld [vmem:[%s0 + $0x10] sm:$0xf]
    %v58 = vld [vmem:[%s0 + $0x14] sm:$0xf]
    %v59 = vld [vmem:[%s0 + $0x18] sm:$0xf]
    %v60 = vld [vmem:[%s0 + $0x1c] sm:$0xf]
    %v61 = vld [vmem:[%s0 + $0x20] sm:$0xf]
    %v62 = vld [vmem:[%s0 + $0x24] sm:$0xf]
    %v63 = vld [vmem:[%s0 + $0x28] sm:$0xf]
    %v64 = vld [vmem:[%s0 + $0x2c] sm:$0xf]
    %v65 = vld [vmem:[%s0 + $0x30] sm:$0xf]
    %v66 = vld [vmem:[%s0 + $0x34] sm:$0xf]
    %v67 = vld [vmem:[%s0 + $0x38] sm:$0xf]
    %v68 = vld [vmem:[%s0 + $0x3c] sm:$0xf]
    %v69 = vld [vmem:[%s0 + $0x40] sm:$0xf]
    %v70 = vld [vmem:[%s0 + $0x44] sm:$0xf]
    %v71 = vld [vmem:[%s0 + $0x48] sm:$0xf]
    %v72 = vld [vmem:[%s0 + $0x4c] sm:$0xf]
    %v73 = vld [vmem:[%s1] sm:$0xf]
    %v74 = vld [vmem:[%s1 + $0x4] sm:$0xf]
    %v75 = vld [vmem:[%s1 + $0x8] sm:$0xf]
    %v76 = vld [vmem:[%s1 + $0xc] sm:$0xf]
    %v77 = vld [vmem:[%s1 + $0x10] sm:$0xf]
    %s78 = scalar_lea.vmem %s1, 20
    %v79 = vld [vmem:[%s78] sm:$0xf]
    %v80 = vld [vmem:[%s78 + $0x4] sm:$0xf]
    %v81 = vld [vmem:[%s78 + $0x8] sm:$0xf]
    %v82 = vld [vmem:[%s78 + $0xc] sm:$0xf]
    %v83 = vld [vmem:[%s78 + $0x10] sm:$0xf]
    %v100 = vunpack.c.l.b16 %v55
    %v101 = vunpack.c.l.b16 %v56
    %v102 = vunpack.c.l.b16 %v57
    %v103 = vunpack.c.l.b16 %v58
    %v104 = vunpack.c.l.b16 %v59
    %v105 = vunpack.c.l.b16 %v60
    %v106 = vunpack.c.l.b16 %v61
    %v107 = vunpack.c.l.b16 %v62
    %v108 = vunpack.c.l.b16 %v63
    %v109 = vunpack.c.l.b16 %v64
    %v110 = vunpack.c.l.b16 %v65
    %v111 = vunpack.c.l.b16 %v66
    %v112 = vunpack.c.l.b16 %v67
    %v113 = vunpack.c.l.b16 %v68
    %v114 = vunpack.c.l.b16 %v69
    %v115 = vunpack.c.l.b16 %v70
    %v116 = vpack.c.b16 %v101, %v100
    %v117 = vpack.c.b16 %v103, %v102
    %v118 = vpack.c.b16 %v105, %v104
    %v119 = vpack.c.b16 %v107, %v106
    %v120 = vpack.c.b16 %v109, %v108
    %v121 = vpack.c.b16 %v111, %v110
    %v122 = vpack.c.b16 %v113, %v112
    %v123 = vpack.c.b16 %v115, %v114
    %v129 = vunpack.c.l.b16 %v79
    %v130 = vunpack.c.l.b16 %v80
    %v131 = vunpack.c.l.b16 %v81
    %v132 = vunpack.c.l.b16 %v82
    %v133 = vunpack.c.l.b16 %v83
    %v134 = vpack.c.b16 %v130, %v129
    %v135 = vpack.c.b16 %v132, %v131
    %v136 = vpack.c.b16 %v133, %v133
    %vm139 = vcmask 326656
    %v141 = vsel %vm139, %v116, 0
    %v144 = vsel %vm139, %v117, 0
    %v147 = vsel %vm139, %v118, 0
    %v150 = vsel %vm139, %v119, 0
    %v153 = vsel %vm139, %v120, 0
    %v156 = vsel %vm139, %v121, 0
    %v159 = vsel %vm139, %v122, 0
    %v162 = vsel %vm139, %v123, 0
    %vm164 = vcmask 1043456
    %v166 = vsel %vm164, %v136, 0
    %168 = vmatprep.subr.bf16.mxu0 0
    %169 = vmatpush1.bf16.msra.mxu0 %v134
    %170 = vmatprep.subr.bf16.mxu0 0
    %171 = vmatpush1.bf16.msra.mxu0 %v135
    %172 = vmatprep.subr.bf16.mxu0 0
    %173 = vmatpush1.bf16.msra.mxu0 %v166
    %174 = vmatprep.subr.bf16.mxu0 0
    %175 = vmatpush1.bf16.msra.mxu0 0
    %176 = vmatprep.subr.bf16.mxu0 0
    %177 = vmatpush1.bf16.msra.mxu0 0
    %178 = vmatprep.subr.bf16.mxu0 0
    %179 = vmatpush1.bf16.msra.mxu0 0
    %180 = vmatprep.subr.bf16.mxu0 0
    %181 = vmatpush1.bf16.msra.mxu0 0
    %182 = vmatprep.subr.bf16.mxu0 0
    %183 = vmatpush1.bf16.msra.mxu0 0
    %184 = vmatprep.subr.bf16.mxu0 0
    %185 = vmatpush1.bf16.msra.mxu0 0
    %186 = vmatprep.subr.bf16.mxu0 0
    %187 = vmatpush1.bf16.msra.mxu0 0
    %188 = vmatprep.subr.bf16.mxu0 0
    %189 = vmatpush1.bf16.msra.mxu0 0
    %190 = vmatprep.subr.bf16.mxu0 0
    %191 = vmatpush1.bf16.msra.mxu0 0
    %192 = vmatprep.subr.bf16.mxu0 0
    %193 = vmatpush1.bf16.msra.mxu0 0
    %194 = vmatprep.subr.bf16.mxu0 0
    %195 = vmatpush1.bf16.msra.mxu0 0
    %196 = vmatprep.subr.bf16.mxu0 0
    %197 = vmatpush1.bf16.msra.mxu0 0
    %198 = vmatprep.subr.bf16.mxu0 0
    %199 = vmatpush1.bf16.msra.mxu0 0
    %200 = vmatprep.mubr.bf16.mxu0 0
    %201 = vmatmul.mubr.bf16.gmra.mrb[0].mxu0 %v141
    %v202 = vpop.f32.mrb[0].mxu0
    %v203 = vadd.f32 0.0, %v202
    %v204 = vpop.f32.mrb[0].mxu0
    %v205 = vpop.f32.mrb[0].mxu0
    %v206 = vadd.f32 0.0, %v205
    %v207 = vpop.f32.mrb[0].mxu0
    %208 = vmatprep.mubr.bf16.mxu0 0
    %209 = vmatmul.mubr.bf16.gmra.mrb[0].mxu0 %v144
    %v210 = vpop.f32.mrb[0].mxu0
    %v211 = vadd.f32 0.0, %v210
    %v212 = vpop.f32.mrb[0].mxu0
    %v213 = vpop.f32.mrb[0].mxu0
    %v214 = vadd.f32 0.0, %v213
    %v215 = vpop.f32.mrb[0].mxu0
    %216 = vmatprep.mubr.bf16.mxu0 0
    %217 = vmatmul.mubr.bf16.gmra.mrb[0].mxu0 %v147
    %v218 = vpop.f32.mrb[0].mxu0
    %v219 = vadd.f32 0.0, %v218
    %v220 = vpop.f32.mrb[0].mxu0
    %v221 = vpop.f32.mrb[0].mxu0
    %v222 = vadd.f32 0.0, %v221
    %v223 = vpop.f32.mrb[0].mxu0
    %224 = vmatprep.mubr.bf16.mxu0 0
    %225 = vmatmul.mubr.bf16.gmra.mrb[0].mxu0 %v150
    %v226 = vpop.f32.mrb[0].mxu0
    %v227 = vadd.f32 0.0, %v226
    %v228 = vpop.f32.mrb[0].mxu0
    %v229 = vpop.f32.mrb[0].mxu0
    %v230 = vadd.f32 0.0, %v229
    %v231 = vpop.f32.mrb[0].mxu0
    %232 = vmatprep.mubr.bf16.mxu0 0
    %233 = vmatmul.mubr.bf16.gmra.mrb[0].mxu0 %v153
    %v234 = vpop.f32.mrb[0].mxu0
    %v235 = vadd.f32 0.0, %v234
    %v236 = vpop.f32.mrb[0].mxu0
    %v237 = vpop.f32.mrb[0].mxu0
    %v238 = vadd.f32 0.0, %v237
    %v239 = vpop.f32.mrb[0].mxu0
    %240 = vmatprep.mubr.bf16.mxu0 0
    %241 = vmatmul.mubr.bf16.gmra.mrb[0].mxu0 %v156
    %v242 = vpop.f32.mrb[0].mxu0
    %v243 = vadd.f32 0.0, %v242
    %v244 = vpop.f32.mrb[0].mxu0
    %v245 = vpop.f32.mrb[0].mxu0
    %v246 = vadd.f32 0.0, %v245
    %v247 = vpop.f32.mrb[0].mxu0
    %248 = vmatprep.mubr.bf16.mxu0 0
    %249 = vmatmul.mubr.bf16.gmra.mrb[0].mxu0 %v159
    %v250 = vpop.f32.mrb[0].mxu0
    %v251 = vadd.f32 0.0, %v250
    %v252 = vpop.f32.mrb[0].mxu0
    %v253 = vpop.f32.mrb[0].mxu0
    %v254 = vadd.f32 0.0, %v253
    %v255 = vpop.f32.mrb[0].mxu0
    %256 = vmatprep.mubr.bf16.mxu0 0
    %257 = vmatmul.mubr.bf16.gmra.mrb[0].mxu0 %v162
    %v258 = vpop.f32.mrb[0].mxu0
    %v259 = vadd.f32 0.0, %v258
    %v260 = vpop.f32.mrb[0].mxu0
    %v261 = vpop.f32.mrb[0].mxu0
    %v262 = vadd.f32 0.0, %v261
    %v263 = vpop.f32.mrb[0].mxu0
    %264 = vdwg.mxu0
    %v267 = vunpack.c.l.b16 %v53
    %v268 = vunpack.c.l.b16 %v54
    %v269 = vpack.c.b16 %v268, %v267
    %v275 = vunpack.c.l.b16 %v73
    %v276 = vunpack.c.l.b16 %v74
    %v277 = vunpack.c.l.b16 %v75
    %v278 = vunpack.c.l.b16 %v76
    %v279 = vunpack.c.l.b16 %v77
    %v280 = vpack.c.b16 %v276, %v275
    %v281 = vpack.c.b16 %v278, %v277
    %v282 = vpack.c.b16 %v279, %v279
    %v286 = vsel %vm139, %v269, 0
    %v289 = vsel %vm164, %v282, 0
    %291 = vmatprep.subr.bf16.mxu0 0
    %292 = vmatpush1.bf16.msra.mxu0 %v280
    %293 = vmatprep.subr.bf16.mxu0 0
    %294 = vmatpush1.bf16.msra.mxu0 %v281
    %295 = vmatprep.subr.bf16.mxu0 0
    %296 = vmatpush1.bf16.msra.mxu0 %v289
    %297 = vmatprep.subr.bf16.mxu0 0
    %298 = vmatpush1.bf16.msra.mxu0 0
    %299 = vmatprep.subr.bf16.mxu0 0
    %300 = vmatpush1.bf16.msra.mxu0 0
    %301 = vmatprep.subr.bf16.mxu0 0
    %302 = vmatpush1.bf16.msra.mxu0 0
    %303 = vmatprep.subr.bf16.mxu0 0
    %304 = vmatpush1.bf16.msra.mxu0 0
    %305 = vmatprep.subr.bf16.mxu0 0
    %306 = vmatpush1.bf16.msra.mxu0 0
    %307 = vmatprep.subr.bf16.mxu0 0
    %308 = vmatpush1.bf16.msra.mxu0 0
    %309 = vmatprep.subr.bf16.mxu0 0
    %310 = vmatpush1.bf16.msra.mxu0 0
    %311 = vmatprep.subr.bf16.mxu0 0
    %312 = vmatpush1.bf16.msra.mxu0 0
    %313 = vmatprep.subr.bf16.mxu0 0
    %314 = vmatpush1.bf16.msra.mxu0 0
    %315 = vmatprep.subr.bf16.mxu0 0
    %316 = vmatpush1.bf16.msra.mxu0 0
    %317 = vmatprep.subr.bf16.mxu0 0
    %318 = vmatpush1.bf16.msra.mxu0 0
    %319 = vmatprep.subr.bf16.mxu0 0
    %320 = vmatpush1.bf16.msra.mxu0 0
    %321 = vmatprep.subr.bf16.mxu0 0
    %322 = vmatpush1.bf16.msra.mxu0 0
    %323 = vmatprep.mubr.bf16.mxu0 0
    %324 = vmatmul.mubr.bf16.gmra.mrb[0].mxu0 %v286
    %v325 = vpop.f32.mrb[0].mxu0
    %v326 = vadd.f32 %v203, %v325
    %v327 = vpop.f32.mrb[0].mxu0
    %v328 = vpop.f32.mrb[0].mxu0
    %v329 = vadd.f32 %v206, %v328
    %v330 = vpop.f32.mrb[0].mxu0
    %331 = vmatprep.mubr.bf16.mxu0 0
    %332 = vmatmul.mubr.bf16.gmra.mrb[0].mxu0 %v141
    %v333 = vpop.f32.mrb[0].mxu0
    %v334 = vadd.f32 %v211, %v333
    %v335 = vpop.f32.mrb[0].mxu0
    %v336 = vpop.f32.mrb[0].mxu0
    %v337 = vadd.f32 %v214, %v336
    %v338 = vpop.f32.mrb[0].mxu0
    %339 = vmatprep.mubr.bf16.mxu0 0
    %340 = vmatmul.mubr.bf16.gmra.mrb[0].mxu0 %v144
    %v341 = vpop.f32.mrb[0].mxu0
    %v342 = vadd.f32 %v219, %v341
    %v343 = vpop.f32.mrb[0].mxu0
    %v344 = vpop.f32.mrb[0].mxu0
    %v345 = vadd.f32 %v222, %v344
    %v346 = vpop.f32.mrb[0].mxu0
    %347 = vmatprep.mubr.bf16.mxu0 0
    %348 = vmatmul.mubr.bf16.gmra.mrb[0].mxu0 %v147
    %v349 = vpop.f32.mrb[0].mxu0
    %v350 = vadd.f32 %v227, %v349
    %v351 = vpop.f32.mrb[0].mxu0
    %v352 = vpop.f32.mrb[0].mxu0
    %v353 = vadd.f32 %v230, %v352
    %v354 = vpop.f32.mrb[0].mxu0
    %355 = vmatprep.mubr.bf16.mxu0 0
    %356 = vmatmul.mubr.bf16.gmra.mrb[0].mxu0 %v150
    %v357 = vpop.f32.mrb[0].mxu0
    %v358 = vadd.f32 %v235, %v357
    %v359 = vpop.f32.mrb[0].mxu0
    %v360 = vpop.f32.mrb[0].mxu0
    %v361 = vadd.f32 %v238, %v360
    %v362 = vpop.f32.mrb[0].mxu0
    %363 = vmatprep.mubr.bf16.mxu0 0
    %364 = vmatmul.mubr.bf16.gmra.mrb[0].mxu0 %v153
    %v365 = vpop.f32.mrb[0].mxu0
    %v366 = vadd.f32 %v243, %v365
    %v367 = vpop.f32.mrb[0].mxu0
    %v368 = vpop.f32.mrb[0].mxu0
    %v369 = vadd.f32 %v246, %v368
    %v370 = vpop.f32.mrb[0].mxu0
    %371 = vmatprep.mubr.bf16.mxu0 0
    %372 = vmatmul.mubr.bf16.gmra.mrb[0].mxu0 %v156
    %v373 = vpop.f32.mrb[0].mxu0
    %v374 = vadd.f32 %v251, %v373
    %v375 = vpop.f32.mrb[0].mxu0
    %v376 = vpop.f32.mrb[0].mxu0
    %v377 = vadd.f32 %v254, %v376
    %v378 = vpop.f32.mrb[0].mxu0
    %379 = vmatprep.mubr.bf16.mxu0 0
    %380 = vmatmul.mubr.bf16.gmra.mrb[0].mxu0 %v159
    %v381 = vpop.f32.mrb[0].mxu0
    %v382 = vadd.f32 %v259, %v381
    %v383 = vpop.f32.mrb[0].mxu0
    %v384 = vpop.f32.mrb[0].mxu0
    %v385 = vadd.f32 %v262, %v384
    %v386 = vpop.f32.mrb[0].mxu0
    %387 = vdwg.mxu0
    %s388 = scalar_lea.vmem %s1, 40
    %v389 = vld [vmem:[%s388] sm:$0xf]
    %v390 = vld [vmem:[%s388 + $0x4] sm:$0xf]
    %v391 = vld [vmem:[%s388 + $0x8] sm:$0xf]
    %v392 = vld [vmem:[%s388 + $0xc] sm:$0xf]
    %v393 = vld [vmem:[%s388 + $0x10] sm:$0xf]
    %v396 = vunpack.c.l.b16 %v71
    %v397 = vunpack.c.l.b16 %v72
    %v398 = vpack.c.b16 %v397, %v396
    %v404 = vunpack.c.l.b16 %v389
    %v405 = vunpack.c.l.b16 %v390
    %v406 = vunpack.c.l.b16 %v391
    %v407 = vunpack.c.l.b16 %v392
    %v408 = vunpack.c.l.b16 %v393
    %v409 = vpack.c.b16 %v405, %v404
    %v410 = vpack.c.b16 %v407, %v406
    %v411 = vpack.c.b16 %v408, %v408
    %v415 = vsel %vm139, %v398, 0
    %v418 = vsel %vm164, %v411, 0
    %420 = vmatprep.subr.bf16.mxu0 0
    %421 = vmatpush1.bf16.msra.mxu0 %v409
    %422 = vmatprep.subr.bf16.mxu0 0
    %423 = vmatpush1.bf16.msra.mxu0 %v410
    %424 = vmatprep.subr.bf16.mxu0 0
    %425 = vmatpush1.bf16.msra.mxu0 %v418
    %426 = vmatprep.subr.bf16.mxu0 0
    %427 = vmatpush1.bf16.msra.mxu0 0
    %428 = vmatprep.subr.bf16.mxu0 0
    %429 = vmatpush1.bf16.msra.mxu0 0
    %430 = vmatprep.subr.bf16.mxu0 0
    %431 = vmatpush1.bf16.msra.mxu0 0
    %432 = vmatprep.subr.bf16.mxu0 0
    %433 = vmatpush1.bf16.msra.mxu0 0
    %434 = vmatprep.subr.bf16.mxu0 0
    %435 = vmatpush1.bf16.msra.mxu0 0
    %436 = vmatprep.subr.bf16.mxu0 0
    %437 = vmatpush1.bf16.msra.mxu0 0
    %438 = vmatprep.subr.bf16.mxu0 0
    %439 = vmatpush1.bf16.msra.mxu0 0
    %440 = vmatprep.subr.bf16.mxu0 0
    %441 = vmatpush1.bf16.msra.mxu0 0
    %442 = vmatprep.subr.bf16.mxu0 0
    %443 = vmatpush1.bf16.msra.mxu0 0
    %444 = vmatprep.subr.bf16.mxu0 0
    %445 = vmatpush1.bf16.msra.mxu0 0
    %446 = vmatprep.subr.bf16.mxu0 0
    %447 = vmatpush1.bf16.msra.mxu0 0
    %448 = vmatprep.subr.bf16.mxu0 0
    %449 = vmatpush1.bf16.msra.mxu0 0
    %450 = vmatprep.subr.bf16.mxu0 0
    %451 = vmatpush1.bf16.msra.mxu0 0
    %452 = vmatprep.mubr.bf16.mxu0 0
    %453 = vmatmul.mubr.bf16.gmra.mrb[0].mxu0 %v144
    %v454 = vpop.f32.mrb[0].mxu0
    %v455 = vadd.f32 0.0, %v454
    %v456 = vpop.f32.mrb[0].mxu0
    %v457 = vpop.f32.mrb[0].mxu0
    %v458 = vadd.f32 0.0, %v457
    %v459 = vpop.f32.mrb[0].mxu0
    %460 = vmatprep.mubr.bf16.mxu0 0
    %461 = vmatmul.mubr.bf16.gmra.mrb[0].mxu0 %v147
    %v462 = vpop.f32.mrb[0].mxu0
    %v463 = vadd.f32 0.0, %v462
    %v464 = vpop.f32.mrb[0].mxu0
    %v465 = vpop.f32.mrb[0].mxu0
    %v466 = vadd.f32 0.0, %v465
    %v467 = vpop.f32.mrb[0].mxu0
    %468 = vmatprep.mubr.bf16.mxu0 0
    %469 = vmatmul.mubr.bf16.gmra.mrb[0].mxu0 %v150
    %v470 = vpop.f32.mrb[0].mxu0
    %v471 = vadd.f32 0.0, %v470
    %v472 = vpop.f32.mrb[0].mxu0
    %v473 = vpop.f32.mrb[0].mxu0
    %v474 = vadd.f32 0.0, %v473
    %v475 = vpop.f32.mrb[0].mxu0
    %476 = vmatprep.mubr.bf16.mxu0 0
    %477 = vmatmul.mubr.bf16.gmra.mrb[0].mxu0 %v153
    %v478 = vpop.f32.mrb[0].mxu0
    %v479 = vadd.f32 0.0, %v478
    %v480 = vpop.f32.mrb[0].mxu0
    %v481 = vpop.f32.mrb[0].mxu0
    %v482 = vadd.f32 0.0, %v481
    %v483 = vpop.f32.mrb[0].mxu0
    %484 = vmatprep.mubr.bf16.mxu0 0
    %485 = vmatmul.mubr.bf16.gmra.mrb[0].mxu0 %v156
    %v486 = vpop.f32.mrb[0].mxu0
    %v487 = vadd.f32 0.0, %v486
    %v488 = vpop.f32.mrb[0].mxu0
    %v489 = vpop.f32.mrb[0].mxu0
    %v490 = vadd.f32 0.0, %v489
    %v491 = vpop.f32.mrb[0].mxu0
    %492 = vmatprep.mubr.bf16.mxu0 0
    %493 = vmatmul.mubr.bf16.gmra.mrb[0].mxu0 %v159
    %v494 = vpop.f32.mrb[0].mxu0
    %v495 = vadd.f32 0.0, %v494
    %v496 = vpop.f32.mrb[0].mxu0
    %v497 = vpop.f32.mrb[0].mxu0
    %v498 = vadd.f32 0.0, %v497
    %v499 = vpop.f32.mrb[0].mxu0
    %500 = vmatprep.mubr.bf16.mxu0 0
    %501 = vmatmul.mubr.bf16.gmra.mrb[0].mxu0 %v162
    %v502 = vpop.f32.mrb[0].mxu0
    %v503 = vadd.f32 0.0, %v502
    %v504 = vpop.f32.mrb[0].mxu0
    %v505 = vpop.f32.mrb[0].mxu0
    %v506 = vadd.f32 0.0, %v505
    %v507 = vpop.f32.mrb[0].mxu0
    %508 = vmatprep.mubr.bf16.mxu0 0
    %509 = vmatmul.mubr.bf16.gmra.mrb[0].mxu0 %v415
    %v510 = vpop.f32.mrb[0].mxu0
    %v511 = vadd.f32 0.0, %v510
    %v512 = vpop.f32.mrb[0].mxu0
    %v513 = vpop.f32.mrb[0].mxu0
    %v514 = vadd.f32 0.0, %v513
    %v515 = vpop.f32.mrb[0].mxu0
    %516 = vdwg.mxu0
    %v517 = vadd.f32 %v326, %v455
    %v518 = vadd.f32 %v329, %v458
    %v519 = vadd.f32 %v334, %v463
    %v520 = vadd.f32 %v337, %v466
    %v521 = vadd.f32 %v342, %v471
    %v522 = vadd.f32 %v345, %v474
    %v523 = vadd.f32 %v350, %v479
    %v524 = vadd.f32 %v353, %v482
    %v525 = vadd.f32 %v358, %v487
    %v526 = vadd.f32 %v361, %v490
    %v527 = vadd.f32 %v366, %v495
    %v528 = vadd.f32 %v369, %v498
    %v529 = vadd.f32 %v374, %v503
    %v530 = vadd.f32 %v377, %v506
    %v531 = vadd.f32 %v382, %v511
    %v532 = vadd.f32 %v385, %v514
    %v533 = vld [vmem:[%s2] sm:$0x1]
    %v535 = vlaneseq
    %v536 = vshrl.u32 %v535, 7
    %v537 = vsub.s32 0, %v536
    %v538 = vrot.slane %v533, %v537
    %v540 = vadd.f32 %v517, %v538
    %v541 = vadd.f32 %v518, %v538
    %v542 = vadd.f32 %v519, %v538
    %v543 = vadd.f32 %v520, %v538
    %v544 = vadd.f32 %v521, %v538
    %v545 = vadd.f32 %v522, %v538
    %v546 = vadd.f32 %v523, %v538
    %v547 = vadd.f32 %v524, %v538
    %v548 = vadd.f32 %v525, %v538
    %v549 = vadd.f32 %v526, %v538
    %v550 = vadd.f32 %v527, %v538
    %v551 = vadd.f32 %v528, %v538
    %v552 = vadd.f32 %v529, %v538
    %v553 = vadd.f32 %v530, %v538
    %v554 = vadd.f32 %v531, %v538
    %v555 = vadd.f32 %v532, %v538
    %v556 = vmax.f32 %v540, 0.0
    %v557 = vmax.f32 %v541, 0.0
    %v558 = vmax.f32 %v542, 0.0
    %v559 = vmax.f32 %v543, 0.0
    %v560 = vmax.f32 %v544, 0.0
    %v561 = vmax.f32 %v545, 0.0
    %v562 = vmax.f32 %v546, 0.0
    %v563 = vmax.f32 %v547, 0.0
    %v564 = vmax.f32 %v548, 0.0
    %v565 = vmax.f32 %v549, 0.0
    %v566 = vmax.f32 %v550, 0.0
    %v567 = vmax.f32 %v551, 0.0
    %v568 = vmax.f32 %v552, 0.0
    %v569 = vmax.f32 %v553, 0.0
    %v570 = vmax.f32 %v554, 0.0
    %v571 = vmax.f32 %v555, 0.0
    %v572 = vpack.c.bf16 %v557, %v556
    %v573 = vpack.c.bf16 %v559, %v558
    %v574 = vpack.c.bf16 %v561, %v560
    %v575 = vpack.c.bf16 %v563, %v562
    %v576 = vpack.c.bf16 %v565, %v564
    %v577 = vpack.c.bf16 %v567, %v566
    %v578 = vpack.c.bf16 %v569, %v568
    %v579 = vpack.c.bf16 %v571, %v570
    %v580 = vld [vmem:[%s3] sm:$0xff]
    %v581 = vld [vmem:[%s3 + $0x8] sm:$0xff]
    %v582 = vld [vmem:[%s3 + $0x10] sm:$0xff]
    %v583 = vld [vmem:[%s3 + $0x18] sm:$0xff]
    %v584 = vld [vmem:[%s3 + $0x20] sm:$0xff]
    %v585 = vld [vmem:[%s3 + $0x28] sm:$0xff]
    %v586 = vld [vmem:[%s3 + $0x30] sm:$0xff]
    %v587 = vld [vmem:[%s3 + $0x38] sm:$0xff]
    %v588 = vld [vmem:[%s3 + $0x40] sm:$0xff]
    %v589 = vld [vmem:[%s3 + $0x48] sm:$0xff]
    %v590 = vld [vmem:[%s3 + $0x50] sm:$0xff]
    %v591 = vld [vmem:[%s3 + $0x58] sm:$0xff]
    %v592 = vld [vmem:[%s3 + $0x60] sm:$0xff]
    %v593 = vld [vmem:[%s3 + $0x68] sm:$0xff]
    %v594 = vld [vmem:[%s3 + $0x70] sm:$0xff]
    %v595 = vld [vmem:[%s3 + $0x78] sm:$0xff]
    %s596 = scalar_lea.vmem %s3, 128
    %v597 = vld [vmem:[%s596] sm:$0xff]
    %v598 = vld [vmem:[%s596 + $0x8] sm:$0xff]
    %v599 = vld [vmem:[%s596 + $0x10] sm:$0xff]
    %v600 = vld [vmem:[%s596 + $0x18] sm:$0xff]
    %v601 = vld [vmem:[%s596 + $0x20] sm:$0xff]
    %v602 = vld [vmem:[%s596 + $0x28] sm:$0xff]
    %v603 = vld [vmem:[%s596 + $0x30] sm:$0xff]
    %v604 = vld [vmem:[%s596 + $0x38] sm:$0xff]
    %v605 = vld [vmem:[%s596 + $0x40] sm:$0xff]
    %v606 = vld [vmem:[%s596 + $0x48] sm:$0xff]
    %v607 = vld [vmem:[%s596 + $0x50] sm:$0xff]
    %v608 = vld [vmem:[%s596 + $0x58] sm:$0xff]
    %v609 = vld [vmem:[%s596 + $0x60] sm:$0xff]
    %v610 = vld [vmem:[%s596 + $0x68] sm:$0xff]
    %v611 = vld [vmem:[%s596 + $0x70] sm:$0xff]
    %v612 = vld [vmem:[%s596 + $0x78] sm:$0xff]
    %v629 = vunpack.c.l.b16 %v597
    %v630 = vunpack.c.h.b16 %v597
    %v631 = vunpack.c.l.b16 %v598
    %v632 = vunpack.c.h.b16 %v598
    %v633 = vunpack.c.l.b16 %v599
    %v634 = vunpack.c.h.b16 %v599
    %v635 = vunpack.c.l.b16 %v600
    %v636 = vunpack.c.h.b16 %v600
    %v637 = vunpack.c.l.b16 %v601
    %v638 = vunpack.c.h.b16 %v601
    %v639 = vunpack.c.l.b16 %v602
    %v640 = vunpack.c.h.b16 %v602
    %v641 = vunpack.c.l.b16 %v603
    %v642 = vunpack.c.h.b16 %v603
    %v643 = vunpack.c.l.b16 %v604
    %v644 = vunpack.c.h.b16 %v604
    %v645 = vunpack.c.l.b16 %v605
    %v646 = vunpack.c.h.b16 %v605
    %v647 = vunpack.c.l.b16 %v606
    %v648 = vunpack.c.h.b16 %v606
    %v649 = vunpack.c.l.b16 %v607
    %v650 = vunpack.c.h.b16 %v607
    %v651 = vunpack.c.l.b16 %v608
    %v652 = vunpack.c.h.b16 %v608
    %v653 = vunpack.c.l.b16 %v609
    %v654 = vunpack.c.h.b16 %v609
    %v655 = vunpack.c.l.b16 %v610
    %v656 = vunpack.c.h.b16 %v610
    %v657 = vunpack.c.l.b16 %v611
    %v658 = vunpack.c.h.b16 %v611
    %v659 = vunpack.c.l.b16 %v612
    %v660 = vunpack.c.h.b16 %v612
    %v661 = vpack.c.b16 %v631, %v629
    %v662 = vpack.c.b16 %v632, %v630
    %v663 = vpack.c.b16 %v635, %v633
    %v664 = vpack.c.b16 %v636, %v634
    %v665 = vpack.c.b16 %v639, %v637
    %v666 = vpack.c.b16 %v640, %v638
    %v667 = vpack.c.b16 %v643, %v641
    %v668 = vpack.c.b16 %v644, %v642
    %v669 = vpack.c.b16 %v647, %v645
    %v670 = vpack.c.b16 %v648, %v646
    %v671 = vpack.c.b16 %v651, %v649
    %v672 = vpack.c.b16 %v652, %v650
    %v673 = vpack.c.b16 %v655, %v653
    %v674 = vpack.c.b16 %v656, %v654
    %v675 = vpack.c.b16 %v659, %v657
    %v676 = vpack.c.b16 %v660, %v658
    %693 = vmatprep.subr.bf16.mxu0 %v662
    %694 = vmatpush1.bf16.msra.mxu0 %v661
    %695 = vmatprep.subr.bf16.mxu0 %v664
    %696 = vmatpush1.bf16.msra.mxu0 %v663
    %697 = vmatprep.subr.bf16.mxu0 %v666
    %698 = vmatpush1.bf16.msra.mxu0 %v665
    %699 = vmatprep.subr.bf16.mxu0 %v668
    %700 = vmatpush1.bf16.msra.mxu0 %v667
    %701 = vmatprep.subr.bf16.mxu0 %v670
    %702 = vmatpush1.bf16.msra.mxu0 %v669
    %703 = vmatprep.subr.bf16.mxu0 %v672
    %704 = vmatpush1.bf16.msra.mxu0 %v671
    %705 = vmatprep.subr.bf16.mxu0 %v674
    %706 = vmatpush1.bf16.msra.mxu0 %v673
    %707 = vmatprep.subr.bf16.mxu0 %v676
    %708 = vmatpush1.bf16.msra.mxu0 %v675
    %709 = vmatprep.subr.bf16.mxu0 0
    %710 = vmatpush1.bf16.msra.mxu0 0
    %711 = vmatprep.subr.bf16.mxu0 0
    %712 = vmatpush1.bf16.msra.mxu0 0
    %713 = vmatprep.subr.bf16.mxu0 0
    %714 = vmatpush1.bf16.msra.mxu0 0
    %715 = vmatprep.subr.bf16.mxu0 0
    %716 = vmatpush1.bf16.msra.mxu0 0
    %717 = vmatprep.subr.bf16.mxu0 0
    %718 = vmatpush1.bf16.msra.mxu0 0
    %719 = vmatprep.subr.bf16.mxu0 0
    %720 = vmatpush1.bf16.msra.mxu0 0
    %721 = vmatprep.subr.bf16.mxu0 0
    %722 = vmatpush1.bf16.msra.mxu0 0
    %723 = vmatprep.subr.bf16.mxu0 0
    %724 = vmatpush1.bf16.msra.mxu0 0
    %725 = vmatprep.mubr.bf16.mxu0 0
    %726 = vmatmul.mubr.bf16.gmra.mrb[0].mxu0 %v573
    %v727 = vpop.f32.mrb[0].mxu0
    %v728 = vadd.f32 0.0, %v727
    %v729 = vpop.f32.mrb[0].mxu0
    %v730 = vadd.f32 0.0, %v729
    %v731 = vpop.f32.mrb[0].mxu0
    %v732 = vadd.f32 0.0, %v731
    %v733 = vpop.f32.mrb[0].mxu0
    %v734 = vadd.f32 0.0, %v733
    %735 = vmatprep.mubr.bf16.mxu0 0
    %736 = vmatmul.mubr.bf16.gmra.mrb[0].mxu0 %v574
    %v737 = vpop.f32.mrb[0].mxu0
    %v738 = vadd.f32 0.0, %v737
    %v739 = vpop.f32.mrb[0].mxu0
    %v740 = vadd.f32 0.0, %v739
    %v741 = vpop.f32.mrb[0].mxu0
    %v742 = vadd.f32 0.0, %v741
    %v743 = vpop.f32.mrb[0].mxu0
    %v744 = vadd.f32 0.0, %v743
    %745 = vmatprep.mubr.bf16.mxu0 0
    %746 = vmatmul.mubr.bf16.gmra.mrb[0].mxu0 %v575
    %v747 = vpop.f32.mrb[0].mxu0
    %v748 = vadd.f32 0.0, %v747
    %v749 = vpop.f32.mrb[0].mxu0
    %v750 = vadd.f32 0.0, %v749
    %v751 = vpop.f32.mrb[0].mxu0
    %v752 = vadd.f32 0.0, %v751
    %v753 = vpop.f32.mrb[0].mxu0
    %v754 = vadd.f32 0.0, %v753
    %755 = vmatprep.mubr.bf16.mxu0 0
    %756 = vmatmul.mubr.bf16.gmra.mrb[0].mxu0 %v576
    %v757 = vpop.f32.mrb[0].mxu0
    %v758 = vadd.f32 0.0, %v757
    %v759 = vpop.f32.mrb[0].mxu0
    %v760 = vadd.f32 0.0, %v759
    %v761 = vpop.f32.mrb[0].mxu0
    %v762 = vadd.f32 0.0, %v761
    %v763 = vpop.f32.mrb[0].mxu0
    %v764 = vadd.f32 0.0, %v763
    %765 = vmatprep.mubr.bf16.mxu0 0
    %766 = vmatmul.mubr.bf16.gmra.mrb[0].mxu0 %v577
    %v767 = vpop.f32.mrb[0].mxu0
    %v768 = vadd.f32 0.0, %v767
    %v769 = vpop.f32.mrb[0].mxu0
    %v770 = vadd.f32 0.0, %v769
    %v771 = vpop.f32.mrb[0].mxu0
    %v772 = vadd.f32 0.0, %v771
    %v773 = vpop.f32.mrb[0].mxu0
    %v774 = vadd.f32 0.0, %v773
    %775 = vmatprep.mubr.bf16.mxu0 0
    %776 = vmatmul.mubr.bf16.gmra.mrb[0].mxu0 %v578
    %v777 = vpop.f32.mrb[0].mxu0
    %v778 = vadd.f32 0.0, %v777
    %v779 = vpop.f32.mrb[0].mxu0
    %v780 = vadd.f32 0.0, %v779
    %v781 = vpop.f32.mrb[0].mxu0
    %v782 = vadd.f32 0.0, %v781
    %v783 = vpop.f32.mrb[0].mxu0
    %v784 = vadd.f32 0.0, %v783
    %785 = vdwg.mxu0
    %v802 = vunpack.c.l.b16 %v580
    %v803 = vunpack.c.h.b16 %v580
    %v804 = vunpack.c.l.b16 %v581
    %v805 = vunpack.c.h.b16 %v581
    %v806 = vunpack.c.l.b16 %v582
    %v807 = vunpack.c.h.b16 %v582
    %v808 = vunpack.c.l.b16 %v583
    %v809 = vunpack.c.h.b16 %v583
    %v810 = vunpack.c.l.b16 %v584
    %v811 = vunpack.c.h.b16 %v584
    %v812 = vunpack.c.l.b16 %v585
    %v813 = vunpack.c.h.b16 %v585
    %v814 = vunpack.c.l.b16 %v586
    %v815 = vunpack.c.h.b16 %v586
    %v816 = vunpack.c.l.b16 %v587
    %v817 = vunpack.c.h.b16 %v587
    %v818 = vunpack.c.l.b16 %v588
    %v819 = vunpack.c.h.b16 %v588
    %v820 = vunpack.c.l.b16 %v589
    %v821 = vunpack.c.h.b16 %v589
    %v822 = vunpack.c.l.b16 %v590
    %v823 = vunpack.c.h.b16 %v590
    %v824 = vunpack.c.l.b16 %v591
    %v825 = vunpack.c.h.b16 %v591
    %v826 = vunpack.c.l.b16 %v592
    %v827 = vunpack.c.h.b16 %v592
    %v828 = vunpack.c.l.b16 %v593
    %v829 = vunpack.c.h.b16 %v593
    %v830 = vunpack.c.l.b16 %v594
    %v831 = vunpack.c.h.b16 %v594
    %v832 = vunpack.c.l.b16 %v595
    %v833 = vunpack.c.h.b16 %v595
    %v834 = vpack.c.b16 %v804, %v802
    %v835 = vpack.c.b16 %v805, %v803
    %v836 = vpack.c.b16 %v808, %v806
    %v837 = vpack.c.b16 %v809, %v807
    %v838 = vpack.c.b16 %v812, %v810
    %v839 = vpack.c.b16 %v813, %v811
    %v840 = vpack.c.b16 %v816, %v814
    %v841 = vpack.c.b16 %v817, %v815
    %v842 = vpack.c.b16 %v820, %v818
    %v843 = vpack.c.b16 %v821, %v819
    %v844 = vpack.c.b16 %v824, %v822
    %v845 = vpack.c.b16 %v825, %v823
    %v846 = vpack.c.b16 %v828, %v826
    %v847 = vpack.c.b16 %v829, %v827
    %v848 = vpack.c.b16 %v832, %v830
    %v849 = vpack.c.b16 %v833, %v831
    %866 = vmatprep.subr.bf16.mxu0 %v835
    %867 = vmatpush1.bf16.msra.mxu0 %v834
    %868 = vmatprep.subr.bf16.mxu0 %v837
    %869 = vmatpush1.bf16.msra.mxu0 %v836
    %870 = vmatprep.subr.bf16.mxu0 %v839
    %871 = vmatpush1.bf16.msra.mxu0 %v838
    %872 = vmatprep.subr.bf16.mxu0 %v841
    %873 = vmatpush1.bf16.msra.mxu0 %v840
    %874 = vmatprep.subr.bf16.mxu0 %v843
    %875 = vmatpush1.bf16.msra.mxu0 %v842
    %876 = vmatprep.subr.bf16.mxu0 %v845
    %877 = vmatpush1.bf16.msra.mxu0 %v844
    %878 = vmatprep.subr.bf16.mxu0 %v847
    %879 = vmatpush1.bf16.msra.mxu0 %v846
    %880 = vmatprep.subr.bf16.mxu0 %v849
    %881 = vmatpush1.bf16.msra.mxu0 %v848
    %882 = vmatprep.subr.bf16.mxu0 0
    %883 = vmatpush1.bf16.msra.mxu0 0
    %884 = vmatprep.subr.bf16.mxu0 0
    %885 = vmatpush1.bf16.msra.mxu0 0
    %886 = vmatprep.subr.bf16.mxu0 0
    %887 = vmatpush1.bf16.msra.mxu0 0
    %888 = vmatprep.subr.bf16.mxu0 0
    %889 = vmatpush1.bf16.msra.mxu0 0
    %890 = vmatprep.subr.bf16.mxu0 0
    %891 = vmatpush1.bf16.msra.mxu0 0
    %892 = vmatprep.subr.bf16.mxu0 0
    %893 = vmatpush1.bf16.msra.mxu0 0
    %894 = vmatprep.subr.bf16.mxu0 0
    %895 = vmatpush1.bf16.msra.mxu0 0
    %896 = vmatprep.subr.bf16.mxu0 0
    %897 = vmatpush1.bf16.msra.mxu0 0
    %898 = vmatprep.mubr.bf16.mxu0 0
    %899 = vmatmul.mubr.bf16.gmra.mrb[0].mxu0 %v572
    %v900 = vpop.f32.mrb[0].mxu0
    %v901 = vadd.f32 %v728, %v900
    %v902 = vpop.f32.mrb[0].mxu0
    %v903 = vadd.f32 %v730, %v902
    %v904 = vpop.f32.mrb[0].mxu0
    %v905 = vadd.f32 %v732, %v904
    %v906 = vpop.f32.mrb[0].mxu0
    %v907 = vadd.f32 %v734, %v906
    %908 = vmatprep.mubr.bf16.mxu0 0
    %909 = vmatmul.mubr.bf16.gmra.mrb[0].mxu0 %v573
    %v910 = vpop.f32.mrb[0].mxu0
    %v911 = vadd.f32 %v738, %v910
    %v912 = vpop.f32.mrb[0].mxu0
    %v913 = vadd.f32 %v740, %v912
    %v914 = vpop.f32.mrb[0].mxu0
    %v915 = vadd.f32 %v742, %v914
    %v916 = vpop.f32.mrb[0].mxu0
    %v917 = vadd.f32 %v744, %v916
    %918 = vmatprep.mubr.bf16.mxu0 0
    %919 = vmatmul.mubr.bf16.gmra.mrb[0].mxu0 %v574
    %v920 = vpop.f32.mrb[0].mxu0
    %v921 = vadd.f32 %v748, %v920
    %v922 = vpop.f32.mrb[0].mxu0
    %v923 = vadd.f32 %v750, %v922
    %v924 = vpop.f32.mrb[0].mxu0
    %v925 = vadd.f32 %v752, %v924
    %v926 = vpop.f32.mrb[0].mxu0
    %v927 = vadd.f32 %v754, %v926
    %928 = vmatprep.mubr.bf16.mxu0 0
    %929 = vmatmul.mubr.bf16.gmra.mrb[0].mxu0 %v575
    %v930 = vpop.f32.mrb[0].mxu0
    %v931 = vadd.f32 %v758, %v930
    %v932 = vpop.f32.mrb[0].mxu0
    %v933 = vadd.f32 %v760, %v932
    %v934 = vpop.f32.mrb[0].mxu0
    %v935 = vadd.f32 %v762, %v934
    %v936 = vpop.f32.mrb[0].mxu0
    %v937 = vadd.f32 %v764, %v936
    %938 = vmatprep.mubr.bf16.mxu0 0
    %939 = vmatmul.mubr.bf16.gmra.mrb[0].mxu0 %v576
    %v940 = vpop.f32.mrb[0].mxu0
    %v941 = vadd.f32 %v768, %v940
    %v942 = vpop.f32.mrb[0].mxu0
    %v943 = vadd.f32 %v770, %v942
    %v944 = vpop.f32.mrb[0].mxu0
    %v945 = vadd.f32 %v772, %v944
    %v946 = vpop.f32.mrb[0].mxu0
    %v947 = vadd.f32 %v774, %v946
    %948 = vmatprep.mubr.bf16.mxu0 0
    %949 = vmatmul.mubr.bf16.gmra.mrb[0].mxu0 %v577
    %v950 = vpop.f32.mrb[0].mxu0
    %v951 = vadd.f32 %v778, %v950
    %v952 = vpop.f32.mrb[0].mxu0
    %v953 = vadd.f32 %v780, %v952
    %v954 = vpop.f32.mrb[0].mxu0
    %v955 = vadd.f32 %v782, %v954
    %v956 = vpop.f32.mrb[0].mxu0
    %v957 = vadd.f32 %v784, %v956
    %958 = vdwg.mxu0
    %s959 = scalar_lea.vmem %s3, 256
    %v960 = vld [vmem:[%s959] sm:$0xff]
    %v961 = vld [vmem:[%s959 + $0x8] sm:$0xff]
    %v962 = vld [vmem:[%s959 + $0x10] sm:$0xff]
    %v963 = vld [vmem:[%s959 + $0x18] sm:$0xff]
    %v964 = vld [vmem:[%s959 + $0x20] sm:$0xff]
    %v965 = vld [vmem:[%s959 + $0x28] sm:$0xff]
    %v966 = vld [vmem:[%s959 + $0x30] sm:$0xff]
    %v967 = vld [vmem:[%s959 + $0x38] sm:$0xff]
    %v968 = vld [vmem:[%s959 + $0x40] sm:$0xff]
    %v969 = vld [vmem:[%s959 + $0x48] sm:$0xff]
    %v970 = vld [vmem:[%s959 + $0x50] sm:$0xff]
    %v971 = vld [vmem:[%s959 + $0x58] sm:$0xff]
    %v972 = vld [vmem:[%s959 + $0x60] sm:$0xff]
    %v973 = vld [vmem:[%s959 + $0x68] sm:$0xff]
    %v974 = vld [vmem:[%s959 + $0x70] sm:$0xff]
    %v975 = vld [vmem:[%s959 + $0x78] sm:$0xff]
    %v992 = vunpack.c.l.b16 %v960
    %v993 = vunpack.c.h.b16 %v960
    %v994 = vunpack.c.l.b16 %v961
    %v995 = vunpack.c.h.b16 %v961
    %v996 = vunpack.c.l.b16 %v962
    %v997 = vunpack.c.h.b16 %v962
    %v998 = vunpack.c.l.b16 %v963
    %v999 = vunpack.c.h.b16 %v963
    %v1000 = vunpack.c.l.b16 %v964
    %v1001 = vunpack.c.h.b16 %v964
    %v1002 = vunpack.c.l.b16 %v965
    %v1003 = vunpack.c.h.b16 %v965
    %v1004 = vunpack.c.l.b16 %v966
    %v1005 = vunpack.c.h.b16 %v966
    %v1006 = vunpack.c.l.b16 %v967
    %v1007 = vunpack.c.h.b16 %v967
    %v1008 = vunpack.c.l.b16 %v968
    %v1009 = vunpack.c.h.b16 %v968
    %v1010 = vunpack.c.l.b16 %v969
    %v1011 = vunpack.c.h.b16 %v969
    %v1012 = vunpack.c.l.b16 %v970
    %v1013 = vunpack.c.h.b16 %v970
    %v1014 = vunpack.c.l.b16 %v971
    %v1015 = vunpack.c.h.b16 %v971
    %v1016 = vunpack.c.l.b16 %v972
    %v1017 = vunpack.c.h.b16 %v972
    %v1018 = vunpack.c.l.b16 %v973
    %v1019 = vunpack.c.h.b16 %v973
    %v1020 = vunpack.c.l.b16 %v974
    %v1021 = vunpack.c.h.b16 %v974
    %v1022 = vunpack.c.l.b16 %v975
    %v1023 = vunpack.c.h.b16 %v975
    %v1024 = vpack.c.b16 %v994, %v992
    %v1025 = vpack.c.b16 %v995, %v993
    %v1026 = vpack.c.b16 %v998, %v996
    %v1027 = vpack.c.b16 %v999, %v997
    %v1028 = vpack.c.b16 %v1002, %v1000
    %v1029 = vpack.c.b16 %v1003, %v1001
    %v1030 = vpack.c.b16 %v1006, %v1004
    %v1031 = vpack.c.b16 %v1007, %v1005
    %v1032 = vpack.c.b16 %v1010, %v1008
    %v1033 = vpack.c.b16 %v1011, %v1009
    %v1034 = vpack.c.b16 %v1014, %v1012
    %v1035 = vpack.c.b16 %v1015, %v1013
    %v1036 = vpack.c.b16 %v1018, %v1016
    %v1037 = vpack.c.b16 %v1019, %v1017
    %v1038 = vpack.c.b16 %v1022, %v1020
    %v1039 = vpack.c.b16 %v1023, %v1021
    %1056 = vmatprep.subr.bf16.mxu0 %v1025
    %1057 = vmatpush1.bf16.msra.mxu0 %v1024
    %1058 = vmatprep.subr.bf16.mxu0 %v1027
    %1059 = vmatpush1.bf16.msra.mxu0 %v1026
    %1060 = vmatprep.subr.bf16.mxu0 %v1029
    %1061 = vmatpush1.bf16.msra.mxu0 %v1028
    %1062 = vmatprep.subr.bf16.mxu0 %v1031
    %1063 = vmatpush1.bf16.msra.mxu0 %v1030
    %1064 = vmatprep.subr.bf16.mxu0 %v1033
    %1065 = vmatpush1.bf16.msra.mxu0 %v1032
    %1066 = vmatprep.subr.bf16.mxu0 %v1035
    %1067 = vmatpush1.bf16.msra.mxu0 %v1034
    %1068 = vmatprep.subr.bf16.mxu0 %v1037
    %1069 = vmatpush1.bf16.msra.mxu0 %v1036
    %1070 = vmatprep.subr.bf16.mxu0 %v1039
    %1071 = vmatpush1.bf16.msra.mxu0 %v1038
    %1072 = vmatprep.subr.bf16.mxu0 0
    %1073 = vmatpush1.bf16.msra.mxu0 0
    %1074 = vmatprep.subr.bf16.mxu0 0
    %1075 = vmatpush1.bf16.msra.mxu0 0
    %1076 = vmatprep.subr.bf16.mxu0 0
    %1077 = vmatpush1.bf16.msra.mxu0 0
    %1078 = vmatprep.subr.bf16.mxu0 0
    %1079 = vmatpush1.bf16.msra.mxu0 0
    %1080 = vmatprep.subr.bf16.mxu0 0
    %1081 = vmatpush1.bf16.msra.mxu0 0
    %1082 = vmatprep.subr.bf16.mxu0 0
    %1083 = vmatpush1.bf16.msra.mxu0 0
    %1084 = vmatprep.subr.bf16.mxu0 0
    %1085 = vmatpush1.bf16.msra.mxu0 0
    %1086 = vmatprep.subr.bf16.mxu0 0
    %1087 = vmatpush1.bf16.msra.mxu0 0
    %1088 = vmatprep.mubr.bf16.mxu0 0
    %1089 = vmatmul.mubr.bf16.gmra.mrb[0].mxu0 %v574
    %v1090 = vpop.f32.mrb[0].mxu0
    %v1091 = vadd.f32 0.0, %v1090
    %v1092 = vpop.f32.mrb[0].mxu0
    %v1093 = vadd.f32 0.0, %v1092
    %v1094 = vpop.f32.mrb[0].mxu0
    %v1095 = vadd.f32 0.0, %v1094
    %v1096 = vpop.f32.mrb[0].mxu0
    %v1097 = vadd.f32 0.0, %v1096
    %1098 = vmatprep.mubr.bf16.mxu0 0
    %1099 = vmatmul.mubr.bf16.gmra.mrb[0].mxu0 %v575
    %v1100 = vpop.f32.mrb[0].mxu0
    %v1101 = vadd.f32 0.0, %v1100
    %v1102 = vpop.f32.mrb[0].mxu0
    %v1103 = vadd.f32 0.0, %v1102
    %v1104 = vpop.f32.mrb[0].mxu0
    %v1105 = vadd.f32 0.0, %v1104
    %v1106 = vpop.f32.mrb[0].mxu0
    %v1107 = vadd.f32 0.0, %v1106
    %1108 = vmatprep.mubr.bf16.mxu0 0
    %1109 = vmatmul.mubr.bf16.gmra.mrb[0].mxu0 %v576
    %v1110 = vpop.f32.mrb[0].mxu0
    %v1111 = vadd.f32 0.0, %v1110
    %v1112 = vpop.f32.mrb[0].mxu0
    %v1113 = vadd.f32 0.0, %v1112
    %v1114 = vpop.f32.mrb[0].mxu0
    %v1115 = vadd.f32 0.0, %v1114
    %v1116 = vpop.f32.mrb[0].mxu0
    %v1117 = vadd.f32 0.0, %v1116
    %1118 = vmatprep.mubr.bf16.mxu0 0
    %1119 = vmatmul.mubr.bf16.gmra.mrb[0].mxu0 %v577
    %v1120 = vpop.f32.mrb[0].mxu0
    %v1121 = vadd.f32 0.0, %v1120
    %v1122 = vpop.f32.mrb[0].mxu0
    %v1123 = vadd.f32 0.0, %v1122
    %v1124 = vpop.f32.mrb[0].mxu0
    %v1125 = vadd.f32 0.0, %v1124
    %v1126 = vpop.f32.mrb[0].mxu0
    %v1127 = vadd.f32 0.0, %v1126
    %1128 = vmatprep.mubr.bf16.mxu0 0
    %1129 = vmatmul.mubr.bf16.gmra.mrb[0].mxu0 %v578
    %v1130 = vpop.f32.mrb[0].mxu0
    %v1131 = vadd.f32 0.0, %v1130
    %v1132 = vpop.f32.mrb[0].mxu0
    %v1133 = vadd.f32 0.0, %v1132
    %v1134 = vpop.f32.mrb[0].mxu0
    %v1135 = vadd.f32 0.0, %v1134
    %v1136 = vpop.f32.mrb[0].mxu0
    %v1137 = vadd.f32 0.0, %v1136
    %1138 = vmatprep.mubr.bf16.mxu0 0
    %1139 = vmatmul.mubr.bf16.gmra.mrb[0].mxu0 %v579
    %v1140 = vpop.f32.mrb[0].mxu0
    %v1141 = vadd.f32 0.0, %v1140
    %v1142 = vpop.f32.mrb[0].mxu0
    %v1143 = vadd.f32 0.0, %v1142
    %v1144 = vpop.f32.mrb[0].mxu0
    %v1145 = vadd.f32 0.0, %v1144
    %v1146 = vpop.f32.mrb[0].mxu0
    %v1147 = vadd.f32 0.0, %v1146
    %1148 = vdwg.mxu0
    %v1149 = vadd.f32 %v901, %v1091
    %v1150 = vadd.f32 %v903, %v1093
    %v1151 = vadd.f32 %v905, %v1095
    %v1152 = vadd.f32 %v907, %v1097
    %v1153 = vadd.f32 %v911, %v1101
    %v1154 = vadd.f32 %v913, %v1103
    %v1155 = vadd.f32 %v915, %v1105
    %v1156 = vadd.f32 %v917, %v1107
    %v1157 = vadd.f32 %v921, %v1111
    %v1158 = vadd.f32 %v923, %v1113
    %v1159 = vadd.f32 %v925, %v1115
    %v1160 = vadd.f32 %v927, %v1117
    %v1161 = vadd.f32 %v931, %v1121
    %v1162 = vadd.f32 %v933, %v1123
    %v1163 = vadd.f32 %v935, %v1125
    %v1164 = vadd.f32 %v937, %v1127
    %v1165 = vadd.f32 %v941, %v1131
    %v1166 = vadd.f32 %v943, %v1133
    %v1167 = vadd.f32 %v945, %v1135
    %v1168 = vadd.f32 %v947, %v1137
    %v1169 = vadd.f32 %v951, %v1141
    %v1170 = vadd.f32 %v953, %v1143
    %v1171 = vadd.f32 %v955, %v1145
    %v1172 = vadd.f32 %v957, %v1147
    %v1173 = vld [vmem:[%s4] sm:$0x3]
    %v1175 = vlaneseq
    %v1176 = vshrl.u32 %v1175, 7
    %v1177 = vsub.s32 0, %v1176
    %v1178 = vrot.slane %v1173, %v1177
    %v1179 = vlaneseq
    %v1180 = vshrl.u32 %v1179, 7
    %v1181 = vsub.s32 1, %v1180
    %v1182 = vrot.slane %v1173, %v1181
    %v1185 = vadd.f32 %v1149, %v1178
    %v1186 = vadd.f32 %v1150, %v1182
    %v1187 = vadd.f32 %v1151, %v1178
    %v1188 = vadd.f32 %v1152, %v1182
    %v1189 = vadd.f32 %v1153, %v1178
    %v1190 = vadd.f32 %v1154, %v1182
    %v1191 = vadd.f32 %v1155, %v1178
    %v1192 = vadd.f32 %v1156, %v1182
    %v1193 = vadd.f32 %v1157, %v1178
    %v1194 = vadd.f32 %v1158, %v1182
    %v1195 = vadd.f32 %v1159, %v1178
    %v1196 = vadd.f32 %v1160, %v1182
    %v1197 = vadd.f32 %v1161, %v1178
    %v1198 = vadd.f32 %v1162, %v1182
    %v1199 = vadd.f32 %v1163, %v1178
    %v1200 = vadd.f32 %v1164, %v1182
    %v1201 = vadd.f32 %v1165, %v1178
    %v1202 = vadd.f32 %v1166, %v1182
    %v1203 = vadd.f32 %v1167, %v1178
    %v1204 = vadd.f32 %v1168, %v1182
    %v1205 = vadd.f32 %v1169, %v1178
    %v1206 = vadd.f32 %v1170, %v1182
    %v1207 = vadd.f32 %v1171, %v1178
    %v1208 = vadd.f32 %v1172, %v1182
    %v1209 = vmax.f32 %v1185, 0.0
    %v1210 = vmax.f32 %v1186, 0.0
    %v1211 = vmax.f32 %v1187, 0.0
    %v1212 = vmax.f32 %v1188, 0.0
    %v1213 = vmax.f32 %v1189, 0.0
    %v1214 = vmax.f32 %v1190, 0.0
    %v1215 = vmax.f32 %v1191, 0.0
    %v1216 = vmax.f32 %v1192, 0.0
    %v1217 = vmax.f32 %v1193, 0.0
    %v1218 = vmax.f32 %v1194, 0.0
    %v1219 = vmax.f32 %v1195, 0.0
    %v1220 = vmax.f32 %v1196, 0.0
    %v1221 = vmax.f32 %v1197, 0.0
    %v1222 = vmax.f32 %v1198, 0.0
    %v1223 = vmax.f32 %v1199, 0.0
    %v1224 = vmax.f32 %v1200, 0.0
    %v1225 = vmax.f32 %v1201, 0.0
    %v1226 = vmax.f32 %v1202, 0.0
    %v1227 = vmax.f32 %v1203, 0.0
    %v1228 = vmax.f32 %v1204, 0.0
    %v1229 = vmax.f32 %v1205, 0.0
    %v1230 = vmax.f32 %v1206, 0.0
    %v1231 = vmax.f32 %v1207, 0.0
    %v1232 = vmax.f32 %v1208, 0.0
    %v1233 = vpack.c.bf16 %v1211, %v1209
    %v1234 = vpack.c.bf16 %v1212, %v1210
    %v1235 = vpack.c.bf16 %v1215, %v1213
    %v1236 = vpack.c.bf16 %v1216, %v1214
    %v1237 = vpack.c.bf16 %v1219, %v1217
    %v1238 = vpack.c.bf16 %v1220, %v1218
    %v1239 = vpack.c.bf16 %v1223, %v1221
    %v1240 = vpack.c.bf16 %v1224, %v1222
    %v1241 = vpack.c.bf16 %v1227, %v1225
    %v1242 = vpack.c.bf16 %v1228, %v1226
    %v1243 = vpack.c.bf16 %v1231, %v1229
    %v1244 = vpack.c.bf16 %v1232, %v1230
    %v1245 = vld [vmem:[%s5] sm:$0xff]
    %v1246 = vld [vmem:[%s5 + $0x8] sm:$0xff]
    %v1247 = vld [vmem:[%s5 + $0x10] sm:$0xff]
    %v1248 = vld [vmem:[%s5 + $0x18] sm:$0xff]
    %v1249 = vld [vmem:[%s5 + $0x20] sm:$0xff]
    %v1250 = vld [vmem:[%s5 + $0x28] sm:$0xff]
    %v1251 = vld [vmem:[%s5 + $0x30] sm:$0xff]
    %v1252 = vld [vmem:[%s5 + $0x38] sm:$0xff]
    %v1253 = vld [vmem:[%s5 + $0x40] sm:$0xff]
    %v1254 = vld [vmem:[%s5 + $0x48] sm:$0xff]
    %v1255 = vld [vmem:[%s5 + $0x50] sm:$0xff]
    %v1256 = vld [vmem:[%s5 + $0x58] sm:$0xff]
    %v1257 = vld [vmem:[%s5 + $0x60] sm:$0xff]
    %v1258 = vld [vmem:[%s5 + $0x68] sm:$0xff]
    %v1259 = vld [vmem:[%s5 + $0x70] sm:$0xff]
    %v1260 = vld [vmem:[%s5 + $0x78] sm:$0xff]
    %v1261 = vld [vmem:[%s5 + $0x80] sm:$0xff]
    %v1262 = vld [vmem:[%s5 + $0x88] sm:$0xff]
    %v1263 = vld [vmem:[%s5 + $0x90] sm:$0xff]
    %v1264 = vld [vmem:[%s5 + $0x98] sm:$0xff]
    %v1265 = vld [vmem:[%s5 + $0xa0] sm:$0xff]
    %v1266 = vld [vmem:[%s5 + $0xa8] sm:$0xff]
    %v1267 = vld [vmem:[%s5 + $0xb0] sm:$0xff]
    %v1268 = vld [vmem:[%s5 + $0xb8] sm:$0xff]
    %s1269 = scalar_lea.vmem %s5, 192
    %v1270 = vld [vmem:[%s1269] sm:$0xff]
    %v1271 = vld [vmem:[%s1269 + $0x8] sm:$0xff]
    %v1272 = vld [vmem:[%s1269 + $0x10] sm:$0xff]
    %v1273 = vld [vmem:[%s1269 + $0x18] sm:$0xff]
    %v1274 = vld [vmem:[%s1269 + $0x20] sm:$0xff]
    %v1275 = vld [vmem:[%s1269 + $0x28] sm:$0xff]
    %v1276 = vld [vmem:[%s1269 + $0x30] sm:$0xff]
    %v1277 = vld [vmem:[%s1269 + $0x38] sm:$0xff]
    %v1278 = vld [vmem:[%s1269 + $0x40] sm:$0xff]
    %v1279 = vld [vmem:[%s1269 + $0x48] sm:$0xff]
    %v1280 = vld [vmem:[%s1269 + $0x50] sm:$0xff]
    %v1281 = vld [vmem:[%s1269 + $0x58] sm:$0xff]
    %v1282 = vld [vmem:[%s1269 + $0x60] sm:$0xff]
    %v1283 = vld [vmem:[%s1269 + $0x68] sm:$0xff]
    %v1284 = vld [vmem:[%s1269 + $0x70] sm:$0xff]
    %v1285 = vld [vmem:[%s1269 + $0x78] sm:$0xff]
    %v1286 = vld [vmem:[%s1269 + $0x80] sm:$0xff]
    %v1287 = vld [vmem:[%s1269 + $0x88] sm:$0xff]
    %v1288 = vld [vmem:[%s1269 + $0x90] sm:$0xff]
    %v1289 = vld [vmem:[%s1269 + $0x98] sm:$0xff]
    %v1290 = vld [vmem:[%s1269 + $0xa0] sm:$0xff]
    %v1291 = vld [vmem:[%s1269 + $0xa8] sm:$0xff]
    %v1292 = vld [vmem:[%s1269 + $0xb0] sm:$0xff]
    %v1293 = vld [vmem:[%s1269 + $0xb8] sm:$0xff]
    %v1318 = vunpack.c.l.b16 %v1270
    %v1319 = vunpack.c.h.b16 %v1270
    %v1320 = vunpack.c.l.b16 %v1271
    %v1321 = vunpack.c.h.b16 %v1271
    %v1322 = vunpack.c.l.b16 %v1272
    %v1323 = vunpack.c.h.b16 %v1272
    %v1324 = vunpack.c.l.b16 %v1273
    %v1325 = vunpack.c.h.b16 %v1273
    %v1326 = vunpack.c.l.b16 %v1274
    %v1327 = vunpack.c.h.b16 %v1274
    %v1328 = vunpack.c.l.b16 %v1275
    %v1329 = vunpack.c.h.b16 %v1275
    %v1330 = vunpack.c.l.b16 %v1276
    %v1331 = vunpack.c.h.b16 %v1276
    %v1332 = vunpack.c.l.b16 %v1277
    %v1333 = vunpack.c.h.b16 %v1277
    %v1334 = vunpack.c.l.b16 %v1278
    %v1335 = vunpack.c.h.b16 %v1278
    %v1336 = vunpack.c.l.b16 %v1279
    %v1337 = vunpack.c.h.b16 %v1279
    %v1338 = vunpack.c.l.b16 %v1280
    %v1339 = vunpack.c.h.b16 %v1280
    %v1340 = vunpack.c.l.b16 %v1281
    %v1341 = vunpack.c.h.b16 %v1281
    %v1342 = vunpack.c.l.b16 %v1282
    %v1343 = vunpack.c.h.b16 %v1282
    %v1344 = vunpack.c.l.b16 %v1283
    %v1345 = vunpack.c.h.b16 %v1283
    %v1346 = vunpack.c.l.b16 %v1284
    %v1347 = vunpack.c.h.b16 %v1284
    %v1348 = vunpack.c.l.b16 %v1285
    %v1349 = vunpack.c.h.b16 %v1285
    %v1350 = vunpack.c.l.b16 %v1286
    %v1351 = vunpack.c.h.b16 %v1286
    %v1352 = vunpack.c.l.b16 %v1287
    %v1353 = vunpack.c.h.b16 %v1287
    %v1354 = vunpack.c.l.b16 %v1288
    %v1355 = vunpack.c.h.b16 %v1288
    %v1356 = vunpack.c.l.b16 %v1289
    %v1357 = vunpack.c.h.b16 %v1289
    %v1358 = vunpack.c.l.b16 %v1290
    %v1359 = vunpack.c.h.b16 %v1290
    %v1360 = vunpack.c.l.b16 %v1291
    %v1361 = vunpack.c.h.b16 %v1291
    %v1362 = vunpack.c.l.b16 %v1292
    %v1363 = vunpack.c.h.b16 %v1292
    %v1364 = vunpack.c.l.b16 %v1293
    %v1365 = vunpack.c.h.b16 %v1293
    %v1366 = vpack.c.b16 %v1320, %v1318
    %v1367 = vpack.c.b16 %v1321, %v1319
    %v1368 = vpack.c.b16 %v1324, %v1322
    %v1369 = vpack.c.b16 %v1325, %v1323
    %v1370 = vpack.c.b16 %v1328, %v1326
    %v1371 = vpack.c.b16 %v1329, %v1327
    %v1372 = vpack.c.b16 %v1332, %v1330
    %v1373 = vpack.c.b16 %v1333, %v1331
    %v1374 = vpack.c.b16 %v1336, %v1334
    %v1375 = vpack.c.b16 %v1337, %v1335
    %v1376 = vpack.c.b16 %v1340, %v1338
    %v1377 = vpack.c.b16 %v1341, %v1339
    %v1378 = vpack.c.b16 %v1344, %v1342
    %v1379 = vpack.c.b16 %v1345, %v1343
    %v1380 = vpack.c.b16 %v1348, %v1346
    %v1381 = vpack.c.b16 %v1349, %v1347
    %v1382 = vpack.c.b16 %v1352, %v1350
    %v1383 = vpack.c.b16 %v1353, %v1351
    %v1384 = vpack.c.b16 %v1356, %v1354
    %v1385 = vpack.c.b16 %v1357, %v1355
    %v1386 = vpack.c.b16 %v1360, %v1358
    %v1387 = vpack.c.b16 %v1361, %v1359
    %v1388 = vpack.c.b16 %v1364, %v1362
    %v1389 = vpack.c.b16 %v1365, %v1363
    %vm1414 = vcmask 523264
    %v1416 = vsel %vm1414, %v1236, 0
    %v1419 = vsel %vm1414, %v1238, 0
    %v1422 = vsel %vm1414, %v1240, 0
    %v1425 = vsel %vm1414, %v1242, 0
    %1427 = vmatprep.subr.bf16.mxu0 %v1367
    %1428 = vmatpush1.bf16.msra.mxu0 %v1366
    %1429 = vmatprep.subr.bf16.mxu0 %v1369
    %1430 = vmatpush1.bf16.msra.mxu0 %v1368
    %1431 = vmatprep.subr.bf16.mxu0 %v1371
    %1432 = vmatpush1.bf16.msra.mxu0 %v1370
    %1433 = vmatprep.subr.bf16.mxu0 %v1373
    %1434 = vmatpush1.bf16.msra.mxu0 %v1372
    %1435 = vmatprep.subr.bf16.mxu0 %v1375
    %1436 = vmatpush1.bf16.msra.mxu0 %v1374
    %1437 = vmatprep.subr.bf16.mxu0 %v1377
    %1438 = vmatpush1.bf16.msra.mxu0 %v1376
    %1439 = vmatprep.subr.bf16.mxu0 %v1379
    %1440 = vmatpush1.bf16.msra.mxu0 %v1378
    %1441 = vmatprep.subr.bf16.mxu0 %v1381
    %1442 = vmatpush1.bf16.msra.mxu0 %v1380
    %1443 = vmatprep.subr.bf16.mxu0 %v1383
    %1444 = vmatpush1.bf16.msra.mxu0 %v1382
    %1445 = vmatprep.subr.bf16.mxu0 %v1385
    %1446 = vmatpush1.bf16.msra.mxu0 %v1384
    %1447 = vmatprep.subr.bf16.mxu0 %v1387
    %1448 = vmatpush1.bf16.msra.mxu0 %v1386
    %1449 = vmatprep.subr.bf16.mxu0 %v1389
    %1450 = vmatpush1.bf16.msra.mxu0 %v1388
    %1451 = vmatprep.subr.bf16.mxu0 0
    %1452 = vmatpush1.bf16.msra.mxu0 0
    %1453 = vmatprep.subr.bf16.mxu0 0
    %1454 = vmatpush1.bf16.msra.mxu0 0
    %1455 = vmatprep.subr.bf16.mxu0 0
    %1456 = vmatpush1.bf16.msra.mxu0 0
    %1457 = vmatprep.subr.bf16.mxu0 0
    %1458 = vmatpush1.bf16.msra.mxu0 0
    %1459 = vmatprep.mubr.bf16.mxu0 %v1416
    %1460 = vmatmul.mubr.bf16.gmra.mrb[0].mxu0 %v1235
    %v1461 = vpop.f32.mrb[0].mxu0
    %v1462 = vadd.f32 0.0, %v1461
    %v1463 = vpop.f32.mrb[0].mxu0
    %v1464 = vadd.f32 0.0, %v1463
    %v1465 = vpop.f32.mrb[0].mxu0
    %v1466 = vadd.f32 0.0, %v1465
    %v1467 = vpop.f32.mrb[0].mxu0
    %v1468 = vadd.f32 0.0, %v1467
    %1469 = vmatprep.mubr.bf16.mxu0 %v1419
    %1470 = vmatmul.mubr.bf16.gmra.mrb[0].mxu0 %v1237
    %v1471 = vpop.f32.mrb[0].mxu0
    %v1472 = vadd.f32 0.0, %v1471
    %v1473 = vpop.f32.mrb[0].mxu0
    %v1474 = vadd.f32 0.0, %v1473
    %v1475 = vpop.f32.mrb[0].mxu0
    %v1476 = vadd.f32 0.0, %v1475
    %v1477 = vpop.f32.mrb[0].mxu0
    %v1478 = vadd.f32 0.0, %v1477
    %1479 = vmatprep.mubr.bf16.mxu0 %v1422
    %1480 = vmatmul.mubr.bf16.gmra.mrb[0].mxu0 %v1239
    %v1481 = vpop.f32.mrb[0].mxu0
    %v1482 = vadd.f32 0.0, %v1481
    %v1483 = vpop.f32.mrb[0].mxu0
    %v1484 = vadd.f32 0.0, %v1483
    %v1485 = vpop.f32.mrb[0].mxu0
    %v1486 = vadd.f32 0.0, %v1485
    %v1487 = vpop.f32.mrb[0].mxu0
    %v1488 = vadd.f32 0.0, %v1487
    %1489 = vmatprep.mubr.bf16.mxu0 %v1425
    %1490 = vmatmul.mubr.bf16.gmra.mrb[0].mxu0 %v1241
    %v1491 = vpop.f32.mrb[0].mxu0
    %v1492 = vadd.f32 0.0, %v1491
    %v1493 = vpop.f32.mrb[0].mxu0
    %v1494 = vadd.f32 0.0, %v1493
    %v1495 = vpop.f32.mrb[0].mxu0
    %v1496 = vadd.f32 0.0, %v1495
    %v1497 = vpop.f32.mrb[0].mxu0
    %v1498 = vadd.f32 0.0, %v1497
    %1499 = vdwg.mxu0
    %v1524 = vunpack.c.l.b16 %v1245
    %v1525 = vunpack.c.h.b16 %v1245
    %v1526 = vunpack.c.l.b16 %v1246
    %v1527 = vunpack.c.h.b16 %v1246
    %v1528 = vunpack.c.l.b16 %v1247
    %v1529 = vunpack.c.h.b16 %v1247
    %v1530 = vunpack.c.l.b16 %v1248
    %v1531 = vunpack.c.h.b16 %v1248
    %v1532 = vunpack.c.l.b16 %v1249
    %v1533 = vunpack.c.h.b16 %v1249
    %v1534 = vunpack.c.l.b16 %v1250
    %v1535 = vunpack.c.h.b16 %v1250
    %v1536 = vunpack.c.l.b16 %v1251
    %v1537 = vunpack.c.h.b16 %v1251
    %v1538 = vunpack.c.l.b16 %v1252
    %v1539 = vunpack.c.h.b16 %v1252
    %v1540 = vunpack.c.l.b16 %v1253
    %v1541 = vunpack.c.h.b16 %v1253
    %v1542 = vunpack.c.l.b16 %v1254
    %v1543 = vunpack.c.h.b16 %v1254
    %v1544 = vunpack.c.l.b16 %v1255
    %v1545 = vunpack.c.h.b16 %v1255
    %v1546 = vunpack.c.l.b16 %v1256
    %v1547 = vunpack.c.h.b16 %v1256
    %v1548 = vunpack.c.l.b16 %v1257
    %v1549 = vunpack.c.h.b16 %v1257
    %v1550 = vunpack.c.l.b16 %v1258
    %v1551 = vunpack.c.h.b16 %v1258
    %v1552 = vunpack.c.l.b16 %v1259
    %v1553 = vunpack.c.h.b16 %v1259
    %v1554 = vunpack.c.l.b16 %v1260
    %v1555 = vunpack.c.h.b16 %v1260
    %v1556 = vunpack.c.l.b16 %v1261
    %v1557 = vunpack.c.h.b16 %v1261
    %v1558 = vunpack.c.l.b16 %v1262
    %v1559 = vunpack.c.h.b16 %v1262
    %v1560 = vunpack.c.l.b16 %v1263
    %v1561 = vunpack.c.h.b16 %v1263
    %v1562 = vunpack.c.l.b16 %v1264
    %v1563 = vunpack.c.h.b16 %v1264
    %v1564 = vunpack.c.l.b16 %v1265
    %v1565 = vunpack.c.h.b16 %v1265
    %v1566 = vunpack.c.l.b16 %v1266
    %v1567 = vunpack.c.h.b16 %v1266
    %v1568 = vunpack.c.l.b16 %v1267
    %v1569 = vunpack.c.h.b16 %v1267
    %v1570 = vunpack.c.l.b16 %v1268
    %v1571 = vunpack.c.h.b16 %v1268
    %v1572 = vpack.c.b16 %v1526, %v1524
    %v1573 = vpack.c.b16 %v1527, %v1525
    %v1574 = vpack.c.b16 %v1530, %v1528
    %v1575 = vpack.c.b16 %v1531, %v1529
    %v1576 = vpack.c.b16 %v1534, %v1532
    %v1577 = vpack.c.b16 %v1535, %v1533
    %v1578 = vpack.c.b16 %v1538, %v1536
    %v1579 = vpack.c.b16 %v1539, %v1537
    %v1580 = vpack.c.b16 %v1542, %v1540
    %v1581 = vpack.c.b16 %v1543, %v1541
    %v1582 = vpack.c.b16 %v1546, %v1544
    %v1583 = vpack.c.b16 %v1547, %v1545
    %v1584 = vpack.c.b16 %v1550, %v1548
    %v1585 = vpack.c.b16 %v1551, %v1549
    %v1586 = vpack.c.b16 %v1554, %v1552
    %v1587 = vpack.c.b16 %v1555, %v1553
    %v1588 = vpack.c.b16 %v1558, %v1556
    %v1589 = vpack.c.b16 %v1559, %v1557
    %v1590 = vpack.c.b16 %v1562, %v1560
    %v1591 = vpack.c.b16 %v1563, %v1561
    %v1592 = vpack.c.b16 %v1566, %v1564
    %v1593 = vpack.c.b16 %v1567, %v1565
    %v1594 = vpack.c.b16 %v1570, %v1568
    %v1595 = vpack.c.b16 %v1571, %v1569
    %v1621 = vsel %vm1414, %v1234, 0
    %1623 = vmatprep.subr.bf16.mxu0 %v1573
    %1624 = vmatpush1.bf16.msra.mxu0 %v1572
    %1625 = vmatprep.subr.bf16.mxu0 %v1575
    %1626 = vmatpush1.bf16.msra.mxu0 %v1574
    %1627 = vmatprep.subr.bf16.mxu0 %v1577
    %1628 = vmatpush1.bf16.msra.mxu0 %v1576
    %1629 = vmatprep.subr.bf16.mxu0 %v1579
    %1630 = vmatpush1.bf16.msra.mxu0 %v1578
    %1631 = vmatprep.subr.bf16.mxu0 %v1581
    %1632 = vmatpush1.bf16.msra.mxu0 %v1580
    %1633 = vmatprep.subr.bf16.mxu0 %v1583
    %1634 = vmatpush1.bf16.msra.mxu0 %v1582
    %1635 = vmatprep.subr.bf16.mxu0 %v1585
    %1636 = vmatpush1.bf16.msra.mxu0 %v1584
    %1637 = vmatprep.subr.bf16.mxu0 %v1587
    %1638 = vmatpush1.bf16.msra.mxu0 %v1586
    %1639 = vmatprep.subr.bf16.mxu0 %v1589
    %1640 = vmatpush1.bf16.msra.mxu0 %v1588
    %1641 = vmatprep.subr.bf16.mxu0 %v1591
    %1642 = vmatpush1.bf16.msra.mxu0 %v1590
    %1643 = vmatprep.subr.bf16.mxu0 %v1593
    %1644 = vmatpush1.bf16.msra.mxu0 %v1592
    %1645 = vmatprep.subr.bf16.mxu0 %v1595
    %1646 = vmatpush1.bf16.msra.mxu0 %v1594
    %1647 = vmatprep.subr.bf16.mxu0 0
    %1648 = vmatpush1.bf16.msra.mxu0 0
    %1649 = vmatprep.subr.bf16.mxu0 0
    %1650 = vmatpush1.bf16.msra.mxu0 0
    %1651 = vmatprep.subr.bf16.mxu0 0
    %1652 = vmatpush1.bf16.msra.mxu0 0
    %1653 = vmatprep.subr.bf16.mxu0 0
    %1654 = vmatpush1.bf16.msra.mxu0 0
    %1655 = vmatprep.mubr.bf16.mxu0 %v1621
    %1656 = vmatmul.mubr.bf16.gmra.mrb[0].mxu0 %v1233
    %v1657 = vpop.f32.mrb[0].mxu0
    %v1658 = vadd.f32 %v1462, %v1657
    %v1659 = vpop.f32.mrb[0].mxu0
    %v1660 = vadd.f32 %v1464, %v1659
    %v1661 = vpop.f32.mrb[0].mxu0
    %v1662 = vadd.f32 %v1466, %v1661
    %v1663 = vpop.f32.mrb[0].mxu0
    %v1664 = vadd.f32 %v1468, %v1663
    %1665 = vmatprep.mubr.bf16.mxu0 %v1416
    %1666 = vmatmul.mubr.bf16.gmra.mrb[0].mxu0 %v1235
    %v1667 = vpop.f32.mrb[0].mxu0
    %v1668 = vadd.f32 %v1472, %v1667
    %v1669 = vpop.f32.mrb[0].mxu0
    %v1670 = vadd.f32 %v1474, %v1669
    %v1671 = vpop.f32.mrb[0].mxu0
    %v1672 = vadd.f32 %v1476, %v1671
    %v1673 = vpop.f32.mrb[0].mxu0
    %v1674 = vadd.f32 %v1478, %v1673
    %1675 = vmatprep.mubr.bf16.mxu0 %v1419
    %1676 = vmatmul.mubr.bf16.gmra.mrb[0].mxu0 %v1237
    %v1677 = vpop.f32.mrb[0].mxu0
    %v1678 = vadd.f32 %v1482, %v1677
    %v1679 = vpop.f32.mrb[0].mxu0
    %v1680 = vadd.f32 %v1484, %v1679
    %v1681 = vpop.f32.mrb[0].mxu0
    %v1682 = vadd.f32 %v1486, %v1681
    %v1683 = vpop.f32.mrb[0].mxu0
    %v1684 = vadd.f32 %v1488, %v1683
    %1685 = vmatprep.mubr.bf16.mxu0 %v1422
    %1686 = vmatmul.mubr.bf16.gmra.mrb[0].mxu0 %v1239
    %v1687 = vpop.f32.mrb[0].mxu0
    %v1688 = vadd.f32 %v1492, %v1687
    %v1689 = vpop.f32.mrb[0].mxu0
    %v1690 = vadd.f32 %v1494, %v1689
    %v1691 = vpop.f32.mrb[0].mxu0
    %v1692 = vadd.f32 %v1496, %v1691
    %v1693 = vpop.f32.mrb[0].mxu0
    %v1694 = vadd.f32 %v1498, %v1693
    %1695 = vdwg.mxu0
    %s1696 = scalar_lea.vmem %s5, 384
    %v1697 = vld [vmem:[%s1696] sm:$0xff]
    %v1698 = vld [vmem:[%s1696 + $0x8] sm:$0xff]
    %v1699 = vld [vmem:[%s1696 + $0x10] sm:$0xff]
    %v1700 = vld [vmem:[%s1696 + $0x18] sm:$0xff]
    %v1701 = vld [vmem:[%s1696 + $0x20] sm:$0xff]
    %v1702 = vld [vmem:[%s1696 + $0x28] sm:$0xff]
    %v1703 = vld [vmem:[%s1696 + $0x30] sm:$0xff]
    %v1704 = vld [vmem:[%s1696 + $0x38] sm:$0xff]
    %v1705 = vld [vmem:[%s1696 + $0x40] sm:$0xff]
    %v1706 = vld [vmem:[%s1696 + $0x48] sm:$0xff]
    %v1707 = vld [vmem:[%s1696 + $0x50] sm:$0xff]
    %v1708 = vld [vmem:[%s1696 + $0x58] sm:$0xff]
    %v1709 = vld [vmem:[%s1696 + $0x60] sm:$0xff]
    %v1710 = vld [vmem:[%s1696 + $0x68] sm:$0xff]
    %v1711 = vld [vmem:[%s1696 + $0x70] sm:$0xff]
    %v1712 = vld [vmem:[%s1696 + $0x78] sm:$0xff]
    %v1713 = vld [vmem:[%s1696 + $0x80] sm:$0xff]
    %v1714 = vld [vmem:[%s1696 + $0x88] sm:$0xff]
    %v1715 = vld [vmem:[%s1696 + $0x90] sm:$0xff]
    %v1716 = vld [vmem:[%s1696 + $0x98] sm:$0xff]
    %v1717 = vld [vmem:[%s1696 + $0xa0] sm:$0xff]
    %v1718 = vld [vmem:[%s1696 + $0xa8] sm:$0xff]
    %v1719 = vld [vmem:[%s1696 + $0xb0] sm:$0xff]
    %v1720 = vld [vmem:[%s1696 + $0xb8] sm:$0xff]
    %v1745 = vunpack.c.l.b16 %v1697
    %v1746 = vunpack.c.h.b16 %v1697
    %v1747 = vunpack.c.l.b16 %v1698
    %v1748 = vunpack.c.h.b16 %v1698
    %v1749 = vunpack.c.l.b16 %v1699
    %v1750 = vunpack.c.h.b16 %v1699
    %v1751 = vunpack.c.l.b16 %v1700
    %v1752 = vunpack.c.h.b16 %v1700
    %v1753 = vunpack.c.l.b16 %v1701
    %v1754 = vunpack.c.h.b16 %v1701
    %v1755 = vunpack.c.l.b16 %v1702
    %v1756 = vunpack.c.h.b16 %v1702
    %v1757 = vunpack.c.l.b16 %v1703
    %v1758 = vunpack.c.h.b16 %v1703
    %v1759 = vunpack.c.l.b16 %v1704
    %v1760 = vunpack.c.h.b16 %v1704
    %v1761 = vunpack.c.l.b16 %v1705
    %v1762 = vunpack.c.h.b16 %v1705
    %v1763 = vunpack.c.l.b16 %v1706
    %v1764 = vunpack.c.h.b16 %v1706
    %v1765 = vunpack.c.l.b16 %v1707
    %v1766 = vunpack.c.h.b16 %v1707
    %v1767 = vunpack.c.l.b16 %v1708
    %v1768 = vunpack.c.h.b16 %v1708
    %v1769 = vunpack.c.l.b16 %v1709
    %v1770 = vunpack.c.h.b16 %v1709
    %v1771 = vunpack.c.l.b16 %v1710
    %v1772 = vunpack.c.h.b16 %v1710
    %v1773 = vunpack.c.l.b16 %v1711
    %v1774 = vunpack.c.h.b16 %v1711
    %v1775 = vunpack.c.l.b16 %v1712
    %v1776 = vunpack.c.h.b16 %v1712
    %v1777 = vunpack.c.l.b16 %v1713
    %v1778 = vunpack.c.h.b16 %v1713
    %v1779 = vunpack.c.l.b16 %v1714
    %v1780 = vunpack.c.h.b16 %v1714
    %v1781 = vunpack.c.l.b16 %v1715
    %v1782 = vunpack.c.h.b16 %v1715
    %v1783 = vunpack.c.l.b16 %v1716
    %v1784 = vunpack.c.h.b16 %v1716
    %v1785 = vunpack.c.l.b16 %v1717
    %v1786 = vunpack.c.h.b16 %v1717
    %v1787 = vunpack.c.l.b16 %v1718
    %v1788 = vunpack.c.h.b16 %v1718
    %v1789 = vunpack.c.l.b16 %v1719
    %v1790 = vunpack.c.h.b16 %v1719
    %v1791 = vunpack.c.l.b16 %v1720
    %v1792 = vunpack.c.h.b16 %v1720
    %v1793 = vpack.c.b16 %v1747, %v1745
    %v1794 = vpack.c.b16 %v1748, %v1746
    %v1795 = vpack.c.b16 %v1751, %v1749
    %v1796 = vpack.c.b16 %v1752, %v1750
    %v1797 = vpack.c.b16 %v1755, %v1753
    %v1798 = vpack.c.b16 %v1756, %v1754
    %v1799 = vpack.c.b16 %v1759, %v1757
    %v1800 = vpack.c.b16 %v1760, %v1758
    %v1801 = vpack.c.b16 %v1763, %v1761
    %v1802 = vpack.c.b16 %v1764, %v1762
    %v1803 = vpack.c.b16 %v1767, %v1765
    %v1804 = vpack.c.b16 %v1768, %v1766
    %v1805 = vpack.c.b16 %v1771, %v1769
    %v1806 = vpack.c.b16 %v1772, %v1770
    %v1807 = vpack.c.b16 %v1775, %v1773
    %v1808 = vpack.c.b16 %v1776, %v1774
    %v1809 = vpack.c.b16 %v1779, %v1777
    %v1810 = vpack.c.b16 %v1780, %v1778
    %v1811 = vpack.c.b16 %v1783, %v1781
    %v1812 = vpack.c.b16 %v1784, %v1782
    %v1813 = vpack.c.b16 %v1787, %v1785
    %v1814 = vpack.c.b16 %v1788, %v1786
    %v1815 = vpack.c.b16 %v1791, %v1789
    %v1816 = vpack.c.b16 %v1792, %v1790
    %v1842 = vsel %vm1414, %v1244, 0
    %1844 = vmatprep.subr.bf16.mxu0 %v1794
    %1845 = vmatpush1.bf16.msra.mxu0 %v1793
    %1846 = vmatprep.subr.bf16.mxu0 %v1796
    %1847 = vmatpush1.bf16.msra.mxu0 %v1795
    %1848 = vmatprep.subr.bf16.mxu0 %v1798
    %1849 = vmatpush1.bf16.msra.mxu0 %v1797
    %1850 = vmatprep.subr.bf16.mxu0 %v1800
    %1851 = vmatpush1.bf16.msra.mxu0 %v1799
    %1852 = vmatprep.subr.bf16.mxu0 %v1802
    %1853 = vmatpush1.bf16.msra.mxu0 %v1801
    %1854 = vmatprep.subr.bf16.mxu0 %v1804
    %1855 = vmatpush1.bf16.msra.mxu0 %v1803
    %1856 = vmatprep.subr.bf16.mxu0 %v1806
    %1857 = vmatpush1.bf16.msra.mxu0 %v1805
    %1858 = vmatprep.subr.bf16.mxu0 %v1808
    %1859 = vmatpush1.bf16.msra.mxu0 %v1807
    %1860 = vmatprep.subr.bf16.mxu0 %v1810
    %1861 = vmatpush1.bf16.msra.mxu0 %v1809
    %1862 = vmatprep.subr.bf16.mxu0 %v1812
    %1863 = vmatpush1.bf16.msra.mxu0 %v1811
    %1864 = vmatprep.subr.bf16.mxu0 %v1814
    %1865 = vmatpush1.bf16.msra.mxu0 %v1813
    %1866 = vmatprep.subr.bf16.mxu0 %v1816
    %1867 = vmatpush1.bf16.msra.mxu0 %v1815
    %1868 = vmatprep.subr.bf16.mxu0 0
    %1869 = vmatpush1.bf16.msra.mxu0 0
    %1870 = vmatprep.subr.bf16.mxu0 0
    %1871 = vmatpush1.bf16.msra.mxu0 0
    %1872 = vmatprep.subr.bf16.mxu0 0
    %1873 = vmatpush1.bf16.msra.mxu0 0
    %1874 = vmatprep.subr.bf16.mxu0 0
    %1875 = vmatpush1.bf16.msra.mxu0 0
    %1876 = vmatprep.mubr.bf16.mxu0 %v1419
    %1877 = vmatmul.mubr.bf16.gmra.mrb[0].mxu0 %v1237
    %v1878 = vpop.f32.mrb[0].mxu0
    %v1879 = vadd.f32 0.0, %v1878
    %v1880 = vpop.f32.mrb[0].mxu0
    %v1881 = vadd.f32 0.0, %v1880
    %v1882 = vpop.f32.mrb[0].mxu0
    %v1883 = vadd.f32 0.0, %v1882
    %v1884 = vpop.f32.mrb[0].mxu0
    %v1885 = vadd.f32 0.0, %v1884
    %1886 = vmatprep.mubr.bf16.mxu0 %v1422
    %1887 = vmatmul.mubr.bf16.gmra.mrb[0].mxu0 %v1239
    %v1888 = vpop.f32.mrb[0].mxu0
    %v1889 = vadd.f32 0.0, %v1888
    %v1890 = vpop.f32.mrb[0].mxu0
    %v1891 = vadd.f32 0.0, %v1890
    %v1892 = vpop.f32.mrb[0].mxu0
    %v1893 = vadd.f32 0.0, %v1892
    %v1894 = vpop.f32.mrb[0].mxu0
    %v1895 = vadd.f32 0.0, %v1894
    %1896 = vmatprep.mubr.bf16.mxu0 %v1425
    %1897 = vmatmul.mubr.bf16.gmra.mrb[0].mxu0 %v1241
    %v1898 = vpop.f32.mrb[0].mxu0
    %v1899 = vadd.f32 0.0, %v1898
    %v1900 = vpop.f32.mrb[0].mxu0
    %v1901 = vadd.f32 0.0, %v1900
    %v1902 = vpop.f32.mrb[0].mxu0
    %v1903 = vadd.f32 0.0, %v1902
    %v1904 = vpop.f32.mrb[0].mxu0
    %v1905 = vadd.f32 0.0, %v1904
    %1906 = vmatprep.mubr.bf16.mxu0 %v1842
    %1907 = vmatmul.mubr.bf16.gmra.mrb[0].mxu0 %v1243
    %v1908 = vpop.f32.mrb[0].mxu0
    %v1909 = vadd.f32 0.0, %v1908
    %v1910 = vpop.f32.mrb[0].mxu0
    %v1911 = vadd.f32 0.0, %v1910
    %v1912 = vpop.f32.mrb[0].mxu0
    %v1913 = vadd.f32 0.0, %v1912
    %v1914 = vpop.f32.mrb[0].mxu0
    %v1915 = vadd.f32 0.0, %v1914
    %1916 = vdwg.mxu0
    %v1917 = vadd.f32 %v1658, %v1879
    %v1918 = vadd.f32 %v1660, %v1881
    %v1919 = vadd.f32 %v1662, %v1883
    %v1920 = vadd.f32 %v1664, %v1885
    %v1921 = vadd.f32 %v1668, %v1889
    %v1922 = vadd.f32 %v1670, %v1891
    %v1923 = vadd.f32 %v1672, %v1893
    %v1924 = vadd.f32 %v1674, %v1895
    %v1925 = vadd.f32 %v1678, %v1899
    %v1926 = vadd.f32 %v1680, %v1901
    %v1927 = vadd.f32 %v1682, %v1903
    %v1928 = vadd.f32 %v1684, %v1905
    %v1929 = vadd.f32 %v1688, %v1909
    %v1930 = vadd.f32 %v1690, %v1911
    %v1931 = vadd.f32 %v1692, %v1913
    %v1932 = vadd.f32 %v1694, %v1915
    %v1933 = vld [vmem:[%s6] sm:$0x3]
    %v1935 = vlaneseq
    %v1936 = vshrl.u32 %v1935, 7
    %v1937 = vsub.s32 0, %v1936
    %v1938 = vrot.slane %v1933, %v1937
    %v1939 = vlaneseq
    %v1940 = vshrl.u32 %v1939, 7
    %v1941 = vsub.s32 1, %v1940
    %v1942 = vrot.slane %v1933, %v1941
    %v1945 = vadd.f32 %v1917, %v1938
    %v1946 = vadd.f32 %v1918, %v1942
    %v1947 = vadd.f32 %v1919, %v1938
    %v1948 = vadd.f32 %v1920, %v1942
    %v1949 = vadd.f32 %v1921, %v1938
    %v1950 = vadd.f32 %v1922, %v1942
    %v1951 = vadd.f32 %v1923, %v1938
    %v1952 = vadd.f32 %v1924, %v1942
    %v1953 = vadd.f32 %v1925, %v1938
    %v1954 = vadd.f32 %v1926, %v1942
    %v1955 = vadd.f32 %v1927, %v1938
    %v1956 = vadd.f32 %v1928, %v1942
    %v1957 = vadd.f32 %v1929, %v1938
    %v1958 = vadd.f32 %v1930, %v1942
    %v1959 = vadd.f32 %v1931, %v1938
    %v1960 = vadd.f32 %v1932, %v1942
    %v1961 = vmax.f32 %v1945, 0.0
    %v1962 = vmax.f32 %v1946, 0.0
    %v1963 = vmax.f32 %v1947, 0.0
    %v1964 = vmax.f32 %v1948, 0.0
    %v1965 = vmax.f32 %v1949, 0.0
    %v1966 = vmax.f32 %v1950, 0.0
    %v1967 = vmax.f32 %v1951, 0.0
    %v1968 = vmax.f32 %v1952, 0.0
    %v1969 = vmax.f32 %v1953, 0.0
    %v1970 = vmax.f32 %v1954, 0.0
    %v1971 = vmax.f32 %v1955, 0.0
    %v1972 = vmax.f32 %v1956, 0.0
    %v1973 = vmax.f32 %v1957, 0.0
    %v1974 = vmax.f32 %v1958, 0.0
    %v1975 = vmax.f32 %v1959, 0.0
    %v1976 = vmax.f32 %v1960, 0.0
    %v1977 = vpack.c.bf16 %v1963, %v1961
    %v1978 = vpack.c.bf16 %v1964, %v1962
    %v1979 = vpack.c.bf16 %v1967, %v1965
    %v1980 = vpack.c.bf16 %v1968, %v1966
    %v1981 = vpack.c.bf16 %v1971, %v1969
    %v1982 = vpack.c.bf16 %v1972, %v1970
    %v1983 = vpack.c.bf16 %v1975, %v1973
    %v1984 = vpack.c.bf16 %v1976, %v1974
    %v1985 = vld [vmem:[#allocation2] sm:$0xff]
    %v1986 = vld [vmem:[#allocation2 + $0x8] sm:$0xff]
    %v1987 = vld [vmem:[#allocation2 + $0x10] sm:$0xff]
    %v1988 = vld [vmem:[#allocation2 + $0x18] sm:$0xff]
    %v1989 = vld [vmem:[#allocation2 + $0x20] sm:$0xff]
    %v1990 = vld [vmem:[#allocation2 + $0x28] sm:$0xff]
    %v1991 = vld [vmem:[#allocation2 + $0x30] sm:$0xff]
    %v1992 = vld [vmem:[#allocation2 + $0x38] sm:$0xff]
    %v1993 = vld [vmem:[#allocation2 + $0x40] sm:$0xff]
    %v1994 = vld [vmem:[#allocation2 + $0x48] sm:$0xff]
    %v1995 = vld [vmem:[#allocation2 + $0x50] sm:$0xff]
    %v1996 = vld [vmem:[#allocation2 + $0x58] sm:$0xff]
    %v1997 = vld [vmem:[#allocation2 + $0x60] sm:$0xff]
    %v1998 = vld [vmem:[#allocation2 + $0x68] sm:$0xff]
    %v1999 = vld [vmem:[#allocation2 + $0x70] sm:$0xff]
    %v2000 = vld [vmem:[#allocation2 + $0x78] sm:$0xff]
    %v2001 = vld [vmem:[#allocation2 + $0x80] sm:$0xff]
    %v2002 = vld [vmem:[#allocation2 + $0x88] sm:$0xff]
    %v2003 = vld [vmem:[#allocation2 + $0x90] sm:$0xff]
    %v2004 = vld [vmem:[#allocation2 + $0x98] sm:$0xff]
    %v2005 = vld [vmem:[#allocation2 + $0xa0] sm:$0xff]
    %v2006 = vld [vmem:[#allocation2 + $0xa8] sm:$0xff]
    %v2007 = vld [vmem:[#allocation2 + $0xb0] sm:$0xff]
    %v2008 = vld [vmem:[#allocation2 + $0xb8] sm:$0xff]
    %v2009 = vld [vmem:[#allocation2 + $0xc0] sm:$0xff]
    %v2010 = vld [vmem:[#allocation2 + $0xc8] sm:$0xff]
    %v2011 = vld [vmem:[#allocation2 + $0xd0] sm:$0xff]
    %v2012 = vld [vmem:[#allocation2 + $0xd8] sm:$0xff]
    %v2013 = vld [vmem:[#allocation2 + $0xe0] sm:$0xff]
    %v2014 = vld [vmem:[#allocation2 + $0xe8] sm:$0xff]
    %v2015 = vld [vmem:[#allocation2 + $0xf0] sm:$0xff]
    %v2016 = vld [vmem:[#allocation2 + $0xf8] sm:$0xff]
    %v2017 = vld [vmem:[#allocation2 + $0x100] sm:$0xff]
    %v2018 = vld [vmem:[#allocation2 + $0x108] sm:$0xff]
    %v2019 = vld [vmem:[#allocation2 + $0x110] sm:$0xff]
    %v2020 = vld [vmem:[#allocation2 + $0x118] sm:$0xff]
    %v2021 = vld [vmem:[#allocation2 + $0x120] sm:$0xff]
    %v2022 = vld [vmem:[#allocation2 + $0x128] sm:$0xff]
    %v2023 = vld [vmem:[#allocation2 + $0x130] sm:$0xff]
    %v2024 = vld [vmem:[#allocation2 + $0x138] sm:$0xff]
    %v2025 = vld [vmem:[#allocation2 + $0x140] sm:$0xff]
    %v2026 = vld [vmem:[#allocation2 + $0x148] sm:$0xff]
    %v2027 = vld [vmem:[#allocation2 + $0x150] sm:$0xff]
    %v2028 = vld [vmem:[#allocation2 + $0x158] sm:$0xff]
    %v2029 = vld [vmem:[#allocation2 + $0x160] sm:$0xff]
    %v2030 = vld [vmem:[#allocation2 + $0x168] sm:$0xff]
    %v2031 = vld [vmem:[#allocation2 + $0x170] sm:$0xff]
    %v2032 = vld [vmem:[#allocation2 + $0x178] sm:$0xff]
    %v2033 = vld [vmem:[#allocation2 + $0x180] sm:$0xff]
    %v2034 = vld [vmem:[#allocation2 + $0x188] sm:$0xff]
    %v2035 = vld [vmem:[#allocation2 + $0x190] sm:$0xff]
    %v2036 = vld [vmem:[#allocation2 + $0x198] sm:$0xff]
    %v2037 = vld [vmem:[#allocation2 + $0x1a0] sm:$0xff]
    %v2038 = vld [vmem:[#allocation2 + $0x1a8] sm:$0xff]
    %v2039 = vld [vmem:[#allocation2 + $0x1b0] sm:$0xff]
    %v2040 = vld [vmem:[#allocation2 + $0x1b8] sm:$0xff]
    %v2041 = vld [vmem:[#allocation2 + $0x1c0] sm:$0xff]
    %v2042 = vld [vmem:[#allocation2 + $0x1c8] sm:$0xff]
    %v2043 = vld [vmem:[#allocation2 + $0x1d0] sm:$0xff]
    %v2044 = vld [vmem:[#allocation2 + $0x1d8] sm:$0xff]
    %v2045 = vld [vmem:[#allocation2 + $0x1e0] sm:$0xff]
    %v2046 = vld [vmem:[#allocation2 + $0x1e8] sm:$0xff]
    %v2047 = vld [vmem:[#allocation2 + $0x1f0] sm:$0xff]
    %v2048 = vld [vmem:[#allocation2 + $0x1f8] sm:$0xff]
    %s2049 = scalar_lea.vmem [#allocation2], 512
    %v2050 = vld [vmem:[%s2049] sm:$0xff]
    %v2051 = vld [vmem:[%s2049 + $0x8] sm:$0xff]
    %v2052 = vld [vmem:[%s2049 + $0x10] sm:$0xff]
    %v2053 = vld [vmem:[%s2049 + $0x18] sm:$0xff]
    %v2054 = vld [vmem:[%s2049 + $0x20] sm:$0xff]
    %v2055 = vld [vmem:[%s2049 + $0x28] sm:$0xff]
    %v2056 = vld [vmem:[%s2049 + $0x30] sm:$0xff]
    %v2057 = vld [vmem:[%s2049 + $0x38] sm:$0xff]
    %v2058 = vld [vmem:[%s2049 + $0x40] sm:$0xff]
    %v2059 = vld [vmem:[%s2049 + $0x48] sm:$0xff]
    %v2060 = vld [vmem:[%s2049 + $0x50] sm:$0xff]
    %v2061 = vld [vmem:[%s2049 + $0x58] sm:$0xff]
    %v2062 = vld [vmem:[%s2049 + $0x60] sm:$0xff]
    %v2063 = vld [vmem:[%s2049 + $0x68] sm:$0xff]
    %v2064 = vld [vmem:[%s2049 + $0x70] sm:$0xff]
    %v2065 = vld [vmem:[%s2049 + $0x78] sm:$0xff]
    %v2066 = vld [vmem:[%s2049 + $0x80] sm:$0xff]
    %v2067 = vld [vmem:[%s2049 + $0x88] sm:$0xff]
    %v2068 = vld [vmem:[%s2049 + $0x90] sm:$0xff]
    %v2069 = vld [vmem:[%s2049 + $0x98] sm:$0xff]
    %v2070 = vld [vmem:[%s2049 + $0xa0] sm:$0xff]
    %v2071 = vld [vmem:[%s2049 + $0xa8] sm:$0xff]
    %v2072 = vld [vmem:[%s2049 + $0xb0] sm:$0xff]
    %v2073 = vld [vmem:[%s2049 + $0xb8] sm:$0xff]
    %v2074 = vld [vmem:[%s2049 + $0xc0] sm:$0xff]
    %v2075 = vld [vmem:[%s2049 + $0xc8] sm:$0xff]
    %v2076 = vld [vmem:[%s2049 + $0xd0] sm:$0xff]
    %v2077 = vld [vmem:[%s2049 + $0xd8] sm:$0xff]
    %v2078 = vld [vmem:[%s2049 + $0xe0] sm:$0xff]
    %v2079 = vld [vmem:[%s2049 + $0xe8] sm:$0xff]
    %v2080 = vld [vmem:[%s2049 + $0xf0] sm:$0xff]
    %v2081 = vld [vmem:[%s2049 + $0xf8] sm:$0xff]
    %v2082 = vld [vmem:[%s2049 + $0x100] sm:$0xff]
    %v2083 = vld [vmem:[%s2049 + $0x108] sm:$0xff]
    %v2084 = vld [vmem:[%s2049 + $0x110] sm:$0xff]
    %v2085 = vld [vmem:[%s2049 + $0x118] sm:$0xff]
    %v2086 = vld [vmem:[%s2049 + $0x120] sm:$0xff]
    %v2087 = vld [vmem:[%s2049 + $0x128] sm:$0xff]
    %v2088 = vld [vmem:[%s2049 + $0x130] sm:$0xff]
    %v2089 = vld [vmem:[%s2049 + $0x138] sm:$0xff]
    %v2090 = vld [vmem:[%s2049 + $0x140] sm:$0xff]
    %v2091 = vld [vmem:[%s2049 + $0x148] sm:$0xff]
    %v2092 = vld [vmem:[%s2049 + $0x150] sm:$0xff]
    %v2093 = vld [vmem:[%s2049 + $0x158] sm:$0xff]
    %v2094 = vld [vmem:[%s2049 + $0x160] sm:$0xff]
    %v2095 = vld [vmem:[%s2049 + $0x168] sm:$0xff]
    %v2096 = vld [vmem:[%s2049 + $0x170] sm:$0xff]
    %v2097 = vld [vmem:[%s2049 + $0x178] sm:$0xff]
    %v2098 = vld [vmem:[%s2049 + $0x180] sm:$0xff]
    %v2099 = vld [vmem:[%s2049 + $0x188] sm:$0xff]
    %v2100 = vld [vmem:[%s2049 + $0x190] sm:$0xff]
    %v2101 = vld [vmem:[%s2049 + $0x198] sm:$0xff]
    %v2102 = vld [vmem:[%s2049 + $0x1a0] sm:$0xff]
    %v2103 = vld [vmem:[%s2049 + $0x1a8] sm:$0xff]
    %v2104 = vld [vmem:[%s2049 + $0x1b0] sm:$0xff]
    %v2105 = vld [vmem:[%s2049 + $0x1b8] sm:$0xff]
    %v2106 = vld [vmem:[%s2049 + $0x1c0] sm:$0xff]
    %v2107 = vld [vmem:[%s2049 + $0x1c8] sm:$0xff]
    %v2108 = vld [vmem:[%s2049 + $0x1d0] sm:$0xff]
    %v2109 = vld [vmem:[%s2049 + $0x1d8] sm:$0xff]
    %v2110 = vld [vmem:[%s2049 + $0x1e0] sm:$0xff]
    %v2111 = vld [vmem:[%s2049 + $0x1e8] sm:$0xff]
    %v2112 = vld [vmem:[%s2049 + $0x1f0] sm:$0xff]
    %v2113 = vld [vmem:[%s2049 + $0x1f8] sm:$0xff]
    %v2178 = vunpack.c.l.b16 %v2050
    %v2179 = vunpack.c.h.b16 %v2050
    %v2180 = vunpack.c.l.b16 %v2051
    %v2181 = vunpack.c.h.b16 %v2051
    %v2182 = vunpack.c.l.b16 %v2052
    %v2183 = vunpack.c.h.b16 %v2052
    %v2184 = vunpack.c.l.b16 %v2053
    %v2185 = vunpack.c.h.b16 %v2053
    %v2186 = vunpack.c.l.b16 %v2054
    %v2187 = vunpack.c.h.b16 %v2054
    %v2188 = vunpack.c.l.b16 %v2055
    %v2189 = vunpack.c.h.b16 %v2055
    %v2190 = vunpack.c.l.b16 %v2056
    %v2191 = vunpack.c.h.b16 %v2056
    %v2192 = vunpack.c.l.b16 %v2057
    %v2193 = vunpack.c.h.b16 %v2057
    %v2194 = vunpack.c.l.b16 %v2058
    %v2195 = vunpack.c.h.b16 %v2058
    %v2196 = vunpack.c.l.b16 %v2059
    %v2197 = vunpack.c.h.b16 %v2059
    %v2198 = vunpack.c.l.b16 %v2060
    %v2199 = vunpack.c.h.b16 %v2060
    %v2200 = vunpack.c.l.b16 %v2061
    %v2201 = vunpack.c.h.b16 %v2061
    %v2202 = vunpack.c.l.b16 %v2062
    %v2203 = vunpack.c.h.b16 %v2062
    %v2204 = vunpack.c.l.b16 %v2063
    %v2205 = vunpack.c.h.b16 %v2063
    %v2206 = vunpack.c.l.b16 %v2064
    %v2207 = vunpack.c.h.b16 %v2064
    %v2208 = vunpack.c.l.b16 %v2065
    %v2209 = vunpack.c.h.b16 %v2065
    %v2210 = vunpack.c.l.b16 %v2066
    %v2211 = vunpack.c.h.b16 %v2066
    %v2212 = vunpack.c.l.b16 %v2067
    %v2213 = vunpack.c.h.b16 %v2067
    %v2214 = vunpack.c.l.b16 %v2068
    %v2215 = vunpack.c.h.b16 %v2068
    %v2216 = vunpack.c.l.b16 %v2069
    %v2217 = vunpack.c.h.b16 %v2069
    %v2218 = vunpack.c.l.b16 %v2070
    %v2219 = vunpack.c.h.b16 %v2070
    %v2220 = vunpack.c.l.b16 %v2071
    %v2221 = vunpack.c.h.b16 %v2071
    %v2222 = vunpack.c.l.b16 %v2072
    %v2223 = vunpack.c.h.b16 %v2072
    %v2224 = vunpack.c.l.b16 %v2073
    %v2225 = vunpack.c.h.b16 %v2073
    %v2226 = vunpack.c.l.b16 %v2074
    %v2227 = vunpack.c.h.b16 %v2074
    %v2228 = vunpack.c.l.b16 %v2075
    %v2229 = vunpack.c.h.b16 %v2075
    %v2230 = vunpack.c.l.b16 %v2076
    %v2231 = vunpack.c.h.b16 %v2076
    %v2232 = vunpack.c.l.b16 %v2077
    %v2233 = vunpack.c.h.b16 %v2077
    %v2234 = vunpack.c.l.b16 %v2078
    %v2235 = vunpack.c.h.b16 %v2078
    %v2236 = vunpack.c.l.b16 %v2079
    %v2237 = vunpack.c.h.b16 %v2079
    %v2238 = vunpack.c.l.b16 %v2080
    %v2239 = vunpack.c.h.b16 %v2080
    %v2240 = vunpack.c.l.b16 %v2081
    %v2241 = vunpack.c.h.b16 %v2081
    %v2242 = vunpack.c.l.b16 %v2082
    %v2243 = vunpack.c.h.b16 %v2082
    %v2244 = vunpack.c.l.b16 %v2083
    %v2245 = vunpack.c.h.b16 %v2083
    %v2246 = vunpack.c.l.b16 %v2084
    %v2247 = vunpack.c.h.b16 %v2084
    %v2248 = vunpack.c.l.b16 %v2085
    %v2249 = vunpack.c.h.b16 %v2085
    %v2250 = vunpack.c.l.b16 %v2086
    %v2251 = vunpack.c.h.b16 %v2086
    %v2252 = vunpack.c.l.b16 %v2087
    %v2253 = vunpack.c.h.b16 %v2087
    %v2254 = vunpack.c.l.b16 %v2088
    %v2255 = vunpack.c.h.b16 %v2088
    %v2256 = vunpack.c.l.b16 %v2089
    %v2257 = vunpack.c.h.b16 %v2089
    %v2258 = vunpack.c.l.b16 %v2090
    %v2259 = vunpack.c.h.b16 %v2090
    %v2260 = vunpack.c.l.b16 %v2091
    %v2261 = vunpack.c.h.b16 %v2091
    %v2262 = vunpack.c.l.b16 %v2092
    %v2263 = vunpack.c.h.b16 %v2092
    %v2264 = vunpack.c.l.b16 %v2093
    %v2265 = vunpack.c.h.b16 %v2093
    %v2266 = vunpack.c.l.b16 %v2094
    %v2267 = vunpack.c.h.b16 %v2094
    %v2268 = vunpack.c.l.b16 %v2095
    %v2269 = vunpack.c.h.b16 %v2095
    %v2270 = vunpack.c.l.b16 %v2096
    %v2271 = vunpack.c.h.b16 %v2096
    %v2272 = vunpack.c.l.b16 %v2097
    %v2273 = vunpack.c.h.b16 %v2097
    %v2274 = vunpack.c.l.b16 %v2098
    %v2275 = vunpack.c.h.b16 %v2098
    %v2276 = vunpack.c.l.b16 %v2099
    %v2277 = vunpack.c.h.b16 %v2099
    %v2278 = vunpack.c.l.b16 %v2100
    %v2279 = vunpack.c.h.b16 %v2100
    %v2280 = vunpack.c.l.b16 %v2101
    %v2281 = vunpack.c.h.b16 %v2101
    %v2282 = vunpack.c.l.b16 %v2102
    %v2283 = vunpack.c.h.b16 %v2102
    %v2284 = vunpack.c.l.b16 %v2103
    %v2285 = vunpack.c.h.b16 %v2103
    %v2286 = vunpack.c.l.b16 %v2104
    %v2287 = vunpack.c.h.b16 %v2104
    %v2288 = vunpack.c.l.b16 %v2105
    %v2289 = vunpack.c.h.b16 %v2105
    %v2290 = vunpack.c.l.b16 %v2106
    %v2291 = vunpack.c.h.b16 %v2106
    %v2292 = vunpack.c.l.b16 %v2107
    %v2293 = vunpack.c.h.b16 %v2107
    %v2294 = vunpack.c.l.b16 %v2108
    %v2295 = vunpack.c.h.b16 %v2108
    %v2296 = vunpack.c.l.b16 %v2109
    %v2297 = vunpack.c.h.b16 %v2109
    %v2298 = vunpack.c.l.b16 %v2110
    %v2299 = vunpack.c.h.b16 %v2110
    %v2300 = vunpack.c.l.b16 %v2111
    %v2301 = vunpack.c.h.b16 %v2111
    %v2302 = vunpack.c.l.b16 %v2112
    %v2303 = vunpack.c.h.b16 %v2112
    %v2304 = vunpack.c.l.b16 %v2113
    %v2305 = vunpack.c.h.b16 %v2113
    %v2306 = vpack.c.b16 %v2182, %v2178
    %v2307 = vpack.c.b16 %v2183, %v2179
    %v2308 = vpack.c.b16 %v2184, %v2180
    %v2309 = vpack.c.b16 %v2185, %v2181
    %v2310 = vpack.c.b16 %v2190, %v2186
    %v2311 = vpack.c.b16 %v2191, %v2187
    %v2312 = vpack.c.b16 %v2192, %v2188
    %v2313 = vpack.c.b16 %v2193, %v2189
    %v2314 = vpack.c.b16 %v2198, %v2194
    %v2315 = vpack.c.b16 %v2199, %v2195
    %v2316 = vpack.c.b16 %v2200, %v2196
    %v2317 = vpack.c.b16 %v2201, %v2197
    %v2318 = vpack.c.b16 %v2206, %v2202
    %v2319 = vpack.c.b16 %v2207, %v2203
    %v2320 = vpack.c.b16 %v2208, %v2204
    %v2321 = vpack.c.b16 %v2209, %v2205
    %v2322 = vpack.c.b16 %v2214, %v2210
    %v2323 = vpack.c.b16 %v2215, %v2211
    %v2324 = vpack.c.b16 %v2216, %v2212
    %v2325 = vpack.c.b16 %v2217, %v2213
    %v2326 = vpack.c.b16 %v2222, %v2218
    %v2327 = vpack.c.b16 %v2223, %v2219
    %v2328 = vpack.c.b16 %v2224, %v2220
    %v2329 = vpack.c.b16 %v2225, %v2221
    %v2330 = vpack.c.b16 %v2230, %v2226
    %v2331 = vpack.c.b16 %v2231, %v2227
    %v2332 = vpack.c.b16 %v2232, %v2228
    %v2333 = vpack.c.b16 %v2233, %v2229
    %v2334 = vpack.c.b16 %v2238, %v2234
    %v2335 = vpack.c.b16 %v2239, %v2235
    %v2336 = vpack.c.b16 %v2240, %v2236
    %v2337 = vpack.c.b16 %v2241, %v2237
    %v2338 = vpack.c.b16 %v2246, %v2242
    %v2339 = vpack.c.b16 %v2247, %v2243
    %v2340 = vpack.c.b16 %v2248, %v2244
    %v2341 = vpack.c.b16 %v2249, %v2245
    %v2342 = vpack.c.b16 %v2254, %v2250
    %v2343 = vpack.c.b16 %v2255, %v2251
    %v2344 = vpack.c.b16 %v2256, %v2252
    %v2345 = vpack.c.b16 %v2257, %v2253
    %v2346 = vpack.c.b16 %v2262, %v2258
    %v2347 = vpack.c.b16 %v2263, %v2259
    %v2348 = vpack.c.b16 %v2264, %v2260
    %v2349 = vpack.c.b16 %v2265, %v2261
    %v2350 = vpack.c.b16 %v2270, %v2266
    %v2351 = vpack.c.b16 %v2271, %v2267
    %v2352 = vpack.c.b16 %v2272, %v2268
    %v2353 = vpack.c.b16 %v2273, %v2269
    %v2354 = vpack.c.b16 %v2278, %v2274
    %v2355 = vpack.c.b16 %v2279, %v2275
    %v2356 = vpack.c.b16 %v2280, %v2276
    %v2357 = vpack.c.b16 %v2281, %v2277
    %v2358 = vpack.c.b16 %v2286, %v2282
    %v2359 = vpack.c.b16 %v2287, %v2283
    %v2360 = vpack.c.b16 %v2288, %v2284
    %v2361 = vpack.c.b16 %v2289, %v2285
    %v2362 = vpack.c.b16 %v2294, %v2290
    %v2363 = vpack.c.b16 %v2295, %v2291
    %v2364 = vpack.c.b16 %v2296, %v2292
    %v2365 = vpack.c.b16 %v2297, %v2293
    %v2366 = vpack.c.b16 %v2302, %v2298
    %v2367 = vpack.c.b16 %v2303, %v2299
    %v2368 = vpack.c.b16 %v2304, %v2300
    %v2369 = vpack.c.b16 %v2305, %v2301
    %2434 = vmatprep.subr.bf16.mxu0 %v2307
    %2435 = vmatpush1.bf16.msra.mxu0 %v2306
    %2436 = vmatprep.subr.bf16.mxu0 %v2311
    %2437 = vmatpush1.bf16.msra.mxu0 %v2310
    %2438 = vmatprep.subr.bf16.mxu0 %v2315
    %2439 = vmatpush1.bf16.msra.mxu0 %v2314
    %2440 = vmatprep.subr.bf16.mxu0 %v2319
    %2441 = vmatpush1.bf16.msra.mxu0 %v2318
    %2442 = vmatprep.subr.bf16.mxu0 %v2323
    %2443 = vmatpush1.bf16.msra.mxu0 %v2322
    %2444 = vmatprep.subr.bf16.mxu0 %v2327
    %2445 = vmatpush1.bf16.msra.mxu0 %v2326
    %2446 = vmatprep.subr.bf16.mxu0 %v2331
    %2447 = vmatpush1.bf16.msra.mxu0 %v2330
    %2448 = vmatprep.subr.bf16.mxu0 %v2335
    %2449 = vmatpush1.bf16.msra.mxu0 %v2334
    %2450 = vmatprep.subr.bf16.mxu0 %v2339
    %2451 = vmatpush1.bf16.msra.mxu0 %v2338
    %2452 = vmatprep.subr.bf16.mxu0 %v2343
    %2453 = vmatpush1.bf16.msra.mxu0 %v2342
    %2454 = vmatprep.subr.bf16.mxu0 %v2347
    %2455 = vmatpush1.bf16.msra.mxu0 %v2346
    %2456 = vmatprep.subr.bf16.mxu0 %v2351
    %2457 = vmatpush1.bf16.msra.mxu0 %v2350
    %2458 = vmatprep.subr.bf16.mxu0 %v2355
    %2459 = vmatpush1.bf16.msra.mxu0 %v2354
    %2460 = vmatprep.subr.bf16.mxu0 %v2359
    %2461 = vmatpush1.bf16.msra.mxu0 %v2358
    %2462 = vmatprep.subr.bf16.mxu0 %v2363
    %2463 = vmatpush1.bf16.msra.mxu0 %v2362
    %2464 = vmatprep.subr.bf16.mxu0 %v2367
    %2465 = vmatpush1.bf16.msra.mxu0 %v2366
    %2466 = vmatprep.mubr.bf16.mxu0 %v1980
    %2467 = vmatmul.mubr.bf16.gmra.mrb[0].mxu0 %v1979
    %v2468 = vpop.f32.mrb[0].mxu0
    %v2469 = vadd.f32 0.0, %v2468
    %v2470 = vpop.f32.mrb[0].mxu0
    %v2471 = vadd.f32 0.0, %v2470
    %v2472 = vpop.f32.mrb[0].mxu0
    %v2473 = vadd.f32 0.0, %v2472
    %v2474 = vpop.f32.mrb[0].mxu0
    %v2475 = vadd.f32 0.0, %v2474
    %2476 = vdwg.mxu0
    %2477 = vmatprep.subr.bf16.mxu0 %v2309
    %2478 = vmatpush1.bf16.msra.mxu0 %v2308
    %2479 = vmatprep.subr.bf16.mxu0 %v2313
    %2480 = vmatpush1.bf16.msra.mxu0 %v2312
    %2481 = vmatprep.subr.bf16.mxu0 %v2317
    %2482 = vmatpush1.bf16.msra.mxu0 %v2316
    %2483 = vmatprep.subr.bf16.mxu0 %v2321
    %2484 = vmatpush1.bf16.msra.mxu0 %v2320
    %2485 = vmatprep.subr.bf16.mxu0 %v2325
    %2486 = vmatpush1.bf16.msra.mxu0 %v2324
    %2487 = vmatprep.subr.bf16.mxu0 %v2329
    %2488 = vmatpush1.bf16.msra.mxu0 %v2328
    %2489 = vmatprep.subr.bf16.mxu0 %v2333
    %2490 = vmatpush1.bf16.msra.mxu0 %v2332
    %2491 = vmatprep.subr.bf16.mxu0 %v2337
    %2492 = vmatpush1.bf16.msra.mxu0 %v2336
    %2493 = vmatprep.subr.bf16.mxu0 %v2341
    %2494 = vmatpush1.bf16.msra.mxu0 %v2340
    %2495 = vmatprep.subr.bf16.mxu0 %v2345
    %2496 = vmatpush1.bf16.msra.mxu0 %v2344
    %2497 = vmatprep.subr.bf16.mxu0 %v2349
    %2498 = vmatpush1.bf16.msra.mxu0 %v2348
    %2499 = vmatprep.subr.bf16.mxu0 %v2353
    %2500 = vmatpush1.bf16.msra.mxu0 %v2352
    %2501 = vmatprep.subr.bf16.mxu0 %v2357
    %2502 = vmatpush1.bf16.msra.mxu0 %v2356
    %2503 = vmatprep.subr.bf16.mxu0 %v2361
    %2504 = vmatpush1.bf16.msra.mxu0 %v2360
    %2505 = vmatprep.subr.bf16.mxu0 %v2365
    %2506 = vmatpush1.bf16.msra.mxu0 %v2364
    %2507 = vmatprep.subr.bf16.mxu0 %v2369
    %2508 = vmatpush1.bf16.msra.mxu0 %v2368
    %2509 = vmatprep.mubr.bf16.mxu0 %v1980
    %2510 = vmatmul.mubr.bf16.gmra.mrb[0].mxu0 %v1979
    %v2511 = vpop.f32.mrb[0].mxu0
    %v2512 = vadd.f32 0.0, %v2511
    %v2513 = vpop.f32.mrb[0].mxu0
    %v2514 = vadd.f32 0.0, %v2513
    %v2515 = vpop.f32.mrb[0].mxu0
    %v2516 = vadd.f32 0.0, %v2515
    %v2517 = vpop.f32.mrb[0].mxu0
    %v2518 = vadd.f32 0.0, %v2517
    %2519 = vdwg.mxu0
    %v2584 = vunpack.c.l.b16 %v1985
    %v2585 = vunpack.c.h.b16 %v1985
    %v2586 = vunpack.c.l.b16 %v1986
    %v2587 = vunpack.c.h.b16 %v1986
    %v2588 = vunpack.c.l.b16 %v1987
    %v2589 = vunpack.c.h.b16 %v1987
    %v2590 = vunpack.c.l.b16 %v1988
    %v2591 = vunpack.c.h.b16 %v1988
    %v2592 = vunpack.c.l.b16 %v1989
    %v2593 = vunpack.c.h.b16 %v1989
    %v2594 = vunpack.c.l.b16 %v1990
    %v2595 = vunpack.c.h.b16 %v1990
    %v2596 = vunpack.c.l.b16 %v1991
    %v2597 = vunpack.c.h.b16 %v1991
    %v2598 = vunpack.c.l.b16 %v1992
    %v2599 = vunpack.c.h.b16 %v1992
    %v2600 = vunpack.c.l.b16 %v1993
    %v2601 = vunpack.c.h.b16 %v1993
    %v2602 = vunpack.c.l.b16 %v1994
    %v2603 = vunpack.c.h.b16 %v1994
    %v2604 = vunpack.c.l.b16 %v1995
    %v2605 = vunpack.c.h.b16 %v1995
    %v2606 = vunpack.c.l.b16 %v1996
    %v2607 = vunpack.c.h.b16 %v1996
    %v2608 = vunpack.c.l.b16 %v1997
    %v2609 = vunpack.c.h.b16 %v1997
    %v2610 = vunpack.c.l.b16 %v1998
    %v2611 = vunpack.c.h.b16 %v1998
    %v2612 = vunpack.c.l.b16 %v1999
    %v2613 = vunpack.c.h.b16 %v1999
    %v2614 = vunpack.c.l.b16 %v2000
    %v2615 = vunpack.c.h.b16 %v2000
    %v2616 = vunpack.c.l.b16 %v2001
    %v2617 = vunpack.c.h.b16 %v2001
    %v2618 = vunpack.c.l.b16 %v2002
    %v2619 = vunpack.c.h.b16 %v2002
    %v2620 = vunpack.c.l.b16 %v2003
    %v2621 = vunpack.c.h.b16 %v2003
    %v2622 = vunpack.c.l.b16 %v2004
    %v2623 = vunpack.c.h.b16 %v2004
    %v2624 = vunpack.c.l.b16 %v2005
    %v2625 = vunpack.c.h.b16 %v2005
    %v2626 = vunpack.c.l.b16 %v2006
    %v2627 = vunpack.c.h.b16 %v2006
    %v2628 = vunpack.c.l.b16 %v2007
    %v2629 = vunpack.c.h.b16 %v2007
    %v2630 = vunpack.c.l.b16 %v2008
    %v2631 = vunpack.c.h.b16 %v2008
    %v2632 = vunpack.c.l.b16 %v2009
    %v2633 = vunpack.c.h.b16 %v2009
    %v2634 = vunpack.c.l.b16 %v2010
    %v2635 = vunpack.c.h.b16 %v2010
    %v2636 = vunpack.c.l.b16 %v2011
    %v2637 = vunpack.c.h.b16 %v2011
    %v2638 = vunpack.c.l.b16 %v2012
    %v2639 = vunpack.c.h.b16 %v2012
    %v2640 = vunpack.c.l.b16 %v2013
    %v2641 = vunpack.c.h.b16 %v2013
    %v2642 = vunpack.c.l.b16 %v2014
    %v2643 = vunpack.c.h.b16 %v2014
    %v2644 = vunpack.c.l.b16 %v2015
    %v2645 = vunpack.c.h.b16 %v2015
    %v2646 = vunpack.c.l.b16 %v2016
    %v2647 = vunpack.c.h.b16 %v2016
    %v2648 = vunpack.c.l.b16 %v2017
    %v2649 = vunpack.c.h.b16 %v2017
    %v2650 = vunpack.c.l.b16 %v2018
    %v2651 = vunpack.c.h.b16 %v2018
    %v2652 = vunpack.c.l.b16 %v2019
    %v2653 = vunpack.c.h.b16 %v2019
    %v2654 = vunpack.c.l.b16 %v2020
    %v2655 = vunpack.c.h.b16 %v2020
    %v2656 = vunpack.c.l.b16 %v2021
    %v2657 = vunpack.c.h.b16 %v2021
    %v2658 = vunpack.c.l.b16 %v2022
    %v2659 = vunpack.c.h.b16 %v2022
    %v2660 = vunpack.c.l.b16 %v2023
    %v2661 = vunpack.c.h.b16 %v2023
    %v2662 = vunpack.c.l.b16 %v2024
    %v2663 = vunpack.c.h.b16 %v2024
    %v2664 = vunpack.c.l.b16 %v2025
    %v2665 = vunpack.c.h.b16 %v2025
    %v2666 = vunpack.c.l.b16 %v2026
    %v2667 = vunpack.c.h.b16 %v2026
    %v2668 = vunpack.c.l.b16 %v2027
    %v2669 = vunpack.c.h.b16 %v2027
    %v2670 = vunpack.c.l.b16 %v2028
    %v2671 = vunpack.c.h.b16 %v2028
    %v2672 = vunpack.c.l.b16 %v2029
    %v2673 = vunpack.c.h.b16 %v2029
    %v2674 = vunpack.c.l.b16 %v2030
    %v2675 = vunpack.c.h.b16 %v2030
    %v2676 = vunpack.c.l.b16 %v2031
    %v2677 = vunpack.c.h.b16 %v2031
    %v2678 = vunpack.c.l.b16 %v2032
    %v2679 = vunpack.c.h.b16 %v2032
    %v2680 = vunpack.c.l.b16 %v2033
    %v2681 = vunpack.c.h.b16 %v2033
    %v2682 = vunpack.c.l.b16 %v2034
    %v2683 = vunpack.c.h.b16 %v2034
    %v2684 = vunpack.c.l.b16 %v2035
    %v2685 = vunpack.c.h.b16 %v2035
    %v2686 = vunpack.c.l.b16 %v2036
    %v2687 = vunpack.c.h.b16 %v2036
    %v2688 = vunpack.c.l.b16 %v2037
    %v2689 = vunpack.c.h.b16 %v2037
    %v2690 = vunpack.c.l.b16 %v2038
    %v2691 = vunpack.c.h.b16 %v2038
    %v2692 = vunpack.c.l.b16 %v2039
    %v2693 = vunpack.c.h.b16 %v2039
    %v2694 = vunpack.c.l.b16 %v2040
    %v2695 = vunpack.c.h.b16 %v2040
    %v2696 = vunpack.c.l.b16 %v2041
    %v2697 = vunpack.c.h.b16 %v2041
    %v2698 = vunpack.c.l.b16 %v2042
    %v2699 = vunpack.c.h.b16 %v2042
    %v2700 = vunpack.c.l.b16 %v2043
    %v2701 = vunpack.c.h.b16 %v2043
    %v2702 = vunpack.c.l.b16 %v2044
    %v2703 = vunpack.c.h.b16 %v2044
    %v2704 = vunpack.c.l.b16 %v2045
    %v2705 = vunpack.c.h.b16 %v2045
    %v2706 = vunpack.c.l.b16 %v2046
    %v2707 = vunpack.c.h.b16 %v2046
    %v2708 = vunpack.c.l.b16 %v2047
    %v2709 = vunpack.c.h.b16 %v2047
    %v2710 = vunpack.c.l.b16 %v2048
    %v2711 = vunpack.c.h.b16 %v2048
    %v2712 = vpack.c.b16 %v2588, %v2584
    %v2713 = vpack.c.b16 %v2589, %v2585
    %v2714 = vpack.c.b16 %v2590, %v2586
    %v2715 = vpack.c.b16 %v2591, %v2587
    %v2716 = vpack.c.b16 %v2596, %v2592
    %v2717 = vpack.c.b16 %v2597, %v2593
    %v2718 = vpack.c.b16 %v2598, %v2594
    %v2719 = vpack.c.b16 %v2599, %v2595
    %v2720 = vpack.c.b16 %v2604, %v2600
    %v2721 = vpack.c.b16 %v2605, %v2601
    %v2722 = vpack.c.b16 %v2606, %v2602
    %v2723 = vpack.c.b16 %v2607, %v2603
    %v2724 = vpack.c.b16 %v2612, %v2608
    %v2725 = vpack.c.b16 %v2613, %v2609
    %v2726 = vpack.c.b16 %v2614, %v2610
    %v2727 = vpack.c.b16 %v2615, %v2611
    %v2728 = vpack.c.b16 %v2620, %v2616
    %v2729 = vpack.c.b16 %v2621, %v2617
    %v2730 = vpack.c.b16 %v2622, %v2618
    %v2731 = vpack.c.b16 %v2623, %v2619
    %v2732 = vpack.c.b16 %v2628, %v2624
    %v2733 = vpack.c.b16 %v2629, %v2625
    %v2734 = vpack.c.b16 %v2630, %v2626
    %v2735 = vpack.c.b16 %v2631, %v2627
    %v2736 = vpack.c.b16 %v2636, %v2632
    %v2737 = vpack.c.b16 %v2637, %v2633
    %v2738 = vpack.c.b16 %v2638, %v2634
    %v2739 = vpack.c.b16 %v2639, %v2635
    %v2740 = vpack.c.b16 %v2644, %v2640
    %v2741 = vpack.c.b16 %v2645, %v2641
    %v2742 = vpack.c.b16 %v2646, %v2642
    %v2743 = vpack.c.b16 %v2647, %v2643
    %v2744 = vpack.c.b16 %v2652, %v2648
    %v2745 = vpack.c.b16 %v2653, %v2649
    %v2746 = vpack.c.b16 %v2654, %v2650
    %v2747 = vpack.c.b16 %v2655, %v2651
    %v2748 = vpack.c.b16 %v2660, %v2656
    %v2749 = vpack.c.b16 %v2661, %v2657
    %v2750 = vpack.c.b16 %v2662, %v2658
    %v2751 = vpack.c.b16 %v2663, %v2659
    %v2752 = vpack.c.b16 %v2668, %v2664
    %v2753 = vpack.c.b16 %v2669, %v2665
    %v2754 = vpack.c.b16 %v2670, %v2666
    %v2755 = vpack.c.b16 %v2671, %v2667
    %v2756 = vpack.c.b16 %v2676, %v2672
    %v2757 = vpack.c.b16 %v2677, %v2673
    %v2758 = vpack.c.b16 %v2678, %v2674
    %v2759 = vpack.c.b16 %v2679, %v2675
    %v2760 = vpack.c.b16 %v2684, %v2680
    %v2761 = vpack.c.b16 %v2685, %v2681
    %v2762 = vpack.c.b16 %v2686, %v2682
    %v2763 = vpack.c.b16 %v2687, %v2683
    %v2764 = vpack.c.b16 %v2692, %v2688
    %v2765 = vpack.c.b16 %v2693, %v2689
    %v2766 = vpack.c.b16 %v2694, %v2690
    %v2767 = vpack.c.b16 %v2695, %v2691
    %v2768 = vpack.c.b16 %v2700, %v2696
    %v2769 = vpack.c.b16 %v2701, %v2697
    %v2770 = vpack.c.b16 %v2702, %v2698
    %v2771 = vpack.c.b16 %v2703, %v2699
    %v2772 = vpack.c.b16 %v2708, %v2704
    %v2773 = vpack.c.b16 %v2709, %v2705
    %v2774 = vpack.c.b16 %v2710, %v2706
    %v2775 = vpack.c.b16 %v2711, %v2707
    %2840 = vmatprep.subr.bf16.mxu0 %v2713
    %2841 = vmatpush1.bf16.msra.mxu0 %v2712
    %2842 = vmatprep.subr.bf16.mxu0 %v2717
    %2843 = vmatpush1.bf16.msra.mxu0 %v2716
    %2844 = vmatprep.subr.bf16.mxu0 %v2721
    %2845 = vmatpush1.bf16.msra.mxu0 %v2720
    %2846 = vmatprep.subr.bf16.mxu0 %v2725
    %2847 = vmatpush1.bf16.msra.mxu0 %v2724
    %2848 = vmatprep.subr.bf16.mxu0 %v2729
    %2849 = vmatpush1.bf16.msra.mxu0 %v2728
    %2850 = vmatprep.subr.bf16.mxu0 %v2733
    %2851 = vmatpush1.bf16.msra.mxu0 %v2732
    %2852 = vmatprep.subr.bf16.mxu0 %v2737
    %2853 = vmatpush1.bf16.msra.mxu0 %v2736
    %2854 = vmatprep.subr.bf16.mxu0 %v2741
    %2855 = vmatpush1.bf16.msra.mxu0 %v2740
    %2856 = vmatprep.subr.bf16.mxu0 %v2745
    %2857 = vmatpush1.bf16.msra.mxu0 %v2744
    %2858 = vmatprep.subr.bf16.mxu0 %v2749
    %2859 = vmatpush1.bf16.msra.mxu0 %v2748
    %2860 = vmatprep.subr.bf16.mxu0 %v2753
    %2861 = vmatpush1.bf16.msra.mxu0 %v2752
    %2862 = vmatprep.subr.bf16.mxu0 %v2757
    %2863 = vmatpush1.bf16.msra.mxu0 %v2756
    %2864 = vmatprep.subr.bf16.mxu0 %v2761
    %2865 = vmatpush1.bf16.msra.mxu0 %v2760
    %2866 = vmatprep.subr.bf16.mxu0 %v2765
    %2867 = vmatpush1.bf16.msra.mxu0 %v2764
    %2868 = vmatprep.subr.bf16.mxu0 %v2769
    %2869 = vmatpush1.bf16.msra.mxu0 %v2768
    %2870 = vmatprep.subr.bf16.mxu0 %v2773
    %2871 = vmatpush1.bf16.msra.mxu0 %v2772
    %2872 = vmatprep.mubr.bf16.mxu0 %v1978
    %2873 = vmatmul.mubr.bf16.gmra.mrb[0].mxu0 %v1977
    %v2874 = vpop.f32.mrb[0].mxu0
    %v2875 = vadd.f32 %v2469, %v2874
    %v2876 = vpop.f32.mrb[0].mxu0
    %v2877 = vadd.f32 %v2471, %v2876
    %v2878 = vpop.f32.mrb[0].mxu0
    %v2879 = vadd.f32 %v2473, %v2878
    %v2880 = vpop.f32.mrb[0].mxu0
    %v2881 = vadd.f32 %v2475, %v2880
    %2882 = vdwg.mxu0
    %2883 = vmatprep.subr.bf16.mxu0 %v2715
    %2884 = vmatpush1.bf16.msra.mxu0 %v2714
    %2885 = vmatprep.subr.bf16.mxu0 %v2719
    %2886 = vmatpush1.bf16.msra.mxu0 %v2718
    %2887 = vmatprep.subr.bf16.mxu0 %v2723
    %2888 = vmatpush1.bf16.msra.mxu0 %v2722
    %2889 = vmatprep.subr.bf16.mxu0 %v2727
    %2890 = vmatpush1.bf16.msra.mxu0 %v2726
    %2891 = vmatprep.subr.bf16.mxu0 %v2731
    %2892 = vmatpush1.bf16.msra.mxu0 %v2730
    %2893 = vmatprep.subr.bf16.mxu0 %v2735
    %2894 = vmatpush1.bf16.msra.mxu0 %v2734
    %2895 = vmatprep.subr.bf16.mxu0 %v2739
    %2896 = vmatpush1.bf16.msra.mxu0 %v2738
    %2897 = vmatprep.subr.bf16.mxu0 %v2743
    %2898 = vmatpush1.bf16.msra.mxu0 %v2742
    %2899 = vmatprep.subr.bf16.mxu0 %v2747
    %2900 = vmatpush1.bf16.msra.mxu0 %v2746
    %2901 = vmatprep.subr.bf16.mxu0 %v2751
    %2902 = vmatpush1.bf16.msra.mxu0 %v2750
    %2903 = vmatprep.subr.bf16.mxu0 %v2755
    %2904 = vmatpush1.bf16.msra.mxu0 %v2754
    %2905 = vmatprep.subr.bf16.mxu0 %v2759
    %2906 = vmatpush1.bf16.msra.mxu0 %v2758
    %2907 = vmatprep.subr.bf16.mxu0 %v2763
    %2908 = vmatpush1.bf16.msra.mxu0 %v2762
    %2909 = vmatprep.subr.bf16.mxu0 %v2767
    %2910 = vmatpush1.bf16.msra.mxu0 %v2766
    %2911 = vmatprep.subr.bf16.mxu0 %v2771
    %2912 = vmatpush1.bf16.msra.mxu0 %v2770
    %2913 = vmatprep.subr.bf16.mxu0 %v2775
    %2914 = vmatpush1.bf16.msra.mxu0 %v2774
    %2915 = vmatprep.mubr.bf16.mxu0 %v1978
    %2916 = vmatmul.mubr.bf16.gmra.mrb[0].mxu0 %v1977
    %v2917 = vpop.f32.mrb[0].mxu0
    %v2918 = vadd.f32 %v2512, %v2917
    %v2919 = vpop.f32.mrb[0].mxu0
    %v2920 = vadd.f32 %v2514, %v2919
    %v2921 = vpop.f32.mrb[0].mxu0
    %v2922 = vadd.f32 %v2516, %v2921
    %v2923 = vpop.f32.mrb[0].mxu0
    %v2924 = vadd.f32 %v2518, %v2923
    %2925 = vdwg.mxu0
    %s2926 = scalar_lea.vmem [#allocation2], 1024
    %v2927 = vld [vmem:[%s2926] sm:$0xff]
    %v2928 = vld [vmem:[%s2926 + $0x8] sm:$0xff]
    %v2929 = vld [vmem:[%s2926 + $0x10] sm:$0xff]
    %v2930 = vld [vmem:[%s2926 + $0x18] sm:$0xff]
    %v2931 = vld [vmem:[%s2926 + $0x20] sm:$0xff]
    %v2932 = vld [vmem:[%s2926 + $0x28] sm:$0xff]
    %v2933 = vld [vmem:[%s2926 + $0x30] sm:$0xff]
    %v2934 = vld [vmem:[%s2926 + $0x38] sm:$0xff]
    %v2935 = vld [vmem:[%s2926 + $0x40] sm:$0xff]
    %v2936 = vld [vmem:[%s2926 + $0x48] sm:$0xff]
    %v2937 = vld [vmem:[%s2926 + $0x50] sm:$0xff]
    %v2938 = vld [vmem:[%s2926 + $0x58] sm:$0xff]
    %v2939 = vld [vmem:[%s2926 + $0x60] sm:$0xff]
    %v2940 = vld [vmem:[%s2926 + $0x68] sm:$0xff]
    %v2941 = vld [vmem:[%s2926 + $0x70] sm:$0xff]
    %v2942 = vld [vmem:[%s2926 + $0x78] sm:$0xff]
    %v2943 = vld [vmem:[%s2926 + $0x80] sm:$0xff]
    %v2944 = vld [vmem:[%s2926 + $0x88] sm:$0xff]
    %v2945 = vld [vmem:[%s2926 + $0x90] sm:$0xff]
    %v2946 = vld [vmem:[%s2926 + $0x98] sm:$0xff]
    %v2947 = vld [vmem:[%s2926 + $0xa0] sm:$0xff]
    %v2948 = vld [vmem:[%s2926 + $0xa8] sm:$0xff]
    %v2949 = vld [vmem:[%s2926 + $0xb0] sm:$0xff]
    %v2950 = vld [vmem:[%s2926 + $0xb8] sm:$0xff]
    %v2951 = vld [vmem:[%s2926 + $0xc0] sm:$0xff]
    %v2952 = vld [vmem:[%s2926 + $0xc8] sm:$0xff]
    %v2953 = vld [vmem:[%s2926 + $0xd0] sm:$0xff]
    %v2954 = vld [vmem:[%s2926 + $0xd8] sm:$0xff]
    %v2955 = vld [vmem:[%s2926 + $0xe0] sm:$0xff]
    %v2956 = vld [vmem:[%s2926 + $0xe8] sm:$0xff]
    %v2957 = vld [vmem:[%s2926 + $0xf0] sm:$0xff]
    %v2958 = vld [vmem:[%s2926 + $0xf8] sm:$0xff]
    %v2959 = vld [vmem:[%s2926 + $0x100] sm:$0xff]
    %v2960 = vld [vmem:[%s2926 + $0x108] sm:$0xff]
    %v2961 = vld [vmem:[%s2926 + $0x110] sm:$0xff]
    %v2962 = vld [vmem:[%s2926 + $0x118] sm:$0xff]
    %v2963 = vld [vmem:[%s2926 + $0x120] sm:$0xff]
    %v2964 = vld [vmem:[%s2926 + $0x128] sm:$0xff]
    %v2965 = vld [vmem:[%s2926 + $0x130] sm:$0xff]
    %v2966 = vld [vmem:[%s2926 + $0x138] sm:$0xff]
    %v2967 = vld [vmem:[%s2926 + $0x140] sm:$0xff]
    %v2968 = vld [vmem:[%s2926 + $0x148] sm:$0xff]
    %v2969 = vld [vmem:[%s2926 + $0x150] sm:$0xff]
    %v2970 = vld [vmem:[%s2926 + $0x158] sm:$0xff]
    %v2971 = vld [vmem:[%s2926 + $0x160] sm:$0xff]
    %v2972 = vld [vmem:[%s2926 + $0x168] sm:$0xff]
    %v2973 = vld [vmem:[%s2926 + $0x170] sm:$0xff]
    %v2974 = vld [vmem:[%s2926 + $0x178] sm:$0xff]
    %v2975 = vld [vmem:[%s2926 + $0x180] sm:$0xff]
    %v2976 = vld [vmem:[%s2926 + $0x188] sm:$0xff]
    %v2977 = vld [vmem:[%s2926 + $0x190] sm:$0xff]
    %v2978 = vld [vmem:[%s2926 + $0x198] sm:$0xff]
    %v2979 = vld [vmem:[%s2926 + $0x1a0] sm:$0xff]
    %v2980 = vld [vmem:[%s2926 + $0x1a8] sm:$0xff]
    %v2981 = vld [vmem:[%s2926 + $0x1b0] sm:$0xff]
    %v2982 = vld [vmem:[%s2926 + $0x1b8] sm:$0xff]
    %v2983 = vld [vmem:[%s2926 + $0x1c0] sm:$0xff]
    %v2984 = vld [vmem:[%s2926 + $0x1c8] sm:$0xff]
    %v2985 = vld [vmem:[%s2926 + $0x1d0] sm:$0xff]
    %v2986 = vld [vmem:[%s2926 + $0x1d8] sm:$0xff]
    %v2987 = vld [vmem:[%s2926 + $0x1e0] sm:$0xff]
    %v2988 = vld [vmem:[%s2926 + $0x1e8] sm:$0xff]
    %v2989 = vld [vmem:[%s2926 + $0x1f0] sm:$0xff]
    %v2990 = vld [vmem:[%s2926 + $0x1f8] sm:$0xff]
    %v3055 = vunpack.c.l.b16 %v2927
    %v3056 = vunpack.c.h.b16 %v2927
    %v3057 = vunpack.c.l.b16 %v2928
    %v3058 = vunpack.c.h.b16 %v2928
    %v3059 = vunpack.c.l.b16 %v2929
    %v3060 = vunpack.c.h.b16 %v2929
    %v3061 = vunpack.c.l.b16 %v2930
    %v3062 = vunpack.c.h.b16 %v2930
    %v3063 = vunpack.c.l.b16 %v2931
    %v3064 = vunpack.c.h.b16 %v2931
    %v3065 = vunpack.c.l.b16 %v2932
    %v3066 = vunpack.c.h.b16 %v2932
    %v3067 = vunpack.c.l.b16 %v2933
    %v3068 = vunpack.c.h.b16 %v2933
    %v3069 = vunpack.c.l.b16 %v2934
    %v3070 = vunpack.c.h.b16 %v2934
    %v3071 = vunpack.c.l.b16 %v2935
    %v3072 = vunpack.c.h.b16 %v2935
    %v3073 = vunpack.c.l.b16 %v2936
    %v3074 = vunpack.c.h.b16 %v2936
    %v3075 = vunpack.c.l.b16 %v2937
    %v3076 = vunpack.c.h.b16 %v2937
    %v3077 = vunpack.c.l.b16 %v2938
    %v3078 = vunpack.c.h.b16 %v2938
    %v3079 = vunpack.c.l.b16 %v2939
    %v3080 = vunpack.c.h.b16 %v2939
    %v3081 = vunpack.c.l.b16 %v2940
    %v3082 = vunpack.c.h.b16 %v2940
    %v3083 = vunpack.c.l.b16 %v2941
    %v3084 = vunpack.c.h.b16 %v2941
    %v3085 = vunpack.c.l.b16 %v2942
    %v3086 = vunpack.c.h.b16 %v2942
    %v3087 = vunpack.c.l.b16 %v2943
    %v3088 = vunpack.c.h.b16 %v2943
    %v3089 = vunpack.c.l.b16 %v2944
    %v3090 = vunpack.c.h.b16 %v2944
    %v3091 = vunpack.c.l.b16 %v2945
    %v3092 = vunpack.c.h.b16 %v2945
    %v3093 = vunpack.c.l.b16 %v2946
    %v3094 = vunpack.c.h.b16 %v2946
    %v3095 = vunpack.c.l.b16 %v2947
    %v3096 = vunpack.c.h.b16 %v2947
    %v3097 = vunpack.c.l.b16 %v2948
    %v3098 = vunpack.c.h.b16 %v2948
    %v3099 = vunpack.c.l.b16 %v2949
    %v3100 = vunpack.c.h.b16 %v2949
    %v3101 = vunpack.c.l.b16 %v2950
    %v3102 = vunpack.c.h.b16 %v2950
    %v3103 = vunpack.c.l.b16 %v2951
    %v3104 = vunpack.c.h.b16 %v2951
    %v3105 = vunpack.c.l.b16 %v2952
    %v3106 = vunpack.c.h.b16 %v2952
    %v3107 = vunpack.c.l.b16 %v2953
    %v3108 = vunpack.c.h.b16 %v2953
    %v3109 = vunpack.c.l.b16 %v2954
    %v3110 = vunpack.c.h.b16 %v2954
    %v3111 = vunpack.c.l.b16 %v2955
    %v3112 = vunpack.c.h.b16 %v2955
    %v3113 = vunpack.c.l.b16 %v2956
    %v3114 = vunpack.c.h.b16 %v2956
    %v3115 = vunpack.c.l.b16 %v2957
    %v3116 = vunpack.c.h.b16 %v2957
    %v3117 = vunpack.c.l.b16 %v2958
    %v3118 = vunpack.c.h.b16 %v2958
    %v3119 = vunpack.c.l.b16 %v2959
    %v3120 = vunpack.c.h.b16 %v2959
    %v3121 = vunpack.c.l.b16 %v2960
    %v3122 = vunpack.c.h.b16 %v2960
    %v3123 = vunpack.c.l.b16 %v2961
    %v3124 = vunpack.c.h.b16 %v2961
    %v3125 = vunpack.c.l.b16 %v2962
    %v3126 = vunpack.c.h.b16 %v2962
    %v3127 = vunpack.c.l.b16 %v2963
    %v3128 = vunpack.c.h.b16 %v2963
    %v3129 = vunpack.c.l.b16 %v2964
    %v3130 = vunpack.c.h.b16 %v2964
    %v3131 = vunpack.c.l.b16 %v2965
    %v3132 = vunpack.c.h.b16 %v2965
    %v3133 = vunpack.c.l.b16 %v2966
    %v3134 = vunpack.c.h.b16 %v2966
    %v3135 = vunpack.c.l.b16 %v2967
    %v3136 = vunpack.c.h.b16 %v2967
    %v3137 = vunpack.c.l.b16 %v2968
    %v3138 = vunpack.c.h.b16 %v2968
    %v3139 = vunpack.c.l.b16 %v2969
    %v3140 = vunpack.c.h.b16 %v2969
    %v3141 = vunpack.c.l.b16 %v2970
    %v3142 = vunpack.c.h.b16 %v2970
    %v3143 = vunpack.c.l.b16 %v2971
    %v3144 = vunpack.c.h.b16 %v2971
    %v3145 = vunpack.c.l.b16 %v2972
    %v3146 = vunpack.c.h.b16 %v2972
    %v3147 = vunpack.c.l.b16 %v2973
    %v3148 = vunpack.c.h.b16 %v2973
    %v3149 = vunpack.c.l.b16 %v2974
    %v3150 = vunpack.c.h.b16 %v2974
    %v3151 = vunpack.c.l.b16 %v2975
    %v3152 = vunpack.c.h.b16 %v2975
    %v3153 = vunpack.c.l.b16 %v2976
    %v3154 = vunpack.c.h.b16 %v2976
    %v3155 = vunpack.c.l.b16 %v2977
    %v3156 = vunpack.c.h.b16 %v2977
    %v3157 = vunpack.c.l.b16 %v2978
    %v3158 = vunpack.c.h.b16 %v2978
    %v3159 = vunpack.c.l.b16 %v2979
    %v3160 = vunpack.c.h.b16 %v2979
    %v3161 = vunpack.c.l.b16 %v2980
    %v3162 = vunpack.c.h.b16 %v2980
    %v3163 = vunpack.c.l.b16 %v2981
    %v3164 = vunpack.c.h.b16 %v2981
    %v3165 = vunpack.c.l.b16 %v2982
    %v3166 = vunpack.c.h.b16 %v2982
    %v3167 = vunpack.c.l.b16 %v2983
    %v3168 = vunpack.c.h.b16 %v2983
    %v3169 = vunpack.c.l.b16 %v2984
    %v3170 = vunpack.c.h.b16 %v2984
    %v3171 = vunpack.c.l.b16 %v2985
    %v3172 = vunpack.c.h.b16 %v2985
    %v3173 = vunpack.c.l.b16 %v2986
    %v3174 = vunpack.c.h.b16 %v2986
    %v3175 = vunpack.c.l.b16 %v2987
    %v3176 = vunpack.c.h.b16 %v2987
    %v3177 = vunpack.c.l.b16 %v2988
    %v3178 = vunpack.c.h.b16 %v2988
    %v3179 = vunpack.c.l.b16 %v2989
    %v3180 = vunpack.c.h.b16 %v2989
    %v3181 = vunpack.c.l.b16 %v2990
    %v3182 = vunpack.c.h.b16 %v2990
    %v3183 = vpack.c.b16 %v3059, %v3055
    %v3184 = vpack.c.b16 %v3060, %v3056
    %v3185 = vpack.c.b16 %v3061, %v3057
    %v3186 = vpack.c.b16 %v3062, %v3058
    %v3187 = vpack.c.b16 %v3067, %v3063
    %v3188 = vpack.c.b16 %v3068, %v3064
    %v3189 = vpack.c.b16 %v3069, %v3065
    %v3190 = vpack.c.b16 %v3070, %v3066
    %v3191 = vpack.c.b16 %v3075, %v3071
    %v3192 = vpack.c.b16 %v3076, %v3072
    %v3193 = vpack.c.b16 %v3077, %v3073
    %v3194 = vpack.c.b16 %v3078, %v3074
    %v3195 = vpack.c.b16 %v3083, %v3079
    %v3196 = vpack.c.b16 %v3084, %v3080
    %v3197 = vpack.c.b16 %v3085, %v3081
    %v3198 = vpack.c.b16 %v3086, %v3082
    %v3199 = vpack.c.b16 %v3091, %v3087
    %v3200 = vpack.c.b16 %v3092, %v3088
    %v3201 = vpack.c.b16 %v3093, %v3089
    %v3202 = vpack.c.b16 %v3094, %v3090
    %v3203 = vpack.c.b16 %v3099, %v3095
    %v3204 = vpack.c.b16 %v3100, %v3096
    %v3205 = vpack.c.b16 %v3101, %v3097
    %v3206 = vpack.c.b16 %v3102, %v3098
    %v3207 = vpack.c.b16 %v3107, %v3103
    %v3208 = vpack.c.b16 %v3108, %v3104
    %v3209 = vpack.c.b16 %v3109, %v3105
    %v3210 = vpack.c.b16 %v3110, %v3106
    %v3211 = vpack.c.b16 %v3115, %v3111
    %v3212 = vpack.c.b16 %v3116, %v3112
    %v3213 = vpack.c.b16 %v3117, %v3113
    %v3214 = vpack.c.b16 %v3118, %v3114
    %v3215 = vpack.c.b16 %v3123, %v3119
    %v3216 = vpack.c.b16 %v3124, %v3120
    %v3217 = vpack.c.b16 %v3125, %v3121
    %v3218 = vpack.c.b16 %v3126, %v3122
    %v3219 = vpack.c.b16 %v3131, %v3127
    %v3220 = vpack.c.b16 %v3132, %v3128
    %v3221 = vpack.c.b16 %v3133, %v3129
    %v3222 = vpack.c.b16 %v3134, %v3130
    %v3223 = vpack.c.b16 %v3139, %v3135
    %v3224 = vpack.c.b16 %v3140, %v3136
    %v3225 = vpack.c.b16 %v3141, %v3137
    %v3226 = vpack.c.b16 %v3142, %v3138
    %v3227 = vpack.c.b16 %v3147, %v3143
    %v3228 = vpack.c.b16 %v3148, %v3144
    %v3229 = vpack.c.b16 %v3149, %v3145
    %v3230 = vpack.c.b16 %v3150, %v3146
    %v3231 = vpack.c.b16 %v3155, %v3151
    %v3232 = vpack.c.b16 %v3156, %v3152
    %v3233 = vpack.c.b16 %v3157, %v3153
    %v3234 = vpack.c.b16 %v3158, %v3154
    %v3235 = vpack.c.b16 %v3163, %v3159
    %v3236 = vpack.c.b16 %v3164, %v3160
    %v3237 = vpack.c.b16 %v3165, %v3161
    %v3238 = vpack.c.b16 %v3166, %v3162
    %v3239 = vpack.c.b16 %v3171, %v3167
    %v3240 = vpack.c.b16 %v3172, %v3168
    %v3241 = vpack.c.b16 %v3173, %v3169
    %v3242 = vpack.c.b16 %v3174, %v3170
    %v3243 = vpack.c.b16 %v3179, %v3175
    %v3244 = vpack.c.b16 %v3180, %v3176
    %v3245 = vpack.c.b16 %v3181, %v3177
    %v3246 = vpack.c.b16 %v3182, %v3178
    %3311 = vmatprep.subr.bf16.mxu0 %v3184
    %3312 = vmatpush1.bf16.msra.mxu0 %v3183
    %3313 = vmatprep.subr.bf16.mxu0 %v3188
    %3314 = vmatpush1.bf16.msra.mxu0 %v3187
    %3315 = vmatprep.subr.bf16.mxu0 %v3192
    %3316 = vmatpush1.bf16.msra.mxu0 %v3191
    %3317 = vmatprep.subr.bf16.mxu0 %v3196
    %3318 = vmatpush1.bf16.msra.mxu0 %v3195
    %3319 = vmatprep.subr.bf16.mxu0 %v3200
    %3320 = vmatpush1.bf16.msra.mxu0 %v3199
    %3321 = vmatprep.subr.bf16.mxu0 %v3204
    %3322 = vmatpush1.bf16.msra.mxu0 %v3203
    %3323 = vmatprep.subr.bf16.mxu0 %v3208
    %3324 = vmatpush1.bf16.msra.mxu0 %v3207
    %3325 = vmatprep.subr.bf16.mxu0 %v3212
    %3326 = vmatpush1.bf16.msra.mxu0 %v3211
    %3327 = vmatprep.subr.bf16.mxu0 %v3216
    %3328 = vmatpush1.bf16.msra.mxu0 %v3215
    %3329 = vmatprep.subr.bf16.mxu0 %v3220
    %3330 = vmatpush1.bf16.msra.mxu0 %v3219
    %3331 = vmatprep.subr.bf16.mxu0 %v3224
    %3332 = vmatpush1.bf16.msra.mxu0 %v3223
    %3333 = vmatprep.subr.bf16.mxu0 %v3228
    %3334 = vmatpush1.bf16.msra.mxu0 %v3227
    %3335 = vmatprep.subr.bf16.mxu0 %v3232
    %3336 = vmatpush1.bf16.msra.mxu0 %v3231
    %3337 = vmatprep.subr.bf16.mxu0 %v3236
    %3338 = vmatpush1.bf16.msra.mxu0 %v3235
    %3339 = vmatprep.subr.bf16.mxu0 %v3240
    %3340 = vmatpush1.bf16.msra.mxu0 %v3239
    %3341 = vmatprep.subr.bf16.mxu0 %v3244
    %3342 = vmatpush1.bf16.msra.mxu0 %v3243
    %3343 = vmatprep.mubr.bf16.mxu0 %v1982
    %3344 = vmatmul.mubr.bf16.gmra.mrb[0].mxu0 %v1981
    %v3345 = vpop.f32.mrb[0].mxu0
    %v3346 = vadd.f32 0.0, %v3345
    %v3347 = vpop.f32.mrb[0].mxu0
    %v3348 = vadd.f32 0.0, %v3347
    %v3349 = vpop.f32.mrb[0].mxu0
    %v3350 = vadd.f32 0.0, %v3349
    %v3351 = vpop.f32.mrb[0].mxu0
    %v3352 = vadd.f32 0.0, %v3351
    %3353 = vdwg.mxu0
    %3354 = vmatprep.subr.bf16.mxu0 %v3186
    %3355 = vmatpush1.bf16.msra.mxu0 %v3185
    %3356 = vmatprep.subr.bf16.mxu0 %v3190
    %3357 = vmatpush1.bf16.msra.mxu0 %v3189
    %3358 = vmatprep.subr.bf16.mxu0 %v3194
    %3359 = vmatpush1.bf16.msra.mxu0 %v3193
    %3360 = vmatprep.subr.bf16.mxu0 %v3198
    %3361 = vmatpush1.bf16.msra.mxu0 %v3197
    %3362 = vmatprep.subr.bf16.mxu0 %v3202
    %3363 = vmatpush1.bf16.msra.mxu0 %v3201
    %3364 = vmatprep.subr.bf16.mxu0 %v3206
    %3365 = vmatpush1.bf16.msra.mxu0 %v3205
    %3366 = vmatprep.subr.bf16.mxu0 %v3210
    %3367 = vmatpush1.bf16.msra.mxu0 %v3209
    %3368 = vmatprep.subr.bf16.mxu0 %v3214
    %3369 = vmatpush1.bf16.msra.mxu0 %v3213
    %3370 = vmatprep.subr.bf16.mxu0 %v3218
    %3371 = vmatpush1.bf16.msra.mxu0 %v3217
    %3372 = vmatprep.subr.bf16.mxu0 %v3222
    %3373 = vmatpush1.bf16.msra.mxu0 %v3221
    %3374 = vmatprep.subr.bf16.mxu0 %v3226
    %3375 = vmatpush1.bf16.msra.mxu0 %v3225
    %3376 = vmatprep.subr.bf16.mxu0 %v3230
    %3377 = vmatpush1.bf16.msra.mxu0 %v3229
    %3378 = vmatprep.subr.bf16.mxu0 %v3234
    %3379 = vmatpush1.bf16.msra.mxu0 %v3233
    %3380 = vmatprep.subr.bf16.mxu0 %v3238
    %3381 = vmatpush1.bf16.msra.mxu0 %v3237
    %3382 = vmatprep.subr.bf16.mxu0 %v3242
    %3383 = vmatpush1.bf16.msra.mxu0 %v3241
    %3384 = vmatprep.subr.bf16.mxu0 %v3246
    %3385 = vmatpush1.bf16.msra.mxu0 %v3245
    %3386 = vmatprep.mubr.bf16.mxu0 %v1982
    %3387 = vmatmul.mubr.bf16.gmra.mrb[0].mxu0 %v1981
    %v3388 = vpop.f32.mrb[0].mxu0
    %v3389 = vadd.f32 0.0, %v3388
    %v3390 = vpop.f32.mrb[0].mxu0
    %v3391 = vadd.f32 0.0, %v3390
    %v3392 = vpop.f32.mrb[0].mxu0
    %v3393 = vadd.f32 0.0, %v3392
    %v3394 = vpop.f32.mrb[0].mxu0
    %v3395 = vadd.f32 0.0, %v3394
    %3396 = vdwg.mxu0
    %v3397 = vadd.f32 %v2875, %v3346
    %v3398 = vadd.f32 %v2877, %v3348
    %v3399 = vadd.f32 %v2918, %v3389
    %v3400 = vadd.f32 %v2920, %v3391
    %v3401 = vadd.f32 %v2879, %v3350
    %v3402 = vadd.f32 %v2881, %v3352
    %v3403 = vadd.f32 %v2922, %v3393
    %v3404 = vadd.f32 %v2924, %v3395
    %s3405 = scalar_lea.vmem [#allocation2], 1536
    %v3406 = vld [vmem:[%s3405] sm:$0xff]
    %v3407 = vld [vmem:[%s3405 + $0x8] sm:$0xff]
    %v3408 = vld [vmem:[%s3405 + $0x10] sm:$0xff]
    %v3409 = vld [vmem:[%s3405 + $0x18] sm:$0xff]
    %v3410 = vld [vmem:[%s3405 + $0x20] sm:$0xff]
    %v3411 = vld [vmem:[%s3405 + $0x28] sm:$0xff]
    %v3412 = vld [vmem:[%s3405 + $0x30] sm:$0xff]
    %v3413 = vld [vmem:[%s3405 + $0x38] sm:$0xff]
    %v3414 = vld [vmem:[%s3405 + $0x40] sm:$0xff]
    %v3415 = vld [vmem:[%s3405 + $0x48] sm:$0xff]
    %v3416 = vld [vmem:[%s3405 + $0x50] sm:$0xff]
    %v3417 = vld [vmem:[%s3405 + $0x58] sm:$0xff]
    %v3418 = vld [vmem:[%s3405 + $0x60] sm:$0xff]
    %v3419 = vld [vmem:[%s3405 + $0x68] sm:$0xff]
    %v3420 = vld [vmem:[%s3405 + $0x70] sm:$0xff]
    %v3421 = vld [vmem:[%s3405 + $0x78] sm:$0xff]
    %v3422 = vld [vmem:[%s3405 + $0x80] sm:$0xff]
    %v3423 = vld [vmem:[%s3405 + $0x88] sm:$0xff]
    %v3424 = vld [vmem:[%s3405 + $0x90] sm:$0xff]
    %v3425 = vld [vmem:[%s3405 + $0x98] sm:$0xff]
    %v3426 = vld [vmem:[%s3405 + $0xa0] sm:$0xff]
    %v3427 = vld [vmem:[%s3405 + $0xa8] sm:$0xff]
    %v3428 = vld [vmem:[%s3405 + $0xb0] sm:$0xff]
    %v3429 = vld [vmem:[%s3405 + $0xb8] sm:$0xff]
    %v3430 = vld [vmem:[%s3405 + $0xc0] sm:$0xff]
    %v3431 = vld [vmem:[%s3405 + $0xc8] sm:$0xff]
    %v3432 = vld [vmem:[%s3405 + $0xd0] sm:$0xff]
    %v3433 = vld [vmem:[%s3405 + $0xd8] sm:$0xff]
    %v3434 = vld [vmem:[%s3405 + $0xe0] sm:$0xff]
    %v3435 = vld [vmem:[%s3405 + $0xe8] sm:$0xff]
    %v3436 = vld [vmem:[%s3405 + $0xf0] sm:$0xff]
    %v3437 = vld [vmem:[%s3405 + $0xf8] sm:$0xff]
    %v3438 = vld [vmem:[%s3405 + $0x100] sm:$0xff]
    %v3439 = vld [vmem:[%s3405 + $0x108] sm:$0xff]
    %v3440 = vld [vmem:[%s3405 + $0x110] sm:$0xff]
    %v3441 = vld [vmem:[%s3405 + $0x118] sm:$0xff]
    %v3442 = vld [vmem:[%s3405 + $0x120] sm:$0xff]
    %v3443 = vld [vmem:[%s3405 + $0x128] sm:$0xff]
    %v3444 = vld [vmem:[%s3405 + $0x130] sm:$0xff]
    %v3445 = vld [vmem:[%s3405 + $0x138] sm:$0xff]
    %v3446 = vld [vmem:[%s3405 + $0x140] sm:$0xff]
    %v3447 = vld [vmem:[%s3405 + $0x148] sm:$0xff]
    %v3448 = vld [vmem:[%s3405 + $0x150] sm:$0xff]
    %v3449 = vld [vmem:[%s3405 + $0x158] sm:$0xff]
    %v3450 = vld [vmem:[%s3405 + $0x160] sm:$0xff]
    %v3451 = vld [vmem:[%s3405 + $0x168] sm:$0xff]
    %v3452 = vld [vmem:[%s3405 + $0x170] sm:$0xff]
    %v3453 = vld [vmem:[%s3405 + $0x178] sm:$0xff]
    %v3454 = vld [vmem:[%s3405 + $0x180] sm:$0xff]
    %v3455 = vld [vmem:[%s3405 + $0x188] sm:$0xff]
    %v3456 = vld [vmem:[%s3405 + $0x190] sm:$0xff]
    %v3457 = vld [vmem:[%s3405 + $0x198] sm:$0xff]
    %v3458 = vld [vmem:[%s3405 + $0x1a0] sm:$0xff]
    %v3459 = vld [vmem:[%s3405 + $0x1a8] sm:$0xff]
    %v3460 = vld [vmem:[%s3405 + $0x1b0] sm:$0xff]
    %v3461 = vld [vmem:[%s3405 + $0x1b8] sm:$0xff]
    %v3462 = vld [vmem:[%s3405 + $0x1c0] sm:$0xff]
    %v3463 = vld [vmem:[%s3405 + $0x1c8] sm:$0xff]
    %v3464 = vld [vmem:[%s3405 + $0x1d0] sm:$0xff]
    %v3465 = vld [vmem:[%s3405 + $0x1d8] sm:$0xff]
    %v3466 = vld [vmem:[%s3405 + $0x1e0] sm:$0xff]
    %v3467 = vld [vmem:[%s3405 + $0x1e8] sm:$0xff]
    %v3468 = vld [vmem:[%s3405 + $0x1f0] sm:$0xff]
    %v3469 = vld [vmem:[%s3405 + $0x1f8] sm:$0xff]
    %v3534 = vunpack.c.l.b16 %v3406
    %v3535 = vunpack.c.h.b16 %v3406
    %v3536 = vunpack.c.l.b16 %v3407
    %v3537 = vunpack.c.h.b16 %v3407
    %v3538 = vunpack.c.l.b16 %v3408
    %v3539 = vunpack.c.h.b16 %v3408
    %v3540 = vunpack.c.l.b16 %v3409
    %v3541 = vunpack.c.h.b16 %v3409
    %v3542 = vunpack.c.l.b16 %v3410
    %v3543 = vunpack.c.h.b16 %v3410
    %v3544 = vunpack.c.l.b16 %v3411
    %v3545 = vunpack.c.h.b16 %v3411
    %v3546 = vunpack.c.l.b16 %v3412
    %v3547 = vunpack.c.h.b16 %v3412
    %v3548 = vunpack.c.l.b16 %v3413
    %v3549 = vunpack.c.h.b16 %v3413
    %v3550 = vunpack.c.l.b16 %v3414
    %v3551 = vunpack.c.h.b16 %v3414
    %v3552 = vunpack.c.l.b16 %v3415
    %v3553 = vunpack.c.h.b16 %v3415
    %v3554 = vunpack.c.l.b16 %v3416
    %v3555 = vunpack.c.h.b16 %v3416
    %v3556 = vunpack.c.l.b16 %v3417
    %v3557 = vunpack.c.h.b16 %v3417
    %v3558 = vunpack.c.l.b16 %v3418
    %v3559 = vunpack.c.h.b16 %v3418
    %v3560 = vunpack.c.l.b16 %v3419
    %v3561 = vunpack.c.h.b16 %v3419
    %v3562 = vunpack.c.l.b16 %v3420
    %v3563 = vunpack.c.h.b16 %v3420
    %v3564 = vunpack.c.l.b16 %v3421
    %v3565 = vunpack.c.h.b16 %v3421
    %v3566 = vunpack.c.l.b16 %v3422
    %v3567 = vunpack.c.h.b16 %v3422
    %v3568 = vunpack.c.l.b16 %v3423
    %v3569 = vunpack.c.h.b16 %v3423
    %v3570 = vunpack.c.l.b16 %v3424
    %v3571 = vunpack.c.h.b16 %v3424
    %v3572 = vunpack.c.l.b16 %v3425
    %v3573 = vunpack.c.h.b16 %v3425
    %v3574 = vunpack.c.l.b16 %v3426
    %v3575 = vunpack.c.h.b16 %v3426
    %v3576 = vunpack.c.l.b16 %v3427
    %v3577 = vunpack.c.h.b16 %v3427
    %v3578 = vunpack.c.l.b16 %v3428
    %v3579 = vunpack.c.h.b16 %v3428
    %v3580 = vunpack.c.l.b16 %v3429
    %v3581 = vunpack.c.h.b16 %v3429
    %v3582 = vunpack.c.l.b16 %v3430
    %v3583 = vunpack.c.h.b16 %v3430
    %v3584 = vunpack.c.l.b16 %v3431
    %v3585 = vunpack.c.h.b16 %v3431
    %v3586 = vunpack.c.l.b16 %v3432
    %v3587 = vunpack.c.h.b16 %v3432
    %v3588 = vunpack.c.l.b16 %v3433
    %v3589 = vunpack.c.h.b16 %v3433
    %v3590 = vunpack.c.l.b16 %v3434
    %v3591 = vunpack.c.h.b16 %v3434
    %v3592 = vunpack.c.l.b16 %v3435
    %v3593 = vunpack.c.h.b16 %v3435
    %v3594 = vunpack.c.l.b16 %v3436
    %v3595 = vunpack.c.h.b16 %v3436
    %v3596 = vunpack.c.l.b16 %v3437
    %v3597 = vunpack.c.h.b16 %v3437
    %v3598 = vunpack.c.l.b16 %v3438
    %v3599 = vunpack.c.h.b16 %v3438
    %v3600 = vunpack.c.l.b16 %v3439
    %v3601 = vunpack.c.h.b16 %v3439
    %v3602 = vunpack.c.l.b16 %v3440
    %v3603 = vunpack.c.h.b16 %v3440
    %v3604 = vunpack.c.l.b16 %v3441
    %v3605 = vunpack.c.h.b16 %v3441
    %v3606 = vunpack.c.l.b16 %v3442
    %v3607 = vunpack.c.h.b16 %v3442
    %v3608 = vunpack.c.l.b16 %v3443
    %v3609 = vunpack.c.h.b16 %v3443
    %v3610 = vunpack.c.l.b16 %v3444
    %v3611 = vunpack.c.h.b16 %v3444
    %v3612 = vunpack.c.l.b16 %v3445
    %v3613 = vunpack.c.h.b16 %v3445
    %v3614 = vunpack.c.l.b16 %v3446
    %v3615 = vunpack.c.h.b16 %v3446
    %v3616 = vunpack.c.l.b16 %v3447
    %v3617 = vunpack.c.h.b16 %v3447
    %v3618 = vunpack.c.l.b16 %v3448
    %v3619 = vunpack.c.h.b16 %v3448
    %v3620 = vunpack.c.l.b16 %v3449
    %v3621 = vunpack.c.h.b16 %v3449
    %v3622 = vunpack.c.l.b16 %v3450
    %v3623 = vunpack.c.h.b16 %v3450
    %v3624 = vunpack.c.l.b16 %v3451
    %v3625 = vunpack.c.h.b16 %v3451
    %v3626 = vunpack.c.l.b16 %v3452
    %v3627 = vunpack.c.h.b16 %v3452
    %v3628 = vunpack.c.l.b16 %v3453
    %v3629 = vunpack.c.h.b16 %v3453
    %v3630 = vunpack.c.l.b16 %v3454
    %v3631 = vunpack.c.h.b16 %v3454
    %v3632 = vunpack.c.l.b16 %v3455
    %v3633 = vunpack.c.h.b16 %v3455
    %v3634 = vunpack.c.l.b16 %v3456
    %v3635 = vunpack.c.h.b16 %v3456
    %v3636 = vunpack.c.l.b16 %v3457
    %v3637 = vunpack.c.h.b16 %v3457
    %v3638 = vunpack.c.l.b16 %v3458
    %v3639 = vunpack.c.h.b16 %v3458
    %v3640 = vunpack.c.l.b16 %v3459
    %v3641 = vunpack.c.h.b16 %v3459
    %v3642 = vunpack.c.l.b16 %v3460
    %v3643 = vunpack.c.h.b16 %v3460
    %v3644 = vunpack.c.l.b16 %v3461
    %v3645 = vunpack.c.h.b16 %v3461
    %v3646 = vunpack.c.l.b16 %v3462
    %v3647 = vunpack.c.h.b16 %v3462
    %v3648 = vunpack.c.l.b16 %v3463
    %v3649 = vunpack.c.h.b16 %v3463
    %v3650 = vunpack.c.l.b16 %v3464
    %v3651 = vunpack.c.h.b16 %v3464
    %v3652 = vunpack.c.l.b16 %v3465
    %v3653 = vunpack.c.h.b16 %v3465
    %v3654 = vunpack.c.l.b16 %v3466
    %v3655 = vunpack.c.h.b16 %v3466
    %v3656 = vunpack.c.l.b16 %v3467
    %v3657 = vunpack.c.h.b16 %v3467
    %v3658 = vunpack.c.l.b16 %v3468
    %v3659 = vunpack.c.h.b16 %v3468
    %v3660 = vunpack.c.l.b16 %v3469
    %v3661 = vunpack.c.h.b16 %v3469
    %v3662 = vpack.c.b16 %v3538, %v3534
    %v3663 = vpack.c.b16 %v3539, %v3535
    %v3664 = vpack.c.b16 %v3540, %v3536
    %v3665 = vpack.c.b16 %v3541, %v3537
    %v3666 = vpack.c.b16 %v3546, %v3542
    %v3667 = vpack.c.b16 %v3547, %v3543
    %v3668 = vpack.c.b16 %v3548, %v3544
    %v3669 = vpack.c.b16 %v3549, %v3545
    %v3670 = vpack.c.b16 %v3554, %v3550
    %v3671 = vpack.c.b16 %v3555, %v3551
    %v3672 = vpack.c.b16 %v3556, %v3552
    %v3673 = vpack.c.b16 %v3557, %v3553
    %v3674 = vpack.c.b16 %v3562, %v3558
    %v3675 = vpack.c.b16 %v3563, %v3559
    %v3676 = vpack.c.b16 %v3564, %v3560
    %v3677 = vpack.c.b16 %v3565, %v3561
    %v3678 = vpack.c.b16 %v3570, %v3566
    %v3679 = vpack.c.b16 %v3571, %v3567
    %v3680 = vpack.c.b16 %v3572, %v3568
    %v3681 = vpack.c.b16 %v3573, %v3569
    %v3682 = vpack.c.b16 %v3578, %v3574
    %v3683 = vpack.c.b16 %v3579, %v3575
    %v3684 = vpack.c.b16 %v3580, %v3576
    %v3685 = vpack.c.b16 %v3581, %v3577
    %v3686 = vpack.c.b16 %v3586, %v3582
    %v3687 = vpack.c.b16 %v3587, %v3583
    %v3688 = vpack.c.b16 %v3588, %v3584
    %v3689 = vpack.c.b16 %v3589, %v3585
    %v3690 = vpack.c.b16 %v3594, %v3590
    %v3691 = vpack.c.b16 %v3595, %v3591
    %v3692 = vpack.c.b16 %v3596, %v3592
    %v3693 = vpack.c.b16 %v3597, %v3593
    %v3694 = vpack.c.b16 %v3602, %v3598
    %v3695 = vpack.c.b16 %v3603, %v3599
    %v3696 = vpack.c.b16 %v3604, %v3600
    %v3697 = vpack.c.b16 %v3605, %v3601
    %v3698 = vpack.c.b16 %v3610, %v3606
    %v3699 = vpack.c.b16 %v3611, %v3607
    %v3700 = vpack.c.b16 %v3612, %v3608
    %v3701 = vpack.c.b16 %v3613, %v3609
    %v3702 = vpack.c.b16 %v3618, %v3614
    %v3703 = vpack.c.b16 %v3619, %v3615
    %v3704 = vpack.c.b16 %v3620, %v3616
    %v3705 = vpack.c.b16 %v3621, %v3617
    %v3706 = vpack.c.b16 %v3626, %v3622
    %v3707 = vpack.c.b16 %v3627, %v3623
    %v3708 = vpack.c.b16 %v3628, %v3624
    %v3709 = vpack.c.b16 %v3629, %v3625
    %v3710 = vpack.c.b16 %v3634, %v3630
    %v3711 = vpack.c.b16 %v3635, %v3631
    %v3712 = vpack.c.b16 %v3636, %v3632
    %v3713 = vpack.c.b16 %v3637, %v3633
    %v3714 = vpack.c.b16 %v3642, %v3638
    %v3715 = vpack.c.b16 %v3643, %v3639
    %v3716 = vpack.c.b16 %v3644, %v3640
    %v3717 = vpack.c.b16 %v3645, %v3641
    %v3718 = vpack.c.b16 %v3650, %v3646
    %v3719 = vpack.c.b16 %v3651, %v3647
    %v3720 = vpack.c.b16 %v3652, %v3648
    %v3721 = vpack.c.b16 %v3653, %v3649
    %v3722 = vpack.c.b16 %v3658, %v3654
    %v3723 = vpack.c.b16 %v3659, %v3655
    %v3724 = vpack.c.b16 %v3660, %v3656
    %v3725 = vpack.c.b16 %v3661, %v3657
    %3790 = vmatprep.subr.bf16.mxu0 %v3663
    %3791 = vmatpush1.bf16.msra.mxu0 %v3662
    %3792 = vmatprep.subr.bf16.mxu0 %v3667
    %3793 = vmatpush1.bf16.msra.mxu0 %v3666
    %3794 = vmatprep.subr.bf16.mxu0 %v3671
    %3795 = vmatpush1.bf16.msra.mxu0 %v3670
    %3796 = vmatprep.subr.bf16.mxu0 %v3675
    %3797 = vmatpush1.bf16.msra.mxu0 %v3674
    %3798 = vmatprep.subr.bf16.mxu0 %v3679
    %3799 = vmatpush1.bf16.msra.mxu0 %v3678
    %3800 = vmatprep.subr.bf16.mxu0 %v3683
    %3801 = vmatpush1.bf16.msra.mxu0 %v3682
    %3802 = vmatprep.subr.bf16.mxu0 %v3687
    %3803 = vmatpush1.bf16.msra.mxu0 %v3686
    %3804 = vmatprep.subr.bf16.mxu0 %v3691
    %3805 = vmatpush1.bf16.msra.mxu0 %v3690
    %3806 = vmatprep.subr.bf16.mxu0 %v3695
    %3807 = vmatpush1.bf16.msra.mxu0 %v3694
    %3808 = vmatprep.subr.bf16.mxu0 %v3699
    %3809 = vmatpush1.bf16.msra.mxu0 %v3698
    %3810 = vmatprep.subr.bf16.mxu0 %v3703
    %3811 = vmatpush1.bf16.msra.mxu0 %v3702
    %3812 = vmatprep.subr.bf16.mxu0 %v3707
    %3813 = vmatpush1.bf16.msra.mxu0 %v3706
    %3814 = vmatprep.subr.bf16.mxu0 %v3711
    %3815 = vmatpush1.bf16.msra.mxu0 %v3710
    %3816 = vmatprep.subr.bf16.mxu0 %v3715
    %3817 = vmatpush1.bf16.msra.mxu0 %v3714
    %3818 = vmatprep.subr.bf16.mxu0 %v3719
    %3819 = vmatpush1.bf16.msra.mxu0 %v3718
    %3820 = vmatprep.subr.bf16.mxu0 %v3723
    %3821 = vmatpush1.bf16.msra.mxu0 %v3722
    %3822 = vmatprep.mubr.bf16.mxu0 %v1984
    %3823 = vmatmul.mubr.bf16.gmra.mrb[0].mxu0 %v1983
    %v3824 = vpop.f32.mrb[0].mxu0
    %v3825 = vadd.f32 0.0, %v3824
    %v3826 = vpop.f32.mrb[0].mxu0
    %v3827 = vadd.f32 0.0, %v3826
    %v3828 = vpop.f32.mrb[0].mxu0
    %v3829 = vadd.f32 0.0, %v3828
    %v3830 = vpop.f32.mrb[0].mxu0
    %v3831 = vadd.f32 0.0, %v3830
    %3832 = vdwg.mxu0
    %3833 = vmatprep.subr.bf16.mxu0 %v3665
    %3834 = vmatpush1.bf16.msra.mxu0 %v3664
    %3835 = vmatprep.subr.bf16.mxu0 %v3669
    %3836 = vmatpush1.bf16.msra.mxu0 %v3668
    %3837 = vmatprep.subr.bf16.mxu0 %v3673
    %3838 = vmatpush1.bf16.msra.mxu0 %v3672
    %3839 = vmatprep.subr.bf16.mxu0 %v3677
    %3840 = vmatpush1.bf16.msra.mxu0 %v3676
    %3841 = vmatprep.subr.bf16.mxu0 %v3681
    %3842 = vmatpush1.bf16.msra.mxu0 %v3680
    %3843 = vmatprep.subr.bf16.mxu0 %v3685
    %3844 = vmatpush1.bf16.msra.mxu0 %v3684
    %3845 = vmatprep.subr.bf16.mxu0 %v3689
    %3846 = vmatpush1.bf16.msra.mxu0 %v3688
    %3847 = vmatprep.subr.bf16.mxu0 %v3693
    %3848 = vmatpush1.bf16.msra.mxu0 %v3692
    %3849 = vmatprep.subr.bf16.mxu0 %v3697
    %3850 = vmatpush1.bf16.msra.mxu0 %v3696
    %3851 = vmatprep.subr.bf16.mxu0 %v3701
    %3852 = vmatpush1.bf16.msra.mxu0 %v3700
    %3853 = vmatprep.subr.bf16.mxu0 %v3705
    %3854 = vmatpush1.bf16.msra.mxu0 %v3704
    %3855 = vmatprep.subr.bf16.mxu0 %v3709
    %3856 = vmatpush1.bf16.msra.mxu0 %v3708
    %3857 = vmatprep.subr.bf16.mxu0 %v3713
    %3858 = vmatpush1.bf16.msra.mxu0 %v3712
    %3859 = vmatprep.subr.bf16.mxu0 %v3717
    %3860 = vmatpush1.bf16.msra.mxu0 %v3716
    %3861 = vmatprep.subr.bf16.mxu0 %v3721
    %3862 = vmatpush1.bf16.msra.mxu0 %v3720
    %3863 = vmatprep.subr.bf16.mxu0 %v3725
    %3864 = vmatpush1.bf16.msra.mxu0 %v3724
    %3865 = vmatprep.mubr.bf16.mxu0 %v1984
    %3866 = vmatmul.mubr.bf16.gmra.mrb[0].mxu0 %v1983
    %v3867 = vpop.f32.mrb[0].mxu0
    %v3868 = vadd.f32 0.0, %v3867
    %v3869 = vpop.f32.mrb[0].mxu0
    %v3870 = vadd.f32 0.0, %v3869
    %v3871 = vpop.f32.mrb[0].mxu0
    %v3872 = vadd.f32 0.0, %v3871
    %v3873 = vpop.f32.mrb[0].mxu0
    %v3874 = vadd.f32 0.0, %v3873
    %3875 = vdwg.mxu0
    %v3876 = vadd.f32 %v3397, %v3825
    %v3877 = vadd.f32 %v3398, %v3827
    %v3878 = vadd.f32 %v3399, %v3868
    %v3879 = vadd.f32 %v3400, %v3870
    %v3880 = vadd.f32 %v3401, %v3829
    %v3881 = vadd.f32 %v3402, %v3831
    %v3882 = vadd.f32 %v3403, %v3872
    %v3883 = vadd.f32 %v3404, %v3874
    %v3884 = vld [vmem:[%s8] sm:$0xf]
    %v3886 = vlaneseq
    %v3887 = vshrl.u32 %v3886, 7
    %v3888 = vsub.s32 0, %v3887
    %v3889 = vrot.slane %v3884, %v3888
    %v3890 = vlaneseq
    %v3891 = vshrl.u32 %v3890, 7
    %v3892 = vsub.s32 1, %v3891
    %v3893 = vrot.slane %v3884, %v3892
    %v3894 = vlaneseq
    %v3895 = vshrl.u32 %v3894, 7
    %v3896 = vsub.s32 2, %v3895
    %v3897 = vrot.slane %v3884, %v3896
    %v3898 = vlaneseq
    %v3899 = vshrl.u32 %v3898, 7
    %v3900 = vsub.s32 3, %v3899
    %v3901 = vrot.slane %v3884, %v3900
    %v3906 = vadd.f32 %v3876, %v3889
    %v3907 = vadd.f32 %v3877, %v3893
    %v3908 = vadd.f32 %v3878, %v3897
    %v3909 = vadd.f32 %v3879, %v3901
    %v3910 = vadd.f32 %v3880, %v3889
    %v3911 = vadd.f32 %v3881, %v3893
    %v3912 = vadd.f32 %v3882, %v3897
    %v3913 = vadd.f32 %v3883, %v3901
    %v3914 = vmax.f32 %v3906, 0.0
    %v3915 = vmax.f32 %v3907, 0.0
    %v3916 = vmax.f32 %v3908, 0.0
    %v3917 = vmax.f32 %v3909, 0.0
    %v3918 = vmax.f32 %v3910, 0.0
    %v3919 = vmax.f32 %v3911, 0.0
    %v3920 = vmax.f32 %v3912, 0.0
    %v3921 = vmax.f32 %v3913, 0.0
    %v3922 = vpack.c.bf16 %v3918, %v3914
    %v3923 = vpack.c.bf16 %v3919, %v3915
    %v3924 = vpack.c.bf16 %v3920, %v3916
    %v3925 = vpack.c.bf16 %v3921, %v3917
    %v3926 = vld [vmem:[%s9] sm:$0xf]
    %v3927 = vld [vmem:[%s9 + $0x4] sm:$0xf]
    %v3928 = vld [vmem:[%s9 + $0x8] sm:$0xf]
    %v3929 = vld [vmem:[%s9 + $0xc] sm:$0xf]
    %v3930 = vld [vmem:[%s9 + $0x10] sm:$0xf]
    %v3931 = vld [vmem:[%s9 + $0x14] sm:$0xf]
    %v3932 = vld [vmem:[%s9 + $0x18] sm:$0xf]
    %v3933 = vld [vmem:[%s9 + $0x1c] sm:$0xf]
    %v3934 = vld [vmem:[%s9 + $0x20] sm:$0xf]
    %v3935 = vld [vmem:[%s9 + $0x24] sm:$0xf]
    %v3936 = vld [vmem:[%s9 + $0x28] sm:$0xf]
    %v3937 = vld [vmem:[%s9 + $0x2c] sm:$0xf]
    %v3938 = vld [vmem:[%s9 + $0x30] sm:$0xf]
    %v3939 = vld [vmem:[%s9 + $0x34] sm:$0xf]
    %v3940 = vld [vmem:[%s9 + $0x38] sm:$0xf]
    %v3941 = vld [vmem:[%s9 + $0x3c] sm:$0xf]
    %v3942 = vld [vmem:[%s9 + $0x40] sm:$0xf]
    %v3943 = vld [vmem:[%s9 + $0x44] sm:$0xf]
    %v3944 = vld [vmem:[%s9 + $0x48] sm:$0xf]
    %v3945 = vld [vmem:[%s9 + $0x4c] sm:$0xf]
    %v3946 = vld [vmem:[%s9 + $0x50] sm:$0xf]
    %v3947 = vld [vmem:[%s9 + $0x54] sm:$0xf]
    %v3948 = vld [vmem:[%s9 + $0x58] sm:$0xf]
    %v3949 = vld [vmem:[%s9 + $0x5c] sm:$0xf]
    %v3950 = vld [vmem:[%s9 + $0x60] sm:$0xf]
    %v3951 = vld [vmem:[%s9 + $0x64] sm:$0xf]
    %v3952 = vld [vmem:[%s9 + $0x68] sm:$0xf]
    %v3953 = vld [vmem:[%s9 + $0x6c] sm:$0xf]
    %v3954 = vld [vmem:[%s9 + $0x70] sm:$0xf]
    %v3955 = vld [vmem:[%s9 + $0x74] sm:$0xf]
    %v3956 = vld [vmem:[%s9 + $0x78] sm:$0xf]
    %v3957 = vld [vmem:[%s9 + $0x7c] sm:$0xf]
    %v3958 = vld [vmem:[%s9 + $0x80] sm:$0xf]
    %v3959 = vld [vmem:[%s9 + $0x84] sm:$0xf]
    %v3960 = vld [vmem:[%s9 + $0x88] sm:$0xf]
    %v3961 = vld [vmem:[%s9 + $0x8c] sm:$0xf]
    %v3962 = vld [vmem:[%s9 + $0x90] sm:$0xf]
    %v3963 = vld [vmem:[%s9 + $0x94] sm:$0xf]
    %v3964 = vld [vmem:[%s9 + $0x98] sm:$0xf]
    %v3965 = vld [vmem:[%s9 + $0x9c] sm:$0xf]
    %v3966 = vld [vmem:[%s9 + $0xa0] sm:$0xf]
    %v3967 = vld [vmem:[%s9 + $0xa4] sm:$0xf]
    %v3968 = vld [vmem:[%s9 + $0xa8] sm:$0xf]
    %v3969 = vld [vmem:[%s9 + $0xac] sm:$0xf]
    %v3970 = vld [vmem:[%s9 + $0xb0] sm:$0xf]
    %v3971 = vld [vmem:[%s9 + $0xb4] sm:$0xf]
    %v3972 = vld [vmem:[%s9 + $0xb8] sm:$0xf]
    %v3973 = vld [vmem:[%s9 + $0xbc] sm:$0xf]
    %v3974 = vld [vmem:[%s9 + $0xc0] sm:$0xf]
    %v3975 = vld [vmem:[%s9 + $0xc4] sm:$0xf]
    %v3976 = vld [vmem:[%s9 + $0xc8] sm:$0xf]
    %v3977 = vld [vmem:[%s9 + $0xcc] sm:$0xf]
    %v3978 = vld [vmem:[%s9 + $0xd0] sm:$0xf]
    %v3979 = vld [vmem:[%s9 + $0xd4] sm:$0xf]
    %v3980 = vld [vmem:[%s9 + $0xd8] sm:$0xf]
    %v3981 = vld [vmem:[%s9 + $0xdc] sm:$0xf]
    %v3982 = vld [vmem:[%s9 + $0xe0] sm:$0xf]
    %v3983 = vld [vmem:[%s9 + $0xe4] sm:$0xf]
    %v3984 = vld [vmem:[%s9 + $0xe8] sm:$0xf]
    %v3985 = vld [vmem:[%s9 + $0xec] sm:$0xf]
    %v3986 = vld [vmem:[%s9 + $0xf0] sm:$0xf]
    %v3987 = vld [vmem:[%s9 + $0xf4] sm:$0xf]
    %v3988 = vld [vmem:[%s9 + $0xf8] sm:$0xf]
    %v3989 = vld [vmem:[%s9 + $0xfc] sm:$0xf]
    %v3990 = vld [vmem:[%s10] sm:$0x1]
    %v3992 = vlaneseq
    %v3993 = vshrl.u32 %v3992, 7
    %v3994 = vsub.s32 0, %v3993
    %v3995 = vrot.slane %v3990, %v3994
    %v4061 = vunpack.c.l.b16 %v3926
    %v4062 = vunpack.c.l.b16 %v3927
    %v4063 = vunpack.c.l.b16 %v3928
    %v4064 = vunpack.c.l.b16 %v3929
    %v4065 = vunpack.c.l.b16 %v3930
    %v4066 = vunpack.c.l.b16 %v3931
    %v4067 = vunpack.c.l.b16 %v3932
    %v4068 = vunpack.c.l.b16 %v3933
    %v4069 = vunpack.c.l.b16 %v3934
    %v4070 = vunpack.c.l.b16 %v3935
    %v4071 = vunpack.c.l.b16 %v3936
    %v4072 = vunpack.c.l.b16 %v3937
    %v4073 = vunpack.c.l.b16 %v3938
    %v4074 = vunpack.c.l.b16 %v3939
    %v4075 = vunpack.c.l.b16 %v3940
    %v4076 = vunpack.c.l.b16 %v3941
    %v4077 = vunpack.c.l.b16 %v3942
    %v4078 = vunpack.c.l.b16 %v3943
    %v4079 = vunpack.c.l.b16 %v3944
    %v4080 = vunpack.c.l.b16 %v3945
    %v4081 = vunpack.c.l.b16 %v3946
    %v4082 = vunpack.c.l.b16 %v3947
    %v4083 = vunpack.c.l.b16 %v3948
    %v4084 = vunpack.c.l.b16 %v3949
    %v4085 = vunpack.c.l.b16 %v3950
    %v4086 = vunpack.c.l.b16 %v3951
    %v4087 = vunpack.c.l.b16 %v3952
    %v4088 = vunpack.c.l.b16 %v3953
    %v4089 = vunpack.c.l.b16 %v3954
    %v4090 = vunpack.c.l.b16 %v3955
    %v4091 = vunpack.c.l.b16 %v3956
    %v4092 = vunpack.c.l.b16 %v3957
    %v4093 = vunpack.c.l.b16 %v3958
    %v4094 = vunpack.c.l.b16 %v3959
    %v4095 = vunpack.c.l.b16 %v3960
    %v4096 = vunpack.c.l.b16 %v3961
    %v4097 = vunpack.c.l.b16 %v3962
    %v4098 = vunpack.c.l.b16 %v3963
    %v4099 = vunpack.c.l.b16 %v3964
    %v4100 = vunpack.c.l.b16 %v3965
    %v4101 = vunpack.c.l.b16 %v3966
    %v4102 = vunpack.c.l.b16 %v3967
    %v4103 = vunpack.c.l.b16 %v3968
    %v4104 = vunpack.c.l.b16 %v3969
    %v4105 = vunpack.c.l.b16 %v3970
    %v4106 = vunpack.c.l.b16 %v3971
    %v4107 = vunpack.c.l.b16 %v3972
    %v4108 = vunpack.c.l.b16 %v3973
    %v4109 = vunpack.c.l.b16 %v3974
    %v4110 = vunpack.c.l.b16 %v3975
    %v4111 = vunpack.c.l.b16 %v3976
    %v4112 = vunpack.c.l.b16 %v3977
    %v4113 = vunpack.c.l.b16 %v3978
    %v4114 = vunpack.c.l.b16 %v3979
    %v4115 = vunpack.c.l.b16 %v3980
    %v4116 = vunpack.c.l.b16 %v3981
    %v4117 = vunpack.c.l.b16 %v3982
    %v4118 = vunpack.c.l.b16 %v3983
    %v4119 = vunpack.c.l.b16 %v3984
    %v4120 = vunpack.c.l.b16 %v3985
    %v4121 = vunpack.c.l.b16 %v3986
    %v4122 = vunpack.c.l.b16 %v3987
    %v4123 = vunpack.c.l.b16 %v3988
    %v4124 = vunpack.c.l.b16 %v3989
    %v4125 = vpack.c.b16 %v4062, %v4061
    %v4126 = vpack.c.b16 %v4064, %v4063
    %v4127 = vpack.c.b16 %v4066, %v4065
    %v4128 = vpack.c.b16 %v4068, %v4067
    %v4129 = vpack.c.b16 %v4070, %v4069
    %v4130 = vpack.c.b16 %v4072, %v4071
    %v4131 = vpack.c.b16 %v4074, %v4073
    %v4132 = vpack.c.b16 %v4076, %v4075
    %v4133 = vpack.c.b16 %v4078, %v4077
    %v4134 = vpack.c.b16 %v4080, %v4079
    %v4135 = vpack.c.b16 %v4082, %v4081
    %v4136 = vpack.c.b16 %v4084, %v4083
    %v4137 = vpack.c.b16 %v4086, %v4085
    %v4138 = vpack.c.b16 %v4088, %v4087
    %v4139 = vpack.c.b16 %v4090, %v4089
    %v4140 = vpack.c.b16 %v4092, %v4091
    %v4141 = vpack.c.b16 %v4094, %v4093
    %v4142 = vpack.c.b16 %v4096, %v4095
    %v4143 = vpack.c.b16 %v4098, %v4097
    %v4144 = vpack.c.b16 %v4100, %v4099
    %v4145 = vpack.c.b16 %v4102, %v4101
    %v4146 = vpack.c.b16 %v4104, %v4103
    %v4147 = vpack.c.b16 %v4106, %v4105
    %v4148 = vpack.c.b16 %v4108, %v4107
    %v4149 = vpack.c.b16 %v4110, %v4109
    %v4150 = vpack.c.b16 %v4112, %v4111
    %v4151 = vpack.c.b16 %v4114, %v4113
    %v4152 = vpack.c.b16 %v4116, %v4115
    %v4153 = vpack.c.b16 %v4118, %v4117
    %v4154 = vpack.c.b16 %v4120, %v4119
    %v4155 = vpack.c.b16 %v4122, %v4121
    %v4156 = vpack.c.b16 %v4124, %v4123
    %4189 = vmatprep.subr.bf16.mxu0 0
    %4190 = vmatpush1.bf16.msra.mxu0 %v4125
    %4191 = vmatprep.subr.bf16.mxu0 0
    %4192 = vmatpush1.bf16.msra.mxu0 %v4126
    %4193 = vmatprep.subr.bf16.mxu0 0
    %4194 = vmatpush1.bf16.msra.mxu0 %v4127
    %4195 = vmatprep.subr.bf16.mxu0 0
    %4196 = vmatpush1.bf16.msra.mxu0 %v4128
    %4197 = vmatprep.subr.bf16.mxu0 0
    %4198 = vmatpush1.bf16.msra.mxu0 %v4129
    %4199 = vmatprep.subr.bf16.mxu0 0
    %4200 = vmatpush1.bf16.msra.mxu0 %v4130
    %4201 = vmatprep.subr.bf16.mxu0 0
    %4202 = vmatpush1.bf16.msra.mxu0 %v4131
    %4203 = vmatprep.subr.bf16.mxu0 0
    %4204 = vmatpush1.bf16.msra.mxu0 %v4132
    %4205 = vmatprep.subr.bf16.mxu0 0
    %4206 = vmatpush1.bf16.msra.mxu0 %v4133
    %4207 = vmatprep.subr.bf16.mxu0 0
    %4208 = vmatpush1.bf16.msra.mxu0 %v4134
    %4209 = vmatprep.subr.bf16.mxu0 0
    %4210 = vmatpush1.bf16.msra.mxu0 %v4135
    %4211 = vmatprep.subr.bf16.mxu0 0
    %4212 = vmatpush1.bf16.msra.mxu0 %v4136
    %4213 = vmatprep.subr.bf16.mxu0 0
    %4214 = vmatpush1.bf16.msra.mxu0 %v4137
    %4215 = vmatprep.subr.bf16.mxu0 0
    %4216 = vmatpush1.bf16.msra.mxu0 %v4138
    %4217 = vmatprep.subr.bf16.mxu0 0
    %4218 = vmatpush1.bf16.msra.mxu0 %v4139
    %4219 = vmatprep.subr.bf16.mxu0 0
    %4220 = vmatpush1.bf16.msra.mxu0 %v4140
    %4221 = vmatprep.mubr.bf16.mxu0 %v3923
    %4222 = vmatmul.mubr.bf16.gmra.mrb[0].mxu0 %v3922
    %v4223 = vpop.f32.mrb[0].mxu0
    %v4224 = vadd.f32 %v3995, %v4223
    %v4225 = vpop.f32.mrb[0].mxu0
    %v4226 = vpop.f32.mrb[0].mxu0
    %v4227 = vadd.f32 %v3995, %v4226
    %v4228 = vpop.f32.mrb[0].mxu0
    %4229 = vdwg.mxu0
    %4230 = vmatprep.subr.bf16.mxu0 0
    %4231 = vmatpush1.bf16.msra.mxu0 %v4141
    %4232 = vmatprep.subr.bf16.mxu0 0
    %4233 = vmatpush1.bf16.msra.mxu0 %v4142
    %4234 = vmatprep.subr.bf16.mxu0 0
    %4235 = vmatpush1.bf16.msra.mxu0 %v4143
    %4236 = vmatprep.subr.bf16.mxu0 0
    %4237 = vmatpush1.bf16.msra.mxu0 %v4144
    %4238 = vmatprep.subr.bf16.mxu0 0
    %4239 = vmatpush1.bf16.msra.mxu0 %v4145
    %4240 = vmatprep.subr.bf16.mxu0 0
    %4241 = vmatpush1.bf16.msra.mxu0 %v4146
    %4242 = vmatprep.subr.bf16.mxu0 0
    %4243 = vmatpush1.bf16.msra.mxu0 %v4147
    %4244 = vmatprep.subr.bf16.mxu0 0
    %4245 = vmatpush1.bf16.msra.mxu0 %v4148
    %4246 = vmatprep.subr.bf16.mxu0 0
    %4247 = vmatpush1.bf16.msra.mxu0 %v4149
    %4248 = vmatprep.subr.bf16.mxu0 0
    %4249 = vmatpush1.bf16.msra.mxu0 %v4150
    %4250 = vmatprep.subr.bf16.mxu0 0
    %4251 = vmatpush1.bf16.msra.mxu0 %v4151
    %4252 = vmatprep.subr.bf16.mxu0 0
    %4253 = vmatpush1.bf16.msra.mxu0 %v4152
    %4254 = vmatprep.subr.bf16.mxu0 0
    %4255 = vmatpush1.bf16.msra.mxu0 %v4153
    %4256 = vmatprep.subr.bf16.mxu0 0
    %4257 = vmatpush1.bf16.msra.mxu0 %v4154
    %4258 = vmatprep.subr.bf16.mxu0 0
    %4259 = vmatpush1.bf16.msra.mxu0 %v4155
    %4260 = vmatprep.subr.bf16.mxu0 0
    %4261 = vmatpush1.bf16.msra.mxu0 %v4156
    %4262 = vmatprep.mubr.bf16.mxu0 %v3925
    %4263 = vmatmul.mubr.bf16.gmra.mrb[0].mxu0 %v3924
    %v4264 = vpop.f32.mrb[0].mxu0
    %v4265 = vadd.f32 %v4224, %v4264
    %v4266 = vpop.f32.mrb[0].mxu0
    %v4267 = vpop.f32.mrb[0].mxu0
    %v4268 = vadd.f32 %v4227, %v4267
    %v4269 = vpop.f32.mrb[0].mxu0
    %4270 = vdwg.mxu0
    %4271 = vst [vmem:[%s11] sm:$0xff] %v4265
    %4272 = vst [vmem:[%s11 + $0x8] sm:$0xff] %v4268
    // Predicated region
    $region50: #{_fused_forward.1} parent=1 // pred_check
      _
    $region51: #{_fused_forward.1} parent=1 // pred_check_branch
      %4274 = sbr.rel (0) target = $region53
    $region52: #{_fused_forward.1} parent=1 // pred_region
      _
    $region53: #{_fused_forward.1} parent=1 // pred_fallthru
      _
    // Predicated region
    $region54: #{_fused_forward.1} parent=1 // pred_check
      _
    $region55: #{_fused_forward.1} parent=1 // pred_check_branch
      %4276 = sbr.rel (0) target = $region57
    $region56: #{_fused_forward.1} parent=1 // pred_region
      _
    $region57: #{_fused_forward.1} parent=1 // pred_fallthru
      _
    %4277 = vsyncpa [#allocation3], 1

</llo_original>
